<compile_context>
chip_gen: v5e
topology: v5e:2x2
jax: 0.10.0
libtpu: 0.0.40
codegen_flags: <defaults>
</compile_context>

<pallas_src>
import functools

import jax
import jax.numpy as jnp
from jax.experimental import pallas as pl
from jax.experimental.pallas import tpu as pltpu


# ----------------------------------------------------------------------------
# Tunables
# ----------------------------------------------------------------------------
LANES = 128                     # pad channel dims to this -> lane-dense stores
MAX_TM = 1024                   # M-tile cap for tiled elementwise kernels
                                # (512-1024 ~ HBM-roofline regime, fits v7x VMEM)
VMEM_LIMIT = 48 * 1024 * 1024   # explicit scoped-VMEM cap (headroom on v7x 64 MiB)
MXU_DTYPE = jnp.float32         # set to jnp.bfloat16 on v6e/v7x to halve MXU/HBM
                                # traffic; kept f32 here for exact parity with the
                                # f32 reference (stats/epilogue stay f32 either way)
BN_EPS = 1e-5


def _round_up(x, m):
    return (x + m - 1) // m * m


def _pad_last(a, target, value=0.0):
    pad = target - a.shape[-1]
    if pad == 0:
        return a
    cfg = [(0, 0)] * (a.ndim - 1) + [(0, pad)]
    return jnp.pad(a, cfg, constant_values=value)


def _pad_weight_taps(w, cin_p, cout_p):
    # HWIO (KH, KW, Cin, Cout) -> (KH*KW, Cin_p, Cout_p); zero-padded channels
    # contribute nothing to the matmul.
    kh, kw, cin, cout = w.shape
    wp = jnp.pad(w, ((0, 0), (0, 0), (0, cin_p - cin), (0, cout_p - cout)))
    return wp.reshape(kh * kw, cin_p, cout_p)


def _to_phases(x, ksize, stride, pad):
    """Space-to-depth reorg so every conv tap is an UNSTRIDED static window.

    Returns phases of shape (N*stride*stride, Hq, Wq, C) with
        phases[n*s*s + a*s + b, i, j, c] == x_zeropad[n, s*i + a, s*j + b, c]
    so tap (kh, kw) of a k x k / stride-s conv reads phase (kh%s, kw%s) at
    static offset (kh//s, kw//s).  This is a cheap 1x copy in plain JAX
    (layout plumbing) and replaces the 9x im2col HBM blow-up of the previous
    version: the kernel reads each input pixel once per image.
    """
    n, h, w, c = x.shape
    ho = (h + 2 * pad - ksize) // stride + 1
    wo = (w + 2 * pad - ksize) // stride + 1
    hq = (ksize - 1) // stride + ho
    wq = (ksize - 1) // stride + wo
    pad_h = stride * hq - h - pad
    pad_w = stride * wq - w - pad
    assert pad_h >= 0 and pad_w >= 0
    xp = jnp.pad(x, ((0, 0), (pad, pad_h), (pad, pad_w), (0, 0)))
    xp = xp.reshape(n, hq, stride, wq, stride, c)
    phases = jnp.transpose(xp, (0, 2, 4, 1, 3, 5))      # (N, s, s, Hq, Wq, C)
    return phases.reshape(n * stride * stride, hq, wq, c), ho, wo, hq, wq


# ----------------------------------------------------------------------------
# Pallas kernels
# ----------------------------------------------------------------------------
def _conv_bnstats_kernel(x_ref, w_ref, y_ref, s1_ref, s2_ref, *,
                         ksize, stride, ho, wo):
    """One batch image: k x k conv as in-kernel tap matmuls (f32 accumulation)
    fused with per-channel partial sum / sum-of-squares for BN statistics."""
    cin = x_ref.shape[-1]
    cout = w_ref.shape[-1]
    acc = jnp.zeros((ho * wo, cout), jnp.float32)
    for kh in range(ksize):
        for kw in range(ksize):
            ph, pw = kh % stride, kw % stride
            dh, dw = kh // stride, kw // stride
            tap = x_ref[ph * stride + pw, dh:dh + ho, dw:dw + wo, :]
            tap = tap.reshape(ho * wo, cin).astype(MXU_DTYPE)
            w = w_ref[kh * ksize + kw].astype(MXU_DTYPE)
            acc = acc + jnp.dot(tap, w, preferred_element_type=jnp.float32)
    y_ref[0] = acc
    s1_ref[0] = jnp.sum(acc, axis=0, keepdims=True)
    s2_ref[0] = jnp.sum(acc * acc, axis=0, keepdims=True)


def _bn_scale_shift_kernel(s1_ref, s2_ref, g_ref, b_ref, scale_ref, shift_ref,
                           *, count, eps):
    # Fold per-image partial sums into per-channel scale/shift so the tiled
    # apply kernels are a single fused multiply-add per element.
    mean = jnp.sum(s1_ref[...], axis=0) / count            # (1, C)
    ex2 = jnp.sum(s2_ref[...], axis=0) / count
    var = jnp.maximum(ex2 - mean * mean, 0.0)               # biased variance
    scale = g_ref[...] * jax.lax.rsqrt(var + eps)
    scale_ref[...] = scale
    shift_ref[...] = b_ref[...] - mean * scale


def _scale_shift_relu_kernel(y_ref, scale_ref, shift_ref, o_ref):
    # relu(bn1(y1))
    o_ref[...] = jnp.maximum(y_ref[...] * scale_ref[...] + shift_ref[...], 0.0)


def _residual_epilogue_kernel(*refs, shortcut_has_bn):
    # relu(bn2(y2) + shortcut), shortcut either bn_s(1x1-conv(x)) or identity.
    if shortcut_has_bn:
        y2_ref, sc_ref, s2_ref, b2_ref, ss_ref, bs_ref, o_ref = refs
        res = sc_ref[...] * ss_ref[...] + bs_ref[...]
    else:
        y2_ref, sc_ref, s2_ref, b2_ref, o_ref = refs
        res = sc_ref[...]
    o_ref[...] = jnp.maximum(y2_ref[...] * s2_ref[...] + b2_ref[...] + res, 0.0)


# ----------------------------------------------------------------------------
# pallas_call wrappers
# ----------------------------------------------------------------------------
def conv_bnstats(x_nhwc, w_taps, *, ksize, stride, pad):
    """Fused conv (no bias) + BN partial statistics.

    Returns y (N*Ho*Wo, Cout) plus per-image partial sum / sumsq (N, 1, Cout).
    Grid = (N,) 'parallel'; each step holds one image's receptive field in
    VMEM and does the tap expansion there (no im2col slab in HBM).
    """
    n = x_nhwc.shape[0]
    cout = w_taps.shape[-1]
    phases, ho, wo, hq, wq = _to_phases(x_nhwc, ksize, stride, pad)
    c = phases.shape[-1]
    kernel = functools.partial(_conv_bnstats_kernel, ksize=ksize,
                               stride=stride, ho=ho, wo=wo)
    y, s1, s2 = pl.pallas_call(
        kernel,
        grid=(n,),
        in_specs=[
            pl.BlockSpec((stride * stride, hq, wq, c),
                         lambda i: (i, 0, 0, 0)),
            pl.BlockSpec((ksize * ksize, c, cout), lambda i: (0, 0, 0)),
        ],
        out_specs=(
            pl.BlockSpec((1, ho * wo, cout), lambda i: (i, 0, 0)),
            pl.BlockSpec((1, 1, cout), lambda i: (i, 0, 0)),
            pl.BlockSpec((1, 1, cout), lambda i: (i, 0, 0)),
        ),
        out_shape=(
            jax.ShapeDtypeStruct((n, ho * wo, cout), jnp.float32),
            jax.ShapeDtypeStruct((n, 1, cout), jnp.float32),
            jax.ShapeDtypeStruct((n, 1, cout), jnp.float32),
        ),
        compiler_params=pltpu.CompilerParams(
            dimension_semantics=("parallel",),
            vmem_limit_bytes=VMEM_LIMIT),
    )(phases, w_taps)
    return y.reshape(n * ho * wo, cout), s1, s2, ho, wo


def bn_scale_shift(s1, s2, gamma, beta, *, count, eps=BN_EPS):
    c = gamma.shape[-1]
    kernel = functools.partial(_bn_scale_shift_kernel, count=float(count),
                               eps=eps)
    return pl.pallas_call(
        kernel,
        out_shape=(jax.ShapeDtypeStruct((1, c), jnp.float32),
                   jax.ShapeDtypeStruct((1, c), jnp.float32)),
        in_specs=[pl.BlockSpec(memory_space=pltpu.MemorySpace.VMEM)] * 4,
        out_specs=(pl.BlockSpec(memory_space=pltpu.MemorySpace.VMEM),
                   pl.BlockSpec(memory_space=pltpu.MemorySpace.VMEM)),
    )(s1, s2, gamma, beta)


def _tiled_rowwise_call(kernel, row_args, chan_args, m, c):
    """Run an elementwise kernel tiled over the M axis.

    row_args are (M, C) slabs tiled as (TM, C); chan_args are (1, C) vectors
    mapped to every tile.  Rows are padded to a multiple of TM (no divisibility
    requirement); the M grid axis is 'parallel' for v7x 2-TC sharding.
    """
    tm = min(_round_up(m, 8), MAX_TM)
    mp = _round_up(m, tm)
    if mp != m:
        row_args = [jnp.pad(a, ((0, mp - m), (0, 0))) for a in row_args]
    out = pl.pallas_call(
        kernel,
        grid=(mp // tm,),
        in_specs=([pl.BlockSpec((tm, c), lambda i: (i, 0))] * len(row_args)
                  + [pl.BlockSpec((1, c), lambda i: (0, 0))] * len(chan_args)),
        out_specs=pl.BlockSpec((tm, c), lambda i: (i, 0)),
        out_shape=jax.ShapeDtypeStruct((mp, c), jnp.float32),
        compiler_params=pltpu.CompilerParams(
            dimension_semantics=("parallel",),
            vmem_limit_bytes=VMEM_LIMIT),
    )(*row_args, *chan_args)
    return out[:m] if mp != m else out


# ----------------------------------------------------------------------------
# Forward orchestration (plain-JAX glue only does layout plumbing)
# ----------------------------------------------------------------------------
def basic_block_forward(x_nchw, params, stride):
    x = jnp.transpose(x_nchw, (0, 2, 3, 1)).astype(jnp.float32)   # NHWC
    n, h, w, cin = x.shape
    planes = params["w1"].shape[-1]
    cin_p = _round_up(cin, LANES)
    cp = _round_up(planes, LANES)

    # Lane-dense internal layout: zero-pad channels to a multiple of 128.
    xp = _pad_last(x, cin_p)
    w1 = _pad_weight_taps(params["w1"], cin_p, cp)
    w2 = _pad_weight_taps(params["w2"], cp, cp)
    g1 = _pad_last(params["g1"], cp, 1.0)
    b1 = _pad_last(params["b1"], cp)
    g2 = _pad_last(params["g2"], cp, 1.0)
    b2 = _pad_last(params["b2"], cp)

    # conv1 (3x3, stride, pad 1) fused with BN1 partial stats -> relu(bn1).
    y1, s1a, s1b, ho, wo = conv_bnstats(xp, w1, ksize=3, stride=stride, pad=1)
    m = n * ho * wo
    scale1, shift1 = bn_scale_shift(s1a, s1b, g1, b1, count=m)
    a1 = _tiled_rowwise_call(_scale_shift_relu_kernel, [y1], [scale1, shift1],
                             m, cp)

    # conv2 (3x3, stride 1, pad 1) fused with BN2 partial stats.
    y2, s2a, s2b, _, _ = conv_bnstats(a1.reshape(n, ho, wo, cp), w2,
                                      ksize=3, stride=1, pad=1)
    scale2, shift2 = bn_scale_shift(s2a, s2b, g2, b2, count=m)

    if stride != 1 or cin != planes:
        # 1x1 strided conv shortcut (+ its BN) folded into the final epilogue.
        ws = _pad_weight_taps(params["ws"], cin_p, cp)
        gs = _pad_last(params["gs"], cp, 1.0)
        bs = _pad_last(params["bs"], cp)
        xs = xp[:, ::stride, ::stride, :]          # cheap strided view
        ys, ssa, ssb, _, _ = conv_bnstats(xs, ws, ksize=1, stride=1, pad=0)
        scale_s, shift_s = bn_scale_shift(ssa, ssb, gs, bs, count=m)
        kernel = functools.partial(_residual_epilogue_kernel,
                                   shortcut_has_bn=True)
        out = _tiled_rowwise_call(kernel, [y2, ys],
                                  [scale2, shift2, scale_s, shift_s], m, cp)
    else:
        sc = xp.reshape(m, cp)                     # identity shortcut
        kernel = functools.partial(_residual_epilogue_kernel,
                                   shortcut_has_bn=False)
        out = _tiled_rowwise_call(kernel, [y2, sc], [scale2, shift2], m, cp)

    out = out.reshape(n, ho, wo, cp)[..., :planes]  # strip channel padding
    return jnp.transpose(out, (0, 3, 1, 2))         # back to NCHW


# ----------------------------------------------------------------------------
# Parameters + pure-JAX reference (training-mode BN semantics) for verification
# ----------------------------------------------------------------------------
def init_params(key, in_planes, planes, stride):
    ks = jax.random.split(key, 8)
    params = {
        "w1": jax.random.normal(ks[0], (3, 3, in_planes, planes), jnp.float32)
              * (2.0 / (9 * in_planes)) ** 0.5,
        "w2": jax.random.normal(ks[1], (3, 3, planes, planes), jnp.float32)
              * (2.0 / (9 * planes)) ** 0.5,
        "g1": 1.0 + 0.1 * jax.random.normal(ks[2], (1, planes), jnp.float32),
        "b1": 0.1 * jax.random.normal(ks[3], (1, planes), jnp.float32),
        "g2": 1.0 + 0.1 * jax.random.normal(ks[4], (1, planes), jnp.float32),
        "b2": 0.1 * jax.random.normal(ks[5], (1, planes), jnp.float32),
    }
    if stride != 1 or in_planes != planes:
        params["ws"] = (jax.random.normal(ks[6], (1, 1, in_planes, planes),
                                          jnp.float32)
                        * (2.0 / in_planes) ** 0.5)
        params["gs"] = 1.0 + 0.1 * jax.random.normal(ks[7], (1, planes),
                                                     jnp.float32)
        params["bs"] = jnp.zeros((1, planes), jnp.float32)
    return params


def ref_forward(x_nchw, params, stride):
    x = jnp.transpose(x_nchw, (0, 2, 3, 1))
    dn = ("NHWC", "HWIO", "NHWC")

    def conv(inp, w, s, pad):
        return jax.lax.conv_general_dilated(
            inp, w, (s, s), ((pad, pad), (pad, pad)), dimension_numbers=dn)

    def bn(y, g, b):
        mu = jnp.mean(y, axis=(0, 1, 2), keepdims=True)
        var = jnp.mean((y - mu) ** 2, axis=(0, 1, 2), keepdims=True)
        return ((y - mu) * jax.lax.rsqrt(var + BN_EPS)
                * g.reshape(1, 1, 1, -1) + b.reshape(1, 1, 1, -1))

    out = jax.nn.relu(bn(conv(x, params["w1"], stride, 1),
                         params["g1"], params["b1"]))
    out = bn(conv(out, params["w2"], 1, 1), params["g2"], params["b2"])
    if stride != 1 or x.shape[-1] != params["w1"].shape[-1]:
        sc = bn(conv(x, params["ws"], stride, 0), params["gs"], params["bs"])
    else:
        sc = x
    out = jax.nn.relu(out + sc)
    return jnp.transpose(out, (0, 3, 1, 2))


if __name__ == "__main__":
    fwd = jax.jit(basic_block_forward, static_argnames=("stride",))
    key = jax.random.PRNGKey(0)
    tol = 5e-2 if MXU_DTYPE == jnp.bfloat16 else 1e-4

    configs = [
        (4, 8, 2),   # downsample block: 1x1-conv + BN shortcut
        (8, 8, 1),   # identity shortcut
    ]
    for in_planes, planes, stride in configs:
        key, kp, kx = jax.random.split(key, 3)
        params = init_params(kp, in_planes, planes, stride)
        x = jax.random.normal(kx, (2, in_planes, 16, 16), jnp.float32)

        out = jax.block_until_ready(fwd(x, params, stride=stride))
        ref = ref_forward(x, params, stride)

        ho = (16 + 2 - 3) // stride + 1
        assert out.shape == (2, planes, ho, ho), out.shape
        err = float(jnp.max(jnp.abs(out - ref)))
        assert jnp.allclose(out, ref, rtol=tol, atol=tol), err

    print("KERNEL_OK")
</pallas_src>

<mosaic_0001>
module attributes {stable_mosaic.version = 11 : i64} {
  func.func @_conv_bnstats_kernel(%arg0: i32, %arg1: memref<1x8x8x128xf32, #tpu.memory_space<vmem>>, %arg2: memref<1x128x128xf32, #tpu.memory_space<vmem>>, %arg3: memref<1x64x128xf32, #tpu.memory_space<vmem>>, %arg4: memref<1x1x128xf32, #tpu.memory_space<vmem>>, %arg5: memref<1x1x128xf32, #tpu.memory_space<vmem>>) attributes {dimension_semantics = [#tpu.dimension_semantics<parallel>], iteration_bounds = array<i64: 2>, scalar_prefetch = 0 : i64, scratch_operands = 0 : i64, tpu.core_type = #tpu.core_type<tc>, window_params = [{transform_indices = @transform_0, window_bounds = array<i64: 1, 8, 8, 128>}, {pipeline_mode = #tpu.pipeline_mode<synchronous>, transform_indices = @transform_1, window_bounds = array<i64: 1, 128, 128>}, {transform_indices = @transform_2, window_bounds = array<i64: 1, 64, 128>}, {transform_indices = @transform_3, window_bounds = array<i64: 1, 1, 128>}, {transform_indices = @transform_4, window_bounds = array<i64: 1, 1, 128>}]} {
    %cst = arith.constant 0.000000e+00 : f32
    %0 = vector.broadcast %cst : f32 to vector<64x128xf32>
    %c0 = arith.constant 0 : index
    %c0_0 = arith.constant 0 : index
    %c0_1 = arith.constant 0 : index
    %c0_2 = arith.constant 0 : index
    %1 = vector.load %arg1[%c0, %c0_0, %c0_1, %c0_2] : memref<1x8x8x128xf32, #tpu.memory_space<vmem>>, vector<1x8x8x128xf32>
    %2 = vector.shape_cast %1 : vector<1x8x8x128xf32> to vector<8x8x128xf32>
    %3 = vector.shape_cast %2 : vector<8x8x128xf32> to vector<64x128xf32>
    %c0_3 = arith.constant 0 : index
    %c0_4 = arith.constant 0 : index
    %c0_5 = arith.constant 0 : index
    %4 = vector.load %arg2[%c0_3, %c0_4, %c0_5] : memref<1x128x128xf32, #tpu.memory_space<vmem>>, vector<1x128x128xf32>
    %5 = vector.shape_cast %4 : vector<1x128x128xf32> to vector<128x128xf32>
    %cst_6 = arith.constant dense<0.000000e+00> : vector<64x128xf32>
    %6 = tpu.matmul %3, %5, %cst_6 {dimension_numbers = #tpu.dot_dimension_numbers<[1], [0], [0], [1], [0, 0, 1, 1], [], []>} : vector<64x128xf32>, vector<128x128xf32>, vector<64x128xf32> -> vector<64x128xf32>
    %7 = arith.addf %0, %6 : vector<64x128xf32>
    %c0_7 = arith.constant 0 : index
    %c0_8 = arith.constant 0 : index
    %c0_9 = arith.constant 0 : index
    %8 = vector.load %arg3[%c0_7, %c0_8, %c0_9] : memref<1x64x128xf32, #tpu.memory_space<vmem>>, vector<1x64x128xf32>
    %9 = vector.shape_cast %8 : vector<1x64x128xf32> to vector<64x128xf32>
    %10 = vector.shape_cast %7 : vector<64x128xf32> to vector<1x64x128xf32>
    tpu.vector_store %arg3[%c0_7, %c0_8, %c0_9], %10 {strides = array<i32>} : memref<1x64x128xf32, #tpu.memory_space<vmem>>, vector<1x64x128xf32>,
    %cst_10 = arith.constant dense<0.000000e+00> : vector<128xf32>
    %11 = vector.multi_reduction <add>, %7, %cst_10 [0] : vector<64x128xf32> to vector<128xf32>
    %12 = vector.shape_cast %11 : vector<128xf32> to vector<1x128xf32>
    %c0_11 = arith.constant 0 : index
    %c0_12 = arith.constant 0 : index
    %c0_13 = arith.constant 0 : index
    %13 = vector.load %arg4[%c0_11, %c0_12, %c0_13] : memref<1x1x128xf32, #tpu.memory_space<vmem>>, vector<1x1x128xf32>
    %14 = vector.shape_cast %13 : vector<1x1x128xf32> to vector<1x128xf32>
    %15 = vector.shape_cast %12 : vector<1x128xf32> to vector<1x1x128xf32>
    tpu.vector_store %arg4[%c0_11, %c0_12, %c0_13], %15 {strides = array<i32>} : memref<1x1x128xf32, #tpu.memory_space<vmem>>, vector<1x1x128xf32>,
    %16 = arith.mulf %7, %7 : vector<64x128xf32>
    %cst_14 = arith.constant dense<0.000000e+00> : vector<128xf32>
    %17 = vector.multi_reduction <add>, %16, %cst_14 [0] : vector<64x128xf32> to vector<128xf32>
    %18 = vector.shape_cast %17 : vector<128xf32> to vector<1x128xf32>
    %c0_15 = arith.constant 0 : index
    %c0_16 = arith.constant 0 : index
    %c0_17 = arith.constant 0 : index
    %19 = vector.load %arg5[%c0_15, %c0_16, %c0_17] : memref<1x1x128xf32, #tpu.memory_space<vmem>>, vector<1x1x128xf32>
    %20 = vector.shape_cast %19 : vector<1x1x128xf32> to vector<1x128xf32>
    %21 = vector.shape_cast %18 : vector<1x128xf32> to vector<1x1x128xf32>
    tpu.vector_store %arg5[%c0_15, %c0_16, %c0_17], %21 {strides = array<i32>} : memref<1x1x128xf32, #tpu.memory_space<vmem>>, vector<1x1x128xf32>,
    return
  }
  func.func @transform_0(%arg0: i32) -> (i32, i32, i32, i32) {
    %c0_i32 = arith.constant 0 : i32
    %c0_i32_0 = arith.constant 0 : i32
    %c0_i32_1 = arith.constant 0 : i32
    %c0_i32_2 = arith.constant 0 : i32
    return %arg0, %c0_i32, %c0_i32_0, %c0_i32_1 : i32, i32, i32, i32
  }
  func.func @transform_1(%arg0: i32) -> (i32, i32, i32) {
    %c0_i32 = arith.constant 0 : i32
    %c0_i32_0 = arith.constant 0 : i32
    %c0_i32_1 = arith.constant 0 : i32
    %c0_i32_2 = arith.constant 0 : i32
    return %c0_i32, %c0_i32_0, %c0_i32_1 : i32, i32, i32
  }
  func.func @transform_2(%arg0: i32) -> (i32, i32, i32) {
    %c0_i32 = arith.constant 0 : i32
    %c0_i32_0 = arith.constant 0 : i32
    %c0_i32_1 = arith.constant 0 : i32
    return %arg0, %c0_i32, %c0_i32_0 : i32, i32, i32
  }
  func.func @transform_3(%arg0: i32) -> (i32, i32, i32) {
    %c0_i32 = arith.constant 0 : i32
    %c0_i32_0 = arith.constant 0 : i32
    %c0_i32_1 = arith.constant 0 : i32
    return %arg0, %c0_i32, %c0_i32_0 : i32, i32, i32
  }
  func.func @transform_4(%arg0: i32) -> (i32, i32, i32) {
    %c0_i32 = arith.constant 0 : i32
    %c0_i32_0 = arith.constant 0 : i32
    %c0_i32_1 = arith.constant 0 : i32
    return %arg0, %c0_i32, %c0_i32_0 : i32, i32, i32
  }
}

module attributes {stable_mosaic.version = 11 : i64} {
  func.func @_bn_scale_shift_kernel(%arg0: memref<2x1x128xf32, #tpu.memory_space<vmem>>, %arg1: memref<2x1x128xf32, #tpu.memory_space<vmem>>, %arg2: memref<1x128xf32, #tpu.memory_space<vmem>>, %arg3: memref<1x128xf32, #tpu.memory_space<vmem>>, %arg4: memref<1x128xf32, #tpu.memory_space<vmem>>, %arg5: memref<1x128xf32, #tpu.memory_space<vmem>>) attributes {dimension_semantics = [], scalar_prefetch = 0 : i64, scratch_operands = 0 : i64, tpu.core_type = #tpu.core_type<tc>} {
    %c0 = arith.constant 0 : index
    %c0_0 = arith.constant 0 : index
    %c0_1 = arith.constant 0 : index
    %0 = vector.load %arg0[%c0, %c0_0, %c0_1] : memref<2x1x128xf32, #tpu.memory_space<vmem>>, vector<2x1x128xf32>
    %cst = arith.constant dense<0.000000e+00> : vector<1x128xf32>
    %1 = vector.multi_reduction <add>, %0, %cst [0] : vector<2x1x128xf32> to vector<1x128xf32>
    %cst_2 = arith.constant 1.280000e+02 : f32
    %2 = vector.broadcast %cst_2 : f32 to vector<1x128xf32>
    %3 = arith.divf %1, %2 : vector<1x128xf32>
    %c0_3 = arith.constant 0 : index
    %c0_4 = arith.constant 0 : index
    %c0_5 = arith.constant 0 : index
    %4 = vector.load %arg1[%c0_3, %c0_4, %c0_5] : memref<2x1x128xf32, #tpu.memory_space<vmem>>, vector<2x1x128xf32>
    %cst_6 = arith.constant dense<0.000000e+00> : vector<1x128xf32>
    %5 = vector.multi_reduction <add>, %4, %cst_6 [0] : vector<2x1x128xf32> to vector<1x128xf32>
    %cst_7 = arith.constant 1.280000e+02 : f32
    %6 = vector.broadcast %cst_7 : f32 to vector<1x128xf32>
    %7 = arith.divf %5, %6 : vector<1x128xf32>
    %8 = arith.mulf %3, %3 : vector<1x128xf32>
    %9 = arith.subf %7, %8 : vector<1x128xf32>
    %cst_8 = arith.constant 0.000000e+00 : f32
    %10 = vector.broadcast %cst_8 : f32 to vector<1x128xf32>
    %11 = arith.maximumf %9, %10 : vector<1x128xf32>
    %c0_9 = arith.constant 0 : index
    %c0_10 = arith.constant 0 : index
    %12 = vector.load %arg2[%c0_9, %c0_10] : memref<1x128xf32, #tpu.memory_space<vmem>>, vector<1x128xf32>
    %cst_11 = arith.constant 9.99999974E-6 : f32
    %13 = vector.broadcast %cst_11 : f32 to vector<1x128xf32>
    %14 = arith.addf %11, %13 : vector<1x128xf32>
    %15 = math.rsqrt %14 : vector<1x128xf32>
    %16 = arith.mulf %12, %15 : vector<1x128xf32>
    %c0_12 = arith.constant 0 : index
    %c0_13 = arith.constant 0 : index
    %17 = vector.load %arg4[%c0_12, %c0_13] : memref<1x128xf32, #tpu.memory_space<vmem>>, vector<1x128xf32>
    tpu.vector_store %arg4[%c0_12, %c0_13], %16 {strides = array<i32>} : memref<1x128xf32, #tpu.memory_space<vmem>>, vector<1x128xf32>,
    %c0_14 = arith.constant 0 : index
    %c0_15 = arith.constant 0 : index
    %18 = vector.load %arg3[%c0_14, %c0_15] : memref<1x128xf32, #tpu.memory_space<vmem>>, vector<1x128xf32>
    %19 = arith.mulf %3, %16 : vector<1x128xf32>
    %20 = arith.subf %18, %19 : vector<1x128xf32>
    %c0_16 = arith.constant 0 : index
    %c0_17 = arith.constant 0 : index
    %21 = vector.load %arg5[%c0_16, %c0_17] : memref<1x128xf32, #tpu.memory_space<vmem>>, vector<1x128xf32>
    tpu.vector_store %arg5[%c0_16, %c0_17], %20 {strides = array<i32>} : memref<1x128xf32, #tpu.memory_space<vmem>>, vector<1x128xf32>,
    return
  }
}

module attributes {stable_mosaic.version = 11 : i64} {
  func.func @_conv_bnstats_kernel(%arg0: i32, %arg1: memref<4x9x9x128xf32, #tpu.memory_space<vmem>>, %arg2: memref<9x128x128xf32, #tpu.memory_space<vmem>>, %arg3: memref<1x64x128xf32, #tpu.memory_space<vmem>>, %arg4: memref<1x1x128xf32, #tpu.memory_space<vmem>>, %arg5: memref<1x1x128xf32, #tpu.memory_space<vmem>>) attributes {dimension_semantics = [#tpu.dimension_semantics<parallel>], iteration_bounds = array<i64: 2>, scalar_prefetch = 0 : i64, scratch_operands = 0 : i64, tpu.core_type = #tpu.core_type<tc>, window_params = [{transform_indices = @transform_0, window_bounds = array<i64: 4, 9, 9, 128>}, {pipeline_mode = #tpu.pipeline_mode<synchronous>, transform_indices = @transform_1, window_bounds = array<i64: 9, 128, 128>}, {transform_indices = @transform_2, window_bounds = array<i64: 1, 64, 128>}, {transform_indices = @transform_3, window_bounds = array<i64: 1, 1, 128>}, {transform_indices = @transform_4, window_bounds = array<i64: 1, 1, 128>}]} {
    %cst = arith.constant 0.000000e+00 : f32
    %0 = vector.broadcast %cst : f32 to vector<64x128xf32>
    %c0 = arith.constant 0 : index
    %c0_0 = arith.constant 0 : index
    %c0_1 = arith.constant 0 : index
    %c0_2 = arith.constant 0 : index
    %1 = vector.load %arg1[%c0, %c0_0, %c0_1, %c0_2] : memref<4x9x9x128xf32, #tpu.memory_space<vmem>>, vector<1x8x8x128xf32>
    %2 = vector.shape_cast %1 : vector<1x8x8x128xf32> to vector<8x8x128xf32>
    %3 = vector.shape_cast %2 : vector<8x8x128xf32> to vector<64x128xf32>
    %c0_3 = arith.constant 0 : index
    %c0_4 = arith.constant 0 : index
    %c0_5 = arith.constant 0 : index
    %4 = vector.load %arg2[%c0_3, %c0_4, %c0_5] : memref<9x128x128xf32, #tpu.memory_space<vmem>>, vector<1x128x128xf32>
    %5 = vector.shape_cast %4 : vector<1x128x128xf32> to vector<128x128xf32>
    %cst_6 = arith.constant dense<0.000000e+00> : vector<64x128xf32>
    %6 = tpu.matmul %3, %5, %cst_6 {dimension_numbers = #tpu.dot_dimension_numbers<[1], [0], [0], [1], [0, 0, 1, 1], [], []>} : vector<64x128xf32>, vector<128x128xf32>, vector<64x128xf32> -> vector<64x128xf32>
    %7 = arith.addf %0, %6 : vector<64x128xf32>
    %c1 = arith.constant 1 : index
    %c0_7 = arith.constant 0 : index
    %c0_8 = arith.constant 0 : index
    %c0_9 = arith.constant 0 : index
    %8 = vector.load %arg1[%c1, %c0_7, %c0_8, %c0_9] : memref<4x9x9x128xf32, #tpu.memory_space<vmem>>, vector<1x8x8x128xf32>
    %9 = vector.shape_cast %8 : vector<1x8x8x128xf32> to vector<8x8x128xf32>
    %10 = vector.shape_cast %9 : vector<8x8x128xf32> to vector<64x128xf32>
    %c1_10 = arith.constant 1 : index
    %c0_11 = arith.constant 0 : index
    %c0_12 = arith.constant 0 : index
    %11 = vector.load %arg2[%c1_10, %c0_11, %c0_12] : memref<9x128x128xf32, #tpu.memory_space<vmem>>, vector<1x128x128xf32>
    %12 = vector.shape_cast %11 : vector<1x128x128xf32> to vector<128x128xf32>
    %cst_13 = arith.constant dense<0.000000e+00> : vector<64x128xf32>
    %13 = tpu.matmul %10, %12, %cst_13 {dimension_numbers = #tpu.dot_dimension_numbers<[1], [0], [0], [1], [0, 0, 1, 1], [], []>} : vector<64x128xf32>, vector<128x128xf32>, vector<64x128xf32> -> vector<64x128xf32>
    %14 = arith.addf %7, %13 : vector<64x128xf32>
    %c0_14 = arith.constant 0 : index
    %c0_15 = arith.constant 0 : index
    %c1_16 = arith.constant 1 : index
    %c0_17 = arith.constant 0 : index
    %15 = vector.load %arg1[%c0_14, %c0_15, %c1_16, %c0_17] : memref<4x9x9x128xf32, #tpu.memory_space<vmem>>, vector<1x8x8x128xf32>
    %16 = vector.shape_cast %15 : vector<1x8x8x128xf32> to vector<8x8x128xf32>
    %17 = vector.shape_cast %16 : vector<8x8x128xf32> to vector<64x128xf32>
    %c2 = arith.constant 2 : index
    %c0_18 = arith.constant 0 : index
    %c0_19 = arith.constant 0 : index
    %18 = vector.load %arg2[%c2, %c0_18, %c0_19] : memref<9x128x128xf32, #tpu.memory_space<vmem>>, vector<1x128x128xf32>
    %19 = vector.shape_cast %18 : vector<1x128x128xf32> to vector<128x128xf32>
    %cst_20 = arith.constant dense<0.000000e+00> : vector<64x128xf32>
    %20 = tpu.matmul %17, %19, %cst_20 {dimension_numbers = #tpu.dot_dimension_numbers<[1], [0], [0], [1], [0, 0, 1, 1], [], []>} : vector<64x128xf32>, vector<128x128xf32>, vector<64x128xf32> -> vector<64x128xf32>
    %21 = arith.addf %14, %20 : vector<64x128xf32>
    %c2_21 = arith.constant 2 : index
    %c0_22 = arith.constant 0 : index
    %c0_23 = arith.constant 0 : index
    %c0_24 = arith.constant 0 : index
    %22 = vector.load %arg1[%c2_21, %c0_22, %c0_23, %c0_24] : memref<4x9x9x128xf32, #tpu.memory_space<vmem>>, vector<1x8x8x128xf32>
    %23 = vector.shape_cast %22 : vector<1x8x8x128xf32> to vector<8x8x128xf32>
    %24 = vector.shape_cast %23 : vector<8x8x128xf32> to vector<64x128xf32>
    %c3 = arith.constant 3 : index
    %c0_25 = arith.constant 0 : index
    %c0_26 = arith.constant 0 : index
    %25 = vector.load %arg2[%c3, %c0_25, %c0_26] : memref<9x128x128xf32, #tpu.memory_space<vmem>>, vector<1x128x128xf32>
    %26 = vector.shape_cast %25 : vector<1x128x128xf32> to vector<128x128xf32>
    %cst_27 = arith.constant dense<0.000000e+00> : vector<64x128xf32>
    %27 = tpu.matmul %24, %26, %cst_27 {dimension_numbers = #tpu.dot_dimension_numbers<[1], [0], [0], [1], [0, 0, 1, 1], [], []>} : vector<64x128xf32>, vector<128x128xf32>, vector<64x128xf32> -> vector<64x128xf32>
    %28 = arith.addf %21, %27 : vector<64x128xf32>
    %c3_28 = arith.constant 3 : index
    %c0_29 = arith.constant 0 : index
    %c0_30 = arith.constant 0 : index
    %c0_31 = arith.constant 0 : index
    %29 = vector.load %arg1[%c3_28, %c0_29, %c0_30, %c0_31] : memref<4x9x9x128xf32, #tpu.memory_space<vmem>>, vector<1x8x8x128xf32>
    %30 = vector.shape_cast %29 : vector<1x8x8x128xf32> to vector<8x8x128xf32>
    %31 = vector.shape_cast %30 : vector<8x8x128xf32> to vector<64x128xf32>
    %c4 = arith.constant 4 : index
    %c0_32 = arith.constant 0 : index
    %c0_33 = arith.constant 0 : index
    %32 = vector.load %arg2[%c4, %c0_32, %c0_33] : memref<9x128x128xf32, #tpu.memory_space<vmem>>, vector<1x128x128xf32>
    %33 = vector.shape_cast %32 : vector<1x128x128xf32> to vector<128x128xf32>
    %cst_34 = arith.constant dense<0.000000e+00> : vector<64x128xf32>
    %34 = tpu.matmul %31, %33, %cst_34 {dimension_numbers = #tpu.dot_dimension_numbers<[1], [0], [0], [1], [0, 0, 1, 1], [], []>} : vector<64x128xf32>, vector<128x128xf32>, vector<64x128xf32> -> vector<64x128xf32>
    %35 = arith.addf %28, %34 : vector<64x128xf32>
    %c2_35 = arith.constant 2 : index
    %c0_36 = arith.constant 0 : index
    %c1_37 = arith.constant 1 : index
    %c0_38 = arith.constant 0 : index
    %36 = vector.load %arg1[%c2_35, %c0_36, %c1_37, %c0_38] : memref<4x9x9x128xf32, #tpu.memory_space<vmem>>, vector<1x8x8x128xf32>
    %37 = vector.shape_cast %36 : vector<1x8x8x128xf32> to vector<8x8x128xf32>
    %38 = vector.shape_cast %37 : vector<8x8x128xf32> to vector<64x128xf32>
    %c5 = arith.constant 5 : index
    %c0_39 = arith.constant 0 : index
    %c0_40 = arith.constant 0 : index
    %39 = vector.load %arg2[%c5, %c0_39, %c0_40] : memref<9x128x128xf32, #tpu.memory_space<vmem>>, vector<1x128x128xf32>
    %40 = vector.shape_cast %39 : vector<1x128x128xf32> to vector<128x128xf32>
    %cst_41 = arith.constant dense<0.000000e+00> : vector<64x128xf32>
    %41 = tpu.matmul %38, %40, %cst_41 {dimension_numbers = #tpu.dot_dimension_numbers<[1], [0], [0], [1], [0, 0, 1, 1], [], []>} : vector<64x128xf32>, vector<128x128xf32>, vector<64x128xf32> -> vector<64x128xf32>
    %42 = arith.addf %35, %41 : vector<64x128xf32>
    %c0_42 = arith.constant 0 : index
    %c1_43 = arith.constant 1 : index
    %c0_44 = arith.constant 0 : index
    %c0_45 = arith.constant 0 : index
    %43 = vector.load %arg1[%c0_42, %c1_43, %c0_44, %c0_45] : memref<4x9x9x128xf32, #tpu.memory_space<vmem>>, vector<1x8x8x128xf32>
    %44 = vector.shape_cast %43 : vector<1x8x8x128xf32> to vector<8x8x128xf32>
    %45 = vector.shape_cast %44 : vector<8x8x128xf32> to vector<64x128xf32>
    %c6 = arith.constant 6 : index
    %c0_46 = arith.constant 0 : index
    %c0_47 = arith.constant 0 : index
    %46 = vector.load %arg2[%c6, %c0_46, %c0_47] : memref<9x128x128xf32, #tpu.memory_space<vmem>>, vector<1x128x128xf32>
    %47 = vector.shape_cast %46 : vector<1x128x128xf32> to vector<128x128xf32>
    %cst_48 = arith.constant dense<0.000000e+00> : vector<64x128xf32>
    %48 = tpu.matmul %45, %47, %cst_48 {dimension_numbers = #tpu.dot_dimension_numbers<[1], [0], [0], [1], [0, 0, 1, 1], [], []>} : vector<64x128xf32>, vector<128x128xf32>, vector<64x128xf32> -> vector<64x128xf32>
    %49 = arith.addf %42, %48 : vector<64x128xf32>
    %c1_49 = arith.constant 1 : index
    %c1_50 = arith.constant 1 : index
    %c0_51 = arith.constant 0 : index
    %c0_52 = arith.constant 0 : index
    %50 = vector.load %arg1[%c1_49, %c1_50, %c0_51, %c0_52] : memref<4x9x9x128xf32, #tpu.memory_space<vmem>>, vector<1x8x8x128xf32>
    %51 = vector.shape_cast %50 : vector<1x8x8x128xf32> to vector<8x8x128xf32>
    %52 = vector.shape_cast %51 : vector<8x8x128xf32> to vector<64x128xf32>
    %c7 = arith.constant 7 : index
    %c0_53 = arith.constant 0 : index
    %c0_54 = arith.constant 0 : index
    %53 = vector.load %arg2[%c7, %c0_53, %c0_54] : memref<9x128x128xf32, #tpu.memory_space<vmem>>, vector<1x128x128xf32>
    %54 = vector.shape_cast %53 : vector<1x128x128xf32> to vector<128x128xf32>
    %cst_55 = arith.constant dense<0.000000e+00> : vector<64x128xf32>
    %55 = tpu.matmul %52, %54, %cst_55 {dimension_numbers = #tpu.dot_dimension_numbers<[1], [0], [0], [1], [0, 0, 1, 1], [], []>} : vector<64x128xf32>, vector<128x128xf32>, vector<64x128xf32> -> vector<64x128xf32>
    %56 = arith.addf %49, %55 : vector<64x128xf32>
    %c0_56 = arith.constant 0 : index
    %c1_57 = arith.constant 1 : index
    %c1_58 = arith.constant 1 : index
    %c0_59 = arith.constant 0 : index
    %57 = vector.load %arg1[%c0_56, %c1_57, %c1_58, %c0_59] : memref<4x9x9x128xf32, #tpu.memory_space<vmem>>, vector<1x8x8x128xf32>
    %58 = vector.shape_cast %57 : vector<1x8x8x128xf32> to vector<8x8x128xf32>
    %59 = vector.shape_cast %58 : vector<8x8x128xf32> to vector<64x128xf32>
    %c8 = arith.constant 8 : index
    %c0_60 = arith.constant 0 : index
    %c0_61 = arith.constant 0 : index
    %60 = vector.load %arg2[%c8, %c0_60, %c0_61] : memref<9x128x128xf32, #tpu.memory_space<vmem>>, vector<1x128x128xf32>
    %61 = vector.shape_cast %60 : vector<1x128x128xf32> to vector<128x128xf32>
    %cst_62 = arith.constant dense<0.000000e+00> : vector<64x128xf32>
    %62 = tpu.matmul %59, %61, %cst_62 {dimension_numbers = #tpu.dot_dimension_numbers<[1], [0], [0], [1], [0, 0, 1, 1], [], []>} : vector<64x128xf32>, vector<128x128xf32>, vector<64x128xf32> -> vector<64x128xf32>
    %63 = arith.addf %56, %62 : vector<64x128xf32>
    %c0_63 = arith.constant 0 : index
    %c0_64 = arith.constant 0 : index
    %c0_65 = arith.constant 0 : index
    %64 = vector.load %arg3[%c0_63, %c0_64, %c0_65] : memref<1x64x128xf32, #tpu.memory_space<vmem>>, vector<1x64x128xf32>
    %65 = vector.shape_cast %64 : vector<1x64x128xf32> to vector<64x128xf32>
    %66 = vector.shape_cast %63 : vector<64x128xf32> to vector<1x64x128xf32>
    tpu.vector_store %arg3[%c0_63, %c0_64, %c0_65], %66 {strides = array<i32>} : memref<1x64x128xf32, #tpu.memory_space<vmem>>, vector<1x64x128xf32>,
    %cst_66 = arith.constant dense<0.000000e+00> : vector<128xf32>
    %67 = vector.multi_reduction <add>, %63, %cst_66 [0] : vector<64x128xf32> to vector<128xf32>
    %68 = vector.shape_cast %67 : vector<128xf32> to vector<1x128xf32>
    %c0_67 = arith.constant 0 : index
    %c0_68 = arith.constant 0 : index
    %c0_69 = arith.constant 0 : index
    %69 = vector.load %arg4[%c0_67, %c0_68, %c0_69] : memref<1x1x128xf32, #tpu.memory_space<vmem>>, vector<1x1x128xf32>
    %70 = vector.shape_cast %69 : vector<1x1x128xf32> to vector<1x128xf32>
    %71 = vector.shape_cast %68 : vector<1x128xf32> to vector<1x1x128xf32>
    tpu.vector_store %arg4[%c0_67, %c0_68, %c0_69], %71 {strides = array<i32>} : memref<1x1x128xf32, #tpu.memory_space<vmem>>, vector<1x1x128xf32>,
    %72 = arith.mulf %63, %63 : vector<64x128xf32>
    %cst_70 = arith.constant dense<0.000000e+00> : vector<128xf32>
    %73 = vector.multi_reduction <add>, %72, %cst_70 [0] : vector<64x128xf32> to vector<128xf32>
    %74 = vector.shape_cast %73 : vector<128xf32> to vector<1x128xf32>
    %c0_71 = arith.constant 0 : index
    %c0_72 = arith.constant 0 : index
    %c0_73 = arith.constant 0 : index
    %75 = vector.load %arg5[%c0_71, %c0_72, %c0_73] : memref<1x1x128xf32, #tpu.memory_space<vmem>>, vector<1x1x128xf32>
    %76 = vector.shape_cast %75 : vector<1x1x128xf32> to vector<1x128xf32>
    %77 = vector.shape_cast %74 : vector<1x128xf32> to vector<1x1x128xf32>
    tpu.vector_store %arg5[%c0_71, %c0_72, %c0_73], %77 {strides = array<i32>} : memref<1x1x128xf32, #tpu.memory_space<vmem>>, vector<1x1x128xf32>,
    return
  }
  func.func @transform_0(%arg0: i32) -> (i32, i32, i32, i32) {
    %c0_i32 = arith.constant 0 : i32
    %c0_i32_0 = arith.constant 0 : i32
    %c0_i32_1 = arith.constant 0 : i32
    %c0_i32_2 = arith.constant 0 : i32
    return %arg0, %c0_i32, %c0_i32_0, %c0_i32_1 : i32, i32, i32, i32
  }
  func.func @transform_1(%arg0: i32) -> (i32, i32, i32) {
    %c0_i32 = arith.constant 0 : i32
    %c0_i32_0 = arith.constant 0 : i32
    %c0_i32_1 = arith.constant 0 : i32
    %c0_i32_2 = arith.constant 0 : i32
    return %c0_i32, %c0_i32_0, %c0_i32_1 : i32, i32, i32
  }
  func.func @transform_2(%arg0: i32) -> (i32, i32, i32) {
    %c0_i32 = arith.constant 0 : i32
    %c0_i32_0 = arith.constant 0 : i32
    %c0_i32_1 = arith.constant 0 : i32
    return %arg0, %c0_i32, %c0_i32_0 : i32, i32, i32
  }
  func.func @transform_3(%arg0: i32) -> (i32, i32, i32) {
    %c0_i32 = arith.constant 0 : i32
    %c0_i32_0 = arith.constant 0 : i32
    %c0_i32_1 = arith.constant 0 : i32
    return %arg0, %c0_i32, %c0_i32_0 : i32, i32, i32
  }
  func.func @transform_4(%arg0: i32) -> (i32, i32, i32) {
    %c0_i32 = arith.constant 0 : i32
    %c0_i32_0 = arith.constant 0 : i32
    %c0_i32_1 = arith.constant 0 : i32
    return %arg0, %c0_i32, %c0_i32_0 : i32, i32, i32
  }
}

module attributes {stable_mosaic.version = 11 : i64} {
  func.func @_scale_shift_relu_kernel(%arg0: i32, %arg1: memref<128x128xf32, #tpu.memory_space<vmem>>, %arg2: memref<1x128xf32, #tpu.memory_space<vmem>>, %arg3: memref<1x128xf32, #tpu.memory_space<vmem>>, %arg4: memref<128x128xf32, #tpu.memory_space<vmem>>) attributes {dimension_semantics = [#tpu.dimension_semantics<parallel>], iteration_bounds = array<i64: 1>, scalar_prefetch = 0 : i64, scratch_operands = 0 : i64, tpu.core_type = #tpu.core_type<tc>, window_params = [{transform_indices = @transform_0, window_bounds = array<i64: 128, 128>}, {pipeline_mode = #tpu.pipeline_mode<synchronous>, transform_indices = @transform_1, window_bounds = array<i64: 1, 128>}, {pipeline_mode = #tpu.pipeline_mode<synchronous>, transform_indices = @transform_2, window_bounds = array<i64: 1, 128>}, {transform_indices = @transform_3, window_bounds = array<i64: 128, 128>}]} {
    %c0 = arith.constant 0 : index
    %c0_0 = arith.constant 0 : index
    %0 = vector.load %arg1[%c0, %c0_0] : memref<128x128xf32, #tpu.memory_space<vmem>>, vector<128x128xf32>
    %c0_1 = arith.constant 0 : index
    %c0_2 = arith.constant 0 : index
    %1 = vector.load %arg2[%c0_1, %c0_2] : memref<1x128xf32, #tpu.memory_space<vmem>>, vector<1x128xf32>
    %2 = vector.broadcast %1 : vector<1x128xf32> to vector<128x128xf32>
    %3 = arith.mulf %0, %2 : vector<128x128xf32>
    %c0_3 = arith.constant 0 : index
    %c0_4 = arith.constant 0 : index
    %4 = vector.load %arg3[%c0_3, %c0_4] : memref<1x128xf32, #tpu.memory_space<vmem>>, vector<1x128xf32>
    %5 = vector.broadcast %4 : vector<1x128xf32> to vector<128x128xf32>
    %6 = arith.addf %3, %5 : vector<128x128xf32>
    %cst = arith.constant 0.000000e+00 : f32
    %7 = vector.broadcast %cst : f32 to vector<128x128xf32>
    %8 = arith.maximumf %6, %7 : vector<128x128xf32>
    %c0_5 = arith.constant 0 : index
    %c0_6 = arith.constant 0 : index
    %9 = vector.load %arg4[%c0_5, %c0_6] : memref<128x128xf32, #tpu.memory_space<vmem>>, vector<128x128xf32>
    tpu.vector_store %arg4[%c0_5, %c0_6], %8 {strides = array<i32>} : memref<128x128xf32, #tpu.memory_space<vmem>>, vector<128x128xf32>,
    return
  }
  func.func @transform_0(%arg0: i32) -> (i32, i32) {
    %c0_i32 = arith.constant 0 : i32
    %c0_i32_0 = arith.constant 0 : i32
    return %arg0, %c0_i32 : i32, i32
  }
  func.func @transform_1(%arg0: i32) -> (i32, i32) {
    %c0_i32 = arith.constant 0 : i32
    %c0_i32_0 = arith.constant 0 : i32
    %c0_i32_1 = arith.constant 0 : i32
    return %c0_i32, %c0_i32_0 : i32, i32
  }
  func.func @transform_2(%arg0: i32) -> (i32, i32) {
    %c0_i32 = arith.constant 0 : i32
    %c0_i32_0 = arith.constant 0 : i32
    %c0_i32_1 = arith.constant 0 : i32
    return %c0_i32, %c0_i32_0 : i32, i32
  }
  func.func @transform_3(%arg0: i32) -> (i32, i32) {
    %c0_i32 = arith.constant 0 : i32
    %c0_i32_0 = arith.constant 0 : i32
    return %arg0, %c0_i32 : i32, i32
  }
}

module attributes {stable_mosaic.version = 11 : i64} {
  func.func @_conv_bnstats_kernel(%arg0: i32, %arg1: memref<1x10x10x128xf32, #tpu.memory_space<vmem>>, %arg2: memref<9x128x128xf32, #tpu.memory_space<vmem>>, %arg3: memref<1x64x128xf32, #tpu.memory_space<vmem>>, %arg4: memref<1x1x128xf32, #tpu.memory_space<vmem>>, %arg5: memref<1x1x128xf32, #tpu.memory_space<vmem>>) attributes {dimension_semantics = [#tpu.dimension_semantics<parallel>], iteration_bounds = array<i64: 2>, scalar_prefetch = 0 : i64, scratch_operands = 0 : i64, tpu.core_type = #tpu.core_type<tc>, window_params = [{transform_indices = @transform_0, window_bounds = array<i64: 1, 10, 10, 128>}, {pipeline_mode = #tpu.pipeline_mode<synchronous>, transform_indices = @transform_1, window_bounds = array<i64: 9, 128, 128>}, {transform_indices = @transform_2, window_bounds = array<i64: 1, 64, 128>}, {transform_indices = @transform_3, window_bounds = array<i64: 1, 1, 128>}, {transform_indices = @transform_4, window_bounds = array<i64: 1, 1, 128>}]} {
    %cst = arith.constant 0.000000e+00 : f32
    %0 = vector.broadcast %cst : f32 to vector<64x128xf32>
    %c0 = arith.constant 0 : index
    %c0_0 = arith.constant 0 : index
    %c0_1 = arith.constant 0 : index
    %c0_2 = arith.constant 0 : index
    %1 = vector.load %arg1[%c0, %c0_0, %c0_1, %c0_2] : memref<1x10x10x128xf32, #tpu.memory_space<vmem>>, vector<1x8x8x128xf32>
    %2 = vector.shape_cast %1 : vector<1x8x8x128xf32> to vector<8x8x128xf32>
    %3 = vector.shape_cast %2 : vector<8x8x128xf32> to vector<64x128xf32>
    %c0_3 = arith.constant 0 : index
    %c0_4 = arith.constant 0 : index
    %c0_5 = arith.constant 0 : index
    %4 = vector.load %arg2[%c0_3, %c0_4, %c0_5] : memref<9x128x128xf32, #tpu.memory_space<vmem>>, vector<1x128x128xf32>
    %5 = vector.shape_cast %4 : vector<1x128x128xf32> to vector<128x128xf32>
    %cst_6 = arith.constant dense<0.000000e+00> : vector<64x128xf32>
    %6 = tpu.matmul %3, %5, %cst_6 {dimension_numbers = #tpu.dot_dimension_numbers<[1], [0], [0], [1], [0, 0, 1, 1], [], []>} : vector<64x128xf32>, vector<128x128xf32>, vector<64x128xf32> -> vector<64x128xf32>
    %7 = arith.addf %0, %6 : vector<64x128xf32>
    %c0_7 = arith.constant 0 : index
    %c0_8 = arith.constant 0 : index
    %c1 = arith.constant 1 : index
    %c0_9 = arith.constant 0 : index
    %8 = vector.load %arg1[%c0_7, %c0_8, %c1, %c0_9] : memref<1x10x10x128xf32, #tpu.memory_space<vmem>>, vector<1x8x8x128xf32>
    %9 = vector.shape_cast %8 : vector<1x8x8x128xf32> to vector<8x8x128xf32>
    %10 = vector.shape_cast %9 : vector<8x8x128xf32> to vector<64x128xf32>
    %c1_10 = arith.constant 1 : index
    %c0_11 = arith.constant 0 : index
    %c0_12 = arith.constant 0 : index
    %11 = vector.load %arg2[%c1_10, %c0_11, %c0_12] : memref<9x128x128xf32, #tpu.memory_space<vmem>>, vector<1x128x128xf32>
    %12 = vector.shape_cast %11 : vector<1x128x128xf32> to vector<128x128xf32>
    %cst_13 = arith.constant dense<0.000000e+00> : vector<64x128xf32>
    %13 = tpu.matmul %10, %12, %cst_13 {dimension_numbers = #tpu.dot_dimension_numbers<[1], [0], [0], [1], [0, 0, 1, 1], [], []>} : vector<64x128xf32>, vector<128x128xf32>, vector<64x128xf32> -> vector<64x128xf32>
    %14 = arith.addf %7, %13 : vector<64x128xf32>
    %c0_14 = arith.constant 0 : index
    %c0_15 = arith.constant 0 : index
    %c2 = arith.constant 2 : index
    %c0_16 = arith.constant 0 : index
    %15 = vector.load %arg1[%c0_14, %c0_15, %c2, %c0_16] : memref<1x10x10x128xf32, #tpu.memory_space<vmem>>, vector<1x8x8x128xf32>
    %16 = vector.shape_cast %15 : vector<1x8x8x128xf32> to vector<8x8x128xf32>
    %17 = vector.shape_cast %16 : vector<8x8x128xf32> to vector<64x128xf32>
    %c2_17 = arith.constant 2 : index
    %c0_18 = arith.constant 0 : index
    %c0_19 = arith.constant 0 : index
    %18 = vector.load %arg2[%c2_17, %c0_18, %c0_19] : memref<9x128x128xf32, #tpu.memory_space<vmem>>, vector<1x128x128xf32>
    %19 = vector.shape_cast %18 : vector<1x128x128xf32> to vector<128x128xf32>
    %cst_20 = arith.constant dense<0.000000e+00> : vector<64x128xf32>
    %20 = tpu.matmul %17, %19, %cst_20 {dimension_numbers = #tpu.dot_dimension_numbers<[1], [0], [0], [1], [0, 0, 1, 1], [], []>} : vector<64x128xf32>, vector<128x128xf32>, vector<64x128xf32> -> vector<64x128xf32>
    %21 = arith.addf %14, %20 : vector<64x128xf32>
    %c0_21 = arith.constant 0 : index
    %c1_22 = arith.constant 1 : index
    %c0_23 = arith.constant 0 : index
    %c0_24 = arith.constant 0 : index
    %22 = vector.load %arg1[%c0_21, %c1_22, %c0_23, %c0_24] : memref<1x10x10x128xf32, #tpu.memory_space<vmem>>, vector<1x8x8x128xf32>
    %23 = vector.shape_cast %22 : vector<1x8x8x128xf32> to vector<8x8x128xf32>
    %24 = vector.shape_cast %23 : vector<8x8x128xf32> to vector<64x128xf32>
    %c3 = arith.constant 3 : index
    %c0_25 = arith.constant 0 : index
    %c0_26 = arith.constant 0 : index
    %25 = vector.load %arg2[%c3, %c0_25, %c0_26] : memref<9x128x128xf32, #tpu.memory_space<vmem>>, vector<1x128x128xf32>
    %26 = vector.shape_cast %25 : vector<1x128x128xf32> to vector<128x128xf32>
    %cst_27 = arith.constant dense<0.000000e+00> : vector<64x128xf32>
    %27 = tpu.matmul %24, %26, %cst_27 {dimension_numbers = #tpu.dot_dimension_numbers<[1], [0], [0], [1], [0, 0, 1, 1], [], []>} : vector<64x128xf32>, vector<128x128xf32>, vector<64x128xf32> -> vector<64x128xf32>
    %28 = arith.addf %21, %27 : vector<64x128xf32>
    %c0_28 = arith.constant 0 : index
    %c1_29 = arith.constant 1 : index
    %c1_30 = arith.constant 1 : index
    %c0_31 = arith.constant 0 : index
    %29 = vector.load %arg1[%c0_28, %c1_29, %c1_30, %c0_31] : memref<1x10x10x128xf32, #tpu.memory_space<vmem>>, vector<1x8x8x128xf32>
    %30 = vector.shape_cast %29 : vector<1x8x8x128xf32> to vector<8x8x128xf32>
    %31 = vector.shape_cast %30 : vector<8x8x128xf32> to vector<64x128xf32>
    %c4 = arith.constant 4 : index
    %c0_32 = arith.constant 0 : index
    %c0_33 = arith.constant 0 : index
    %32 = vector.load %arg2[%c4, %c0_32, %c0_33] : memref<9x128x128xf32, #tpu.memory_space<vmem>>, vector<1x128x128xf32>
    %33 = vector.shape_cast %32 : vector<1x128x128xf32> to vector<128x128xf32>
    %cst_34 = arith.constant dense<0.000000e+00> : vector<64x128xf32>
    %34 = tpu.matmul %31, %33, %cst_34 {dimension_numbers = #tpu.dot_dimension_numbers<[1], [0], [0], [1], [0, 0, 1, 1], [], []>} : vector<64x128xf32>, vector<128x128xf32>, vector<64x128xf32> -> vector<64x128xf32>
    %35 = arith.addf %28, %34 : vector<64x128xf32>
    %c0_35 = arith.constant 0 : index
    %c1_36 = arith.constant 1 : index
    %c2_37 = arith.constant 2 : index
    %c0_38 = arith.constant 0 : index
    %36 = vector.load %arg1[%c0_35, %c1_36, %c2_37, %c0_38] : memref<1x10x10x128xf32, #tpu.memory_space<vmem>>, vector<1x8x8x128xf32>
    %37 = vector.shape_cast %36 : vector<1x8x8x128xf32> to vector<8x8x128xf32>
    %38 = vector.shape_cast %37 : vector<8x8x128xf32> to vector<64x128xf32>
    %c5 = arith.constant 5 : index
    %c0_39 = arith.constant 0 : index
    %c0_40 = arith.constant 0 : index
    %39 = vector.load %arg2[%c5, %c0_39, %c0_40] : memref<9x128x128xf32, #tpu.memory_space<vmem>>, vector<1x128x128xf32>
    %40 = vector.shape_cast %39 : vector<1x128x128xf32> to vector<128x128xf32>
    %cst_41 = arith.constant dense<0.000000e+00> : vector<64x128xf32>
    %41 = tpu.matmul %38, %40, %cst_41 {dimension_numbers = #tpu.dot_dimension_numbers<[1], [0], [0], [1], [0, 0, 1, 1], [], []>} : vector<64x128xf32>, vector<128x128xf32>, vector<64x128xf32> -> vector<64x128xf32>
    %42 = arith.addf %35, %41 : vector<64x128xf32>
    %c0_42 = arith.constant 0 : index
    %c2_43 = arith.constant 2 : index
    %c0_44 = arith.constant 0 : index
    %c0_45 = arith.constant 0 : index
    %43 = vector.load %arg1[%c0_42, %c2_43, %c0_44, %c0_45] : memref<1x10x10x128xf32, #tpu.memory_space<vmem>>, vector<1x8x8x128xf32>
    %44 = vector.shape_cast %43 : vector<1x8x8x128xf32> to vector<8x8x128xf32>
    %45 = vector.shape_cast %44 : vector<8x8x128xf32> to vector<64x128xf32>
    %c6 = arith.constant 6 : index
    %c0_46 = arith.constant 0 : index
    %c0_47 = arith.constant 0 : index
    %46 = vector.load %arg2[%c6, %c0_46, %c0_47] : memref<9x128x128xf32, #tpu.memory_space<vmem>>, vector<1x128x128xf32>
    %47 = vector.shape_cast %46 : vector<1x128x128xf32> to vector<128x128xf32>
    %cst_48 = arith.constant dense<0.000000e+00> : vector<64x128xf32>
    %48 = tpu.matmul %45, %47, %cst_48 {dimension_numbers = #tpu.dot_dimension_numbers<[1], [0], [0], [1], [0, 0, 1, 1], [], []>} : vector<64x128xf32>, vector<128x128xf32>, vector<64x128xf32> -> vector<64x128xf32>
    %49 = arith.addf %42, %48 : vector<64x128xf32>
    %c0_49 = arith.constant 0 : index
    %c2_50 = arith.constant 2 : index
    %c1_51 = arith.constant 1 : index
    %c0_52 = arith.constant 0 : index
    %50 = vector.load %arg1[%c0_49, %c2_50, %c1_51, %c0_52] : memref<1x10x10x128xf32, #tpu.memory_space<vmem>>, vector<1x8x8x128xf32>
    %51 = vector.shape_cast %50 : vector<1x8x8x128xf32> to vector<8x8x128xf32>
    %52 = vector.shape_cast %51 : vector<8x8x128xf32> to vector<64x128xf32>
    %c7 = arith.constant 7 : index
    %c0_53 = arith.constant 0 : index
    %c0_54 = arith.constant 0 : index
    %53 = vector.load %arg2[%c7, %c0_53, %c0_54] : memref<9x128x128xf32, #tpu.memory_space<vmem>>, vector<1x128x128xf32>
    %54 = vector.shape_cast %53 : vector<1x128x128xf32> to vector<128x128xf32>
    %cst_55 = arith.constant dense<0.000000e+00> : vector<64x128xf32>
    %55 = tpu.matmul %52, %54, %cst_55 {dimension_numbers = #tpu.dot_dimension_numbers<[1], [0], [0], [1], [0, 0, 1, 1], [], []>} : vector<64x128xf32>, vector<128x128xf32>, vector<64x128xf32> -> vector<64x128xf32>
    %56 = arith.addf %49, %55 : vector<64x128xf32>
    %c0_56 = arith.constant 0 : index
    %c2_57 = arith.constant 2 : index
    %c2_58 = arith.constant 2 : index
    %c0_59 = arith.constant 0 : index
    %57 = vector.load %arg1[%c0_56, %c2_57, %c2_58, %c0_59] : memref<1x10x10x128xf32, #tpu.memory_space<vmem>>, vector<1x8x8x128xf32>
    %58 = vector.shape_cast %57 : vector<1x8x8x128xf32> to vector<8x8x128xf32>
    %59 = vector.shape_cast %58 : vector<8x8x128xf32> to vector<64x128xf32>
    %c8 = arith.constant 8 : index
    %c0_60 = arith.constant 0 : index
    %c0_61 = arith.constant 0 : index
    %60 = vector.load %arg2[%c8, %c0_60, %c0_61] : memref<9x128x128xf32, #tpu.memory_space<vmem>>, vector<1x128x128xf32>
    %61 = vector.shape_cast %60 : vector<1x128x128xf32> to vector<128x128xf32>
    %cst_62 = arith.constant dense<0.000000e+00> : vector<64x128xf32>
    %62 = tpu.matmul %59, %61, %cst_62 {dimension_numbers = #tpu.dot_dimension_numbers<[1], [0], [0], [1], [0, 0, 1, 1], [], []>} : vector<64x128xf32>, vector<128x128xf32>, vector<64x128xf32> -> vector<64x128xf32>
    %63 = arith.addf %56, %62 : vector<64x128xf32>
    %c0_63 = arith.constant 0 : index
    %c0_64 = arith.constant 0 : index
    %c0_65 = arith.constant 0 : index
    %64 = vector.load %arg3[%c0_63, %c0_64, %c0_65] : memref<1x64x128xf32, #tpu.memory_space<vmem>>, vector<1x64x128xf32>
    %65 = vector.shape_cast %64 : vector<1x64x128xf32> to vector<64x128xf32>
    %66 = vector.shape_cast %63 : vector<64x128xf32> to vector<1x64x128xf32>
    tpu.vector_store %arg3[%c0_63, %c0_64, %c0_65], %66 {strides = array<i32>} : memref<1x64x128xf32, #tpu.memory_space<vmem>>, vector<1x64x128xf32>,
    %cst_66 = arith.constant dense<0.000000e+00> : vector<128xf32>
    %67 = vector.multi_reduction <add>, %63, %cst_66 [0] : vector<64x128xf32> to vector<128xf32>
    %68 = vector.shape_cast %67 : vector<128xf32> to vector<1x128xf32>
    %c0_67 = arith.constant 0 : index
    %c0_68 = arith.constant 0 : index
    %c0_69 = arith.constant 0 : index
    %69 = vector.load %arg4[%c0_67, %c0_68, %c0_69] : memref<1x1x128xf32, #tpu.memory_space<vmem>>, vector<1x1x128xf32>
    %70 = vector.shape_cast %69 : vector<1x1x128xf32> to vector<1x128xf32>
    %71 = vector.shape_cast %68 : vector<1x128xf32> to vector<1x1x128xf32>
    tpu.vector_store %arg4[%c0_67, %c0_68, %c0_69], %71 {strides = array<i32>} : memref<1x1x128xf32, #tpu.memory_space<vmem>>, vector<1x1x128xf32>,
    %72 = arith.mulf %63, %63 : vector<64x128xf32>
    %cst_70 = arith.constant dense<0.000000e+00> : vector<128xf32>
    %73 = vector.multi_reduction <add>, %72, %cst_70 [0] : vector<64x128xf32> to vector<128xf32>
    %74 = vector.shape_cast %73 : vector<128xf32> to vector<1x128xf32>
    %c0_71 = arith.constant 0 : index
    %c0_72 = arith.constant 0 : index
    %c0_73 = arith.constant 0 : index
    %75 = vector.load %arg5[%c0_71, %c0_72, %c0_73] : memref<1x1x128xf32, #tpu.memory_space<vmem>>, vector<1x1x128xf32>
    %76 = vector.shape_cast %75 : vector<1x1x128xf32> to vector<1x128xf32>
    %77 = vector.shape_cast %74 : vector<1x128xf32> to vector<1x1x128xf32>
    tpu.vector_store %arg5[%c0_71, %c0_72, %c0_73], %77 {strides = array<i32>} : memref<1x1x128xf32, #tpu.memory_space<vmem>>, vector<1x1x128xf32>,
    return
  }
  func.func @transform_0(%arg0: i32) -> (i32, i32, i32, i32) {
    %c0_i32 = arith.constant 0 : i32
    %c0_i32_0 = arith.constant 0 : i32
    %c0_i32_1 = arith.constant 0 : i32
    %c0_i32_2 = arith.constant 0 : i32
    return %arg0, %c0_i32, %c0_i32_0, %c0_i32_1 : i32, i32, i32, i32
  }
  func.func @transform_1(%arg0: i32) -> (i32, i32, i32) {
    %c0_i32 = arith.constant 0 : i32
    %c0_i32_0 = arith.constant 0 : i32
    %c0_i32_1 = arith.constant 0 : i32
    %c0_i32_2 = arith.constant 0 : i32
    return %c0_i32, %c0_i32_0, %c0_i32_1 : i32, i32, i32
  }
  func.func @transform_2(%arg0: i32) -> (i32, i32, i32) {
    %c0_i32 = arith.constant 0 : i32
    %c0_i32_0 = arith.constant 0 : i32
    %c0_i32_1 = arith.constant 0 : i32
    return %arg0, %c0_i32, %c0_i32_0 : i32, i32, i32
  }
  func.func @transform_3(%arg0: i32) -> (i32, i32, i32) {
    %c0_i32 = arith.constant 0 : i32
    %c0_i32_0 = arith.constant 0 : i32
    %c0_i32_1 = arith.constant 0 : i32
    return %arg0, %c0_i32, %c0_i32_0 : i32, i32, i32
  }
  func.func @transform_4(%arg0: i32) -> (i32, i32, i32) {
    %c0_i32 = arith.constant 0 : i32
    %c0_i32_0 = arith.constant 0 : i32
    %c0_i32_1 = arith.constant 0 : i32
    return %arg0, %c0_i32, %c0_i32_0 : i32, i32, i32
  }
}

module attributes {stable_mosaic.version = 11 : i64} {
  func.func @_residual_epilogue_kernel(%arg0: i32, %arg1: memref<128x128xf32, #tpu.memory_space<vmem>>, %arg2: memref<128x128xf32, #tpu.memory_space<vmem>>, %arg3: memref<1x128xf32, #tpu.memory_space<vmem>>, %arg4: memref<1x128xf32, #tpu.memory_space<vmem>>, %arg5: memref<1x128xf32, #tpu.memory_space<vmem>>, %arg6: memref<1x128xf32, #tpu.memory_space<vmem>>, %arg7: memref<128x128xf32, #tpu.memory_space<vmem>>) attributes {dimension_semantics = [#tpu.dimension_semantics<parallel>], iteration_bounds = array<i64: 1>, scalar_prefetch = 0 : i64, scratch_operands = 0 : i64, tpu.core_type = #tpu.core_type<tc>, window_params = [{transform_indices = @transform_0, window_bounds = array<i64: 128, 128>}, {transform_indices = @transform_1, window_bounds = array<i64: 128, 128>}, {pipeline_mode = #tpu.pipeline_mode<synchronous>, transform_indices = @transform_2, window_bounds = array<i64: 1, 128>}, {pipeline_mode = #tpu.pipeline_mode<synchronous>, transform_indices = @transform_3, window_bounds = array<i64: 1, 128>}, {pipeline_mode = #tpu.pipeline_mode<synchronous>, transform_indices = @transform_4, window_bounds = array<i64: 1, 128>}, {pipeline_mode = #tpu.pipeline_mode<synchronous>, transform_indices = @transform_5, window_bounds = array<i64: 1, 128>}, {transform_indices = @transform_6, window_bounds = array<i64: 128, 128>}]} {
    %c0 = arith.constant 0 : index
    %c0_0 = arith.constant 0 : index
    %0 = vector.load %arg2[%c0, %c0_0] : memref<128x128xf32, #tpu.memory_space<vmem>>, vector<128x128xf32>
    %c0_1 = arith.constant 0 : index
    %c0_2 = arith.constant 0 : index
    %1 = vector.load %arg5[%c0_1, %c0_2] : memref<1x128xf32, #tpu.memory_space<vmem>>, vector<1x128xf32>
    %2 = vector.broadcast %1 : vector<1x128xf32> to vector<128x128xf32>
    %3 = arith.mulf %0, %2 : vector<128x128xf32>
    %c0_3 = arith.constant 0 : index
    %c0_4 = arith.constant 0 : index
    %4 = vector.load %arg6[%c0_3, %c0_4] : memref<1x128xf32, #tpu.memory_space<vmem>>, vector<1x128xf32>
    %5 = vector.broadcast %4 : vector<1x128xf32> to vector<128x128xf32>
    %6 = arith.addf %3, %5 : vector<128x128xf32>
    %c0_5 = arith.constant 0 : index
    %c0_6 = arith.constant 0 : index
    %7 = vector.load %arg1[%c0_5, %c0_6] : memref<128x128xf32, #tpu.memory_space<vmem>>, vector<128x128xf32>
    %c0_7 = arith.constant 0 : index
    %c0_8 = arith.constant 0 : index
    %8 = vector.load %arg3[%c0_7, %c0_8] : memref<1x128xf32, #tpu.memory_space<vmem>>, vector<1x128xf32>
    %9 = vector.broadcast %8 : vector<1x128xf32> to vector<128x128xf32>
    %10 = arith.mulf %7, %9 : vector<128x128xf32>
    %c0_9 = arith.constant 0 : index
    %c0_10 = arith.constant 0 : index
    %11 = vector.load %arg4[%c0_9, %c0_10] : memref<1x128xf32, #tpu.memory_space<vmem>>, vector<1x128xf32>
    %12 = vector.broadcast %11 : vector<1x128xf32> to vector<128x128xf32>
    %13 = arith.addf %10, %12 : vector<128x128xf32>
    %14 = arith.addf %13, %6 : vector<128x128xf32>
    %cst = arith.constant 0.000000e+00 : f32
    %15 = vector.broadcast %cst : f32 to vector<128x128xf32>
    %16 = arith.maximumf %14, %15 : vector<128x128xf32>
    %c0_11 = arith.constant 0 : index
    %c0_12 = arith.constant 0 : index
    %17 = vector.load %arg7[%c0_11, %c0_12] : memref<128x128xf32, #tpu.memory_space<vmem>>, vector<128x128xf32>
    tpu.vector_store %arg7[%c0_11, %c0_12], %16 {strides = array<i32>} : memref<128x128xf32, #tpu.memory_space<vmem>>, vector<128x128xf32>,
    return
  }
  func.func @transform_0(%arg0: i32) -> (i32, i32) {
    %c0_i32 = arith.constant 0 : i32
    %c0_i32_0 = arith.constant 0 : i32
    return %arg0, %c0_i32 : i32, i32
  }
  func.func @transform_1(%arg0: i32) -> (i32, i32) {
    %c0_i32 = arith.constant 0 : i32
    %c0_i32_0 = arith.constant 0 : i32
    return %arg0, %c0_i32 : i32, i32
  }
  func.func @transform_2(%arg0: i32) -> (i32, i32) {
    %c0_i32 = arith.constant 0 : i32
    %c0_i32_0 = arith.constant 0 : i32
    %c0_i32_1 = arith.constant 0 : i32
    return %c0_i32, %c0_i32_0 : i32, i32
  }
  func.func @transform_3(%arg0: i32) -> (i32, i32) {
    %c0_i32 = arith.constant 0 : i32
    %c0_i32_0 = arith.constant 0 : i32
    %c0_i32_1 = arith.constant 0 : i32
    return %c0_i32, %c0_i32_0 : i32, i32
  }
  func.func @transform_4(%arg0: i32) -> (i32, i32) {
    %c0_i32 = arith.constant 0 : i32
    %c0_i32_0 = arith.constant 0 : i32
    %c0_i32_1 = arith.constant 0 : i32
    return %c0_i32, %c0_i32_0 : i32, i32
  }
  func.func @transform_5(%arg0: i32) -> (i32, i32) {
    %c0_i32 = arith.constant 0 : i32
    %c0_i32_0 = arith.constant 0 : i32
    %c0_i32_1 = arith.constant 0 : i32
    return %c0_i32, %c0_i32_0 : i32, i32
  }
  func.func @transform_6(%arg0: i32) -> (i32, i32) {
    %c0_i32 = arith.constant 0 : i32
    %c0_i32_0 = arith.constant 0 : i32
    return %arg0, %c0_i32 : i32, i32
  }
}

</mosaic_0001>

<llo_original>
// kernel: basic_block_forward.14
$region0: #{basic_block_forward.14}
  #allocation0 [shape = 'u32[]', space=smem, size = 0x4, offset = 0x4, fixed_abs, tag = 'smem constant byte address 0x4 - core index']
  #allocation1 [shape = 'u32[72,128]{1,0:T(1,128)}', space=vmem, size = 0x9000, scoped, tag = 'internal scratch']
  %s0 = inlined_call_operand.vmem [shape: f32[2,1,128], index: 0, kind: input, shape index: {}]
  %s1 = inlined_call_operand.vmem [shape: f32[2,1,128], index: 1, kind: input, shape index: {}]
  %s2 = inlined_call_operand.vmem [shape: f32[1,128], index: 2, kind: input, shape index: {}]
  %s3 = inlined_call_operand.vmem [shape: f32[1,128], index: 3, kind: input, shape index: {}]
  %s4 = inlined_call_operand.vmem [shape: f32[1,128], index: 4, kind: output, shape index: {0}]
  %s5 = inlined_call_operand.vmem [shape: f32[1,128], index: 5, kind: output, shape index: {1}]
  %6 = xla_tuple %s4, %s5
  %s7 = sld [smem:[#allocation0]]
  $region34: #{basic_block_forward.14} parent=0
    _
  %s9 = ssub.s32 1, %s7
  %s10 = scalar_select 0, %s9, %s7
  // Predicated region
  $region2: #{basic_block_forward.14} parent=0 // pred_check
    _
  $region3: #{basic_block_forward.14} parent=0 // pred_check_branch
    %12 = sbr.rel (0) target = $region5
  $region4: #{basic_block_forward.14} parent=0 // pred_region
    _
  $region5: #{basic_block_forward.14} parent=0 // pred_fallthru
    _
  // Predicated region
  $region6: #{basic_block_forward.14} parent=0 // pred_check
    _
  $region7: #{basic_block_forward.14} parent=0 // pred_check_branch
    %14 = sbr.rel (0) target = $region9
  $region8: #{basic_block_forward.14} parent=0 // pred_region
    _
  $region9: #{basic_block_forward.14} parent=0 // pred_fallthru
    _
  // Predicated region
  $region10: #{basic_block_forward.14} parent=0 // pred_check
    _
  $region11: #{basic_block_forward.14} parent=0 // pred_check_branch
    %16 = sbr.rel (0) target = $region13
  $region12: #{basic_block_forward.14} parent=0 // pred_region
    _
  $region13: #{basic_block_forward.14} parent=0 // pred_fallthru
    _
  // Predicated region
  $region14: #{basic_block_forward.14} parent=0 // pred_check
    _
  $region15: #{basic_block_forward.14} parent=0 // pred_check_branch
    %18 = sbr.rel (0) target = $region17
  $region16: #{basic_block_forward.14} parent=0 // pred_region
    _
  $region17: #{basic_block_forward.14} parent=0 // pred_fallthru
    _
  %v19 = vld [vmem:[%s0] sm:$0x1]
  %v20 = vld [vmem:[%s0 + $0x1] sm:$0x1]
  %vm21 = vcmask 1040384
  %v22 = vsel %vm21, %v19, 0.0
  %v23 = vsel %vm21, %v20, 0.0
  %v24 = vadd.f32 %v22, %v23
  %v25 = vrcp.pop 128.0
  %v26 = vmul.f32 128.0, %v25
  %v27 = vsub.f32 1.0, %v26
  %v28 = vmul.f32 %v25, %v27
  %v29 = vadd.f32 %v25, %v28
  %vm30 = vweird.f32 %v25
  %v31 = vsel %vm30, %v25, %v29
  %v32 = vmul.f32 %v24, %v31
  %v33 = vld [vmem:[%s1] sm:$0x1]
  %v34 = vld [vmem:[%s1 + $0x1] sm:$0x1]
  %v35 = vsel %vm21, %v33, 0.0
  %v36 = vsel %vm21, %v34, 0.0
  %v37 = vadd.f32 %v35, %v36
  %v38 = vmul.f32 %v37, %v31
  %v39 = vmul.f32 %v32, %v32
  %v40 = vsub.f32 %v38, %v39
  %v41 = vmax.f32 %v40, 0.0
  %v42 = vld [vmem:[%s2] sm:$0x1]
  %v43 = vadd.f32 %v41, 1e-05
  %v44 = vrsqrt.pop %v43
  %v45 = vmul.f32 %v44, %v43
  %v46 = vmul.f32 %v45, %v44
  %v47 = vmul.f32 0.5, %v46
  %v48 = vsub.f32 1.5, %v47
  %v49 = vmul.f32 %v44, %v48
  %vm50 = vweird.f32 %v43
  %vm51 = vweird.f32 %v44
  %vm52 = vmor %vm50, %vm51
  %v53 = vsel %vm52, %v44, %v49
  %v54 = vmul.f32 %v42, %v53
  %55 = vst [vmem:[%s4] sm:$0x1] %v54
  %v56 = vld [vmem:[%s3] sm:$0x1]
  %v57 = vmul.f32 %v32, %v54
  %v58 = vsub.f32 %v56, %v57
  %59 = vst [vmem:[%s5] sm:$0x1] %v58
  // Predicated region
  $region18: #{basic_block_forward.14} parent=0 // pred_check
    _
  $region19: #{basic_block_forward.14} parent=0 // pred_check_branch
    %61 = sbr.rel (0) target = $region21
  $region20: #{basic_block_forward.14} parent=0 // pred_region
    _
  $region21: #{basic_block_forward.14} parent=0 // pred_fallthru
    _
  // Predicated region
  $region22: #{basic_block_forward.14} parent=0 // pred_check
    _
  $region23: #{basic_block_forward.14} parent=0 // pred_check_branch
    %63 = sbr.rel (0) target = $region25
  $region24: #{basic_block_forward.14} parent=0 // pred_region
    _
  $region25: #{basic_block_forward.14} parent=0 // pred_fallthru
    _
  // Predicated region
  $region26: #{basic_block_forward.14} parent=0 // pred_check
    _
  $region27: #{basic_block_forward.14} parent=0 // pred_check_branch
    %65 = sbr.rel (0) target = $region29
  $region28: #{basic_block_forward.14} parent=0 // pred_region
    _
  $region29: #{basic_block_forward.14} parent=0 // pred_fallthru
    _
  // Predicated region
  $region30: #{basic_block_forward.14} parent=0 // pred_check
    _
  $region31: #{basic_block_forward.14} parent=0 // pred_check_branch
    %67 = sbr.rel (0) target = $region33
  $region32: #{basic_block_forward.14} parent=0 // pred_region
    _
  $region33: #{basic_block_forward.14} parent=0 // pred_fallthru
    _

// kernel: basic_block_forward.13
$region0: #{basic_block_forward.13}
  #allocation0 [shape = 'u32[]', space=smem, size = 0x4, offset = 0x4, fixed_abs, tag = 'smem constant byte address 0x4 - core index']
  #allocation1 [shape = 'u32[72,128]{1,0:T(1,128)}', space=vmem, size = 0x9000, scoped, tag = 'internal scratch']
  %s0 = inlined_call_operand.vmem [shape: f32[2,8,8,128], index: 0, kind: input, shape index: {}]
  %s1 = inlined_call_operand.vmem [shape: f32[1,128,128], index: 1, kind: input, shape index: {}]
  %s2 = inlined_call_operand.vmem [shape: f32[2,64,128], index: 2, kind: output, shape index: {0}]
  %s3 = inlined_call_operand.vmem [shape: f32[2,1,128], index: 3, kind: output, shape index: {1}]
  %s4 = inlined_call_operand.vmem [shape: f32[2,1,128], index: 4, kind: output, shape index: {2}]
  %5 = xla_tuple %s2, %s3, %s4
  %s6 = sld [smem:[#allocation0]]
  $region57: #{basic_block_forward.13} parent=0
    _
  %s8 = ssub.s32 1, %s6
  %s9 = scalar_select 0, %s8, %s6
  loop: start=0, step=1, limit=4
  $region2: #{basic_block_forward.13} parent=0 // loop_pre_header
    _
  $region3: #{basic_block_forward.13} parent=0 // loop_header
    %s11 = sphi 0, %s15
    %p12 = scmp.ge.s32.totalorder %s11, 4
    %s21 = sphi 0, %s23
    %s24 = sphi 0, %s21
    %s25 = sphi 0, %s24
    %s41 = sphi 0, %s25
    %s45 = sphi 0, %s45
    %s47 = sphi 0, %s45
    %s48 = sphi 0, %s47
    %s62 = sphi 0, %s48
    %s68 = sphi 0, %s70
    %s71 = sphi 0, %s68
    %s72 = sphi 0, %s71
    %s88 = sphi 0, %s72
    %s94 = sphi 0, %s96
    %s97 = sphi 0, %s94
    %s98 = sphi 0, %s97
    %s114 = sphi 0, %s98
    %s120 = sphi 0, %s122
    %s123 = sphi 0, %s120
    %s124 = sphi 0, %s123
    %s140 = sphi 0, %s124
  $region4: #{basic_block_forward.13} parent=0 // loop_header_branch
    %14 = sbr.rel (%p12) target = $region8
  $region5: #{basic_block_forward.13} parent=0 // loop_body
    %s16 = ssub.s32 %s11, 1
    %s17 = ssub.s32 %s11, 2
    %s18 = sadd.s32 %s11, 1
    %s19 = ssub.s32 %s11, %s18
    %p20 = scmp.eq.s32.totalorder %s19, 0
    %s22 = sadd.s32 %s21, 1
    %s23 = scalar_select %p20, %s21, %s22
    %p26 = pneg %p20
    %p27 = scmp.eq.s32.totalorder %s11, 1
    %p28 = por %p26, %p27
    %p29 = scmp.ne.s32.totalorder %s21, %s24
    %p30 = scmp.eq.s32.totalorder %s11, 0
    %p31 = por %p29, %p30
    %p32 = scmp.ne.s32.totalorder %s21, %s24
    %p33 = scmp.eq.s32.totalorder %s16, 1
    %p34 = por %p32, %p33
    %p35 = scmp.ne.s32.totalorder %s24, %s25
    %p36 = scmp.eq.s32.totalorder %s16, 0
    %p37 = por %p35, %p36
    %p38 = scmp.ne.s32.totalorder %s24, %s25
    %p39 = scmp.eq.s32.totalorder %s17, 1
    %p40 = por %p38, %p39
    %p42 = scmp.ne.s32.totalorder %s25, %s41
    %p43 = scmp.eq.s32.totalorder %s17, 0
    %p44 = por %p42, %p43
    %s46 = sadd.s32 %s45, 1
    %p49 = scmp.eq.s32.totalorder %s11, 1
    %p50 = scmp.ne.s32.totalorder %s45, %s47
    %p51 = scmp.eq.s32.totalorder %s11, 0
    %p52 = por %p50, %p51
    %p53 = scmp.ne.s32.totalorder %s45, %s47
    %p54 = scmp.eq.s32.totalorder %s16, 1
    %p55 = por %p53, %p54
    %p56 = scmp.ne.s32.totalorder %s47, %s48
    %p57 = scmp.eq.s32.totalorder %s16, 0
    %p58 = por %p56, %p57
    %p59 = scmp.ne.s32.totalorder %s47, %s48
    %p60 = scmp.eq.s32.totalorder %s17, 1
    %p61 = por %p59, %p60
    %p63 = scmp.ne.s32.totalorder %s48, %s62
    %p64 = scmp.eq.s32.totalorder %s17, 0
    %p65 = por %p63, %p64
    %s66 = ssub.s32 %s11, %s18
    %p67 = scmp.eq.s32.totalorder %s66, 0
    %s69 = sadd.s32 %s68, 1
    %s70 = scalar_select %p67, %s68, %s69
    %p73 = pneg %p67
    %p74 = scmp.eq.s32.totalorder %s11, 1
    %p75 = por %p73, %p74
    %p76 = scmp.ne.s32.totalorder %s68, %s71
    %p77 = scmp.eq.s32.totalorder %s11, 0
    %p78 = por %p76, %p77
    %p79 = scmp.ne.s32.totalorder %s68, %s71
    %p80 = scmp.eq.s32.totalorder %s16, 1
    %p81 = por %p79, %p80
    %p82 = scmp.ne.s32.totalorder %s71, %s72
    %p83 = scmp.eq.s32.totalorder %s16, 0
    %p84 = por %p82, %p83
    %p85 = scmp.ne.s32.totalorder %s71, %s72
    %p86 = scmp.eq.s32.totalorder %s17, 1
    %p87 = por %p85, %p86
    %p89 = scmp.ne.s32.totalorder %s72, %s88
    %p90 = scmp.eq.s32.totalorder %s17, 0
    %p91 = por %p89, %p90
    %s92 = ssub.s32 %s11, %s18
    %p93 = scmp.eq.s32.totalorder %s92, 0
    %s95 = sadd.s32 %s94, 1
    %s96 = scalar_select %p93, %s94, %s95
    %p99 = pneg %p93
    %p100 = scmp.eq.s32.totalorder %s11, 1
    %p101 = por %p99, %p100
    %p102 = scmp.ne.s32.totalorder %s94, %s97
    %p103 = scmp.eq.s32.totalorder %s11, 0
    %p104 = por %p102, %p103
    %p105 = scmp.ne.s32.totalorder %s94, %s97
    %p106 = scmp.eq.s32.totalorder %s16, 1
    %p107 = por %p105, %p106
    %p108 = scmp.ne.s32.totalorder %s97, %s98
    %p109 = scmp.eq.s32.totalorder %s16, 0
    %p110 = por %p108, %p109
    %p111 = scmp.ne.s32.totalorder %s97, %s98
    %p112 = scmp.eq.s32.totalorder %s17, 1
    %p113 = por %p111, %p112
    %p115 = scmp.ne.s32.totalorder %s98, %s114
    %p116 = scmp.eq.s32.totalorder %s17, 0
    %p117 = por %p115, %p116
    %s118 = ssub.s32 %s11, %s18
    %p119 = scmp.eq.s32.totalorder %s118, 0
    %s121 = sadd.s32 %s120, 1
    %s122 = scalar_select %p119, %s120, %s121
    %p125 = pneg %p119
    %p126 = scmp.eq.s32.totalorder %s11, 1
    %p127 = por %p125, %p126
    %p128 = scmp.ne.s32.totalorder %s120, %s123
    %p129 = scmp.eq.s32.totalorder %s11, 0
    %p130 = por %p128, %p129
    %p131 = scmp.ne.s32.totalorder %s120, %s123
    %p132 = scmp.eq.s32.totalorder %s16, 1
    %p133 = por %p131, %p132
    %p134 = scmp.ne.s32.totalorder %s123, %s124
    %p135 = scmp.eq.s32.totalorder %s16, 0
    %p136 = por %p134, %p135
    %p137 = scmp.ne.s32.totalorder %s123, %s124
    %p138 = scmp.eq.s32.totalorder %s17, 1
    %p139 = por %p137, %p138
    %p141 = scmp.ne.s32.totalorder %s124, %s140
    %p142 = scmp.eq.s32.totalorder %s17, 0
    %p143 = por %p141, %p142
    %p144 = scmp.le.s32.totalorder 1, %s11
    %p145 = scmp.lt.s32.totalorder %s11, 3
    %p146 = pnand %p144, %p145
    %p147 = pneg %p146
    // Predicated region
    $region9: #{basic_block_forward.13} parent=5 // pred_check
      _
    $region10: #{basic_block_forward.13} parent=5 // pred_check_branch
      %149 = sbr.rel (%p146) target = $region12
    $region11: #{basic_block_forward.13} parent=5 // pred_region
      %s150 = ssub.s32 %s11, 1
      // Predicated region
      $region13: #{basic_block_forward.13} parent=11 // pred_check
        %p151 = pneg %p58
      $region14: #{basic_block_forward.13} parent=11 // pred_check_branch
        %153 = sbr.rel (%p151) target = $region16
      $region15: #{basic_block_forward.13} parent=11 // pred_region
        _
      $region16: #{basic_block_forward.13} parent=11 // pred_fallthru
        _
    $region12: #{basic_block_forward.13} parent=5 // pred_fallthru
      _
    %p154 = scmp.lt.s32.totalorder %s11, 2
    // Predicated region
    $region17: #{basic_block_forward.13} parent=5 // pred_check
      %p155 = pneg %p154
    $region18: #{basic_block_forward.13} parent=5 // pred_check_branch
      %157 = sbr.rel (%p155) target = $region20
    $region19: #{basic_block_forward.13} parent=5 // pred_region
      // Predicated region
      $region21: #{basic_block_forward.13} parent=19 // pred_check
        %p158 = pneg %p31
      $region22: #{basic_block_forward.13} parent=19 // pred_check_branch
        %160 = sbr.rel (%p158) target = $region24
      $region23: #{basic_block_forward.13} parent=19 // pred_region
        %p161 = scmp.lt.s32.totalorder %s11, 1
        %s162 = scalar_select %p161, %s11, 1
        %s163 = smul.addr %s162, 8
        %s164 = smul.addr %s163, 8
        %s165 = scalar_lea.vmem %s0, %s164
      $region24: #{basic_block_forward.13} parent=19 // pred_fallthru
        _
    $region20: #{basic_block_forward.13} parent=5 // pred_fallthru
      _
    %p166 = scmp.le.s32.totalorder 1, %s11
    %p167 = scmp.lt.s32.totalorder %s11, 3
    %p168 = pnand %p166, %p167
    %p169 = pneg %p168
    // Predicated region
    $region25: #{basic_block_forward.13} parent=5 // pred_check
      _
    $region26: #{basic_block_forward.13} parent=5 // pred_check_branch
      %171 = sbr.rel (%p168) target = $region28
    $region27: #{basic_block_forward.13} parent=5 // pred_region
      %s172 = ssub.s32 %s11, 1
      %p173 = scmp.lt.s32.totalorder %s16, 1
      %s174 = scalar_select %p173, %s16, 1
      %s175 = smul.addr %s174, 8
      %s176 = smul.addr %s175, 8
      %s177 = scalar_lea.vmem %s0, %s176
      %p178 = pneg %p37
      %p179 = pneg %p34
      %p180 = pneg %p58
      %p181 = pneg %p55
      %p182 = pneg %p84
      %p183 = pneg %p81
      %p184 = scmp.lt.s32.totalorder %s16, 1
      %s185 = scalar_select %p184, %s16, 1
      %s186 = smul.addr %s185, 8
      %s187 = smul.addr %s186, 8
      %s188 = scalar_lea.vmem %s2, %s187
      %p189 = pneg %p110
      %p190 = pneg %p107
      %p191 = scmp.lt.s32.totalorder %s16, 1
      %s192 = scalar_select %p191, %s16, 1
      %s193 = scalar_lea.vmem %s3, %s192
      %p194 = pneg %p136
      %p195 = pneg %p133
      %p196 = scmp.lt.s32.totalorder %s16, 1
      %s197 = scalar_select %p196, %s16, 1
      %s198 = scalar_lea.vmem %s4, %s197
      %p199 = scmp.lt.s32.totalorder %s16, 1
      %s200 = scalar_select %p199, %s16, 1
      %s201 = smul.addr %s200, 8
      %s202 = smul.addr %s201, 8
      %s203 = scalar_lea.vmem %s0, %s202
      %p204 = scmp.lt.s32.totalorder %s16, 1
      %s205 = scalar_select %p204, %s16, 1
      %s206 = smul.addr %s205, 8
      %s207 = smul.addr %s206, 8
      %s208 = scalar_lea.vmem %s2, %s207
      %p209 = scmp.lt.s32.totalorder %s16, 1
      %s210 = scalar_select %p209, %s16, 1
      %s211 = scalar_lea.vmem %s3, %s210
      %p212 = scmp.lt.s32.totalorder %s16, 1
      %s213 = scalar_select %p212, %s16, 1
      %s214 = scalar_lea.vmem %s4, %s213
      %v215 = vld [vmem:[%s203] sm:$0xff]
      %v216 = vld [vmem:[%s203 + $0x8] sm:$0xff]
      %v217 = vld [vmem:[%s203 + $0x10] sm:$0xff]
      %v218 = vld [vmem:[%s203 + $0x18] sm:$0xff]
      %v219 = vld [vmem:[%s203 + $0x20] sm:$0xff]
      %v220 = vld [vmem:[%s203 + $0x28] sm:$0xff]
      %v221 = vld [vmem:[%s203 + $0x30] sm:$0xff]
      %v222 = vld [vmem:[%s203 + $0x38] sm:$0xff]
      %v223 = vld [vmem:[%s1] sm:$0xff]
      %v224 = vld [vmem:[%s1 + $0x8] sm:$0xff]
      %v225 = vld [vmem:[%s1 + $0x10] sm:$0xff]
      %v226 = vld [vmem:[%s1 + $0x18] sm:$0xff]
      %v227 = vld [vmem:[%s1 + $0x20] sm:$0xff]
      %v228 = vld [vmem:[%s1 + $0x28] sm:$0xff]
      %v229 = vld [vmem:[%s1 + $0x30] sm:$0xff]
      %v230 = vld [vmem:[%s1 + $0x38] sm:$0xff]
      %v231 = vld [vmem:[%s1 + $0x40] sm:$0xff]
      %v232 = vld [vmem:[%s1 + $0x48] sm:$0xff]
      %v233 = vld [vmem:[%s1 + $0x50] sm:$0xff]
      %v234 = vld [vmem:[%s1 + $0x58] sm:$0xff]
      %v235 = vld [vmem:[%s1 + $0x60] sm:$0xff]
      %v236 = vld [vmem:[%s1 + $0x68] sm:$0xff]
      %v237 = vld [vmem:[%s1 + $0x70] sm:$0xff]
      %v238 = vld [vmem:[%s1 + $0x78] sm:$0xff]
      %239 = vmatpush.msra.mxu0 %v238
      %240 = vmatpush.msra.mxu0 %v237
      %241 = vmatpush.msra.mxu0 %v236
      %242 = vmatpush.msra.mxu0 %v235
      %243 = vmatpush.msra.mxu0 %v234
      %244 = vmatpush.msra.mxu0 %v233
      %245 = vmatpush.msra.mxu0 %v232
      %246 = vmatpush.msra.mxu0 %v231
      %247 = vmatpush.msra.mxu0 %v230
      %248 = vmatpush.msra.mxu0 %v229
      %249 = vmatpush.msra.mxu0 %v228
      %250 = vmatpush.msra.mxu0 %v227
      %251 = vmatpush.msra.mxu0 %v226
      %252 = vmatpush.msra.mxu0 %v225
      %253 = vmatpush.msra.mxu0 %v224
      %254 = vmatpush.msra.mxu0 %v223
      %255 = vmatmul.f32.gmra.mxu0 %v215
      %v256 = vpop.f32.mrf.mxu0
      %v257 = vadd.f32 0.0, %v256
      %258 = vmatmul.f32.gmra.mxu0 %v216
      %v259 = vpop.f32.mrf.mxu0
      %v260 = vadd.f32 0.0, %v259
      %261 = vmatmul.f32.gmra.mxu0 %v217
      %v262 = vpop.f32.mrf.mxu0
      %v263 = vadd.f32 0.0, %v262
      %264 = vmatmul.f32.gmra.mxu0 %v218
      %v265 = vpop.f32.mrf.mxu0
      %v266 = vadd.f32 0.0, %v265
      %267 = vmatmul.f32.gmra.mxu0 %v219
      %v268 = vpop.f32.mrf.mxu0
      %v269 = vadd.f32 0.0, %v268
      %270 = vmatmul.f32.gmra.mxu0 %v220
      %v271 = vpop.f32.mrf.mxu0
      %v272 = vadd.f32 0.0, %v271
      %273 = vmatmul.f32.gmra.mxu0 %v221
      %v274 = vpop.f32.mrf.mxu0
      %v275 = vadd.f32 0.0, %v274
      %276 = vmatmul.f32.gmra.mxu0 %v222
      %v277 = vpop.f32.mrf.mxu0
      %v278 = vadd.f32 0.0, %v277
      %279 = vdwg.mxu0
      %280 = vst [vmem:[%s208] sm:$0xff] %v257
      %281 = vst [vmem:[%s208 + $0x8] sm:$0xff] %v260
      %282 = vst [vmem:[%s208 + $0x10] sm:$0xff] %v263
      %283 = vst [vmem:[%s208 + $0x18] sm:$0xff] %v266
      %284 = vst [vmem:[%s208 + $0x20] sm:$0xff] %v269
      %285 = vst [vmem:[%s208 + $0x28] sm:$0xff] %v272
      %286 = vst [vmem:[%s208 + $0x30] sm:$0xff] %v275
      %287 = vst [vmem:[%s208 + $0x38] sm:$0xff] %v278
      %v288 = vadd.f32 %v257, %v260
      %v289 = vadd.f32 %v288, %v263
      %v290 = vadd.f32 %v289, %v266
      %v291 = vadd.f32 %v290, %v269
      %v292 = vadd.f32 %v291, %v272
      %v293 = vadd.f32 %v292, %v275
      %v294 = vadd.f32 %v293, %v278
      %v295 = vrot.slane %v294, 4
      %v296 = vadd.f32 %v294, %v295
      %v297 = vrot.slane %v296, 2
      %v298 = vadd.f32 %v296, %v297
      %v299 = vrot.slane %v298, 1
      %v300 = vadd.f32 %v298, %v299
      %301 = vst [vmem:[%s211] sm:$0x1] %v300
      %v302 = vmul.f32 %v257, %v257
      %v303 = vmul.f32 %v260, %v260
      %v304 = vmul.f32 %v263, %v263
      %v305 = vmul.f32 %v266, %v266
      %v306 = vmul.f32 %v269, %v269
      %v307 = vmul.f32 %v272, %v272
      %v308 = vmul.f32 %v275, %v275
      %v309 = vmul.f32 %v278, %v278
      %v310 = vadd.f32 %v302, %v303
      %v311 = vadd.f32 %v310, %v304
      %v312 = vadd.f32 %v311, %v305
      %v313 = vadd.f32 %v312, %v306
      %v314 = vadd.f32 %v313, %v307
      %v315 = vadd.f32 %v314, %v308
      %v316 = vadd.f32 %v315, %v309
      %v317 = vrot.slane %v316, 4
      %v318 = vadd.f32 %v316, %v317
      %v319 = vrot.slane %v318, 2
      %v320 = vadd.f32 %v318, %v319
      %v321 = vrot.slane %v320, 1
      %v322 = vadd.f32 %v320, %v321
      %323 = vst [vmem:[%s214] sm:$0x1] %v322
      %p324 = scmp.lt.s32.totalorder %s16, 1
      %s325 = scalar_select %p324, %s16, 1
      %s326 = smul.addr %s325, 8
      %s327 = smul.addr %s326, 8
      %s328 = scalar_lea.vmem %s2, %s327
      %p329 = scmp.lt.s32.totalorder %s16, 1
      %s330 = scalar_select %p329, %s16, 1
      %s331 = scalar_lea.vmem %s3, %s330
      %p332 = scmp.lt.s32.totalorder %s16, 1
      %s333 = scalar_select %p332, %s16, 1
      %s334 = scalar_lea.vmem %s4, %s333
      // Predicated region
      $region29: #{basic_block_forward.13} parent=27 // pred_check
        %p335 = pneg %p81
      $region30: #{basic_block_forward.13} parent=27 // pred_check_branch
        %337 = sbr.rel (%p335) target = $region32
      $region31: #{basic_block_forward.13} parent=27 // pred_region
        _
      $region32: #{basic_block_forward.13} parent=27 // pred_fallthru
        _
      // Predicated region
      $region33: #{basic_block_forward.13} parent=27 // pred_check
        %p338 = pneg %p107
      $region34: #{basic_block_forward.13} parent=27 // pred_check_branch
        %340 = sbr.rel (%p338) target = $region36
      $region35: #{basic_block_forward.13} parent=27 // pred_region
        _
      $region36: #{basic_block_forward.13} parent=27 // pred_fallthru
        _
      // Predicated region
      $region37: #{basic_block_forward.13} parent=27 // pred_check
        %p341 = pneg %p133
      $region38: #{basic_block_forward.13} parent=27 // pred_check_branch
        %343 = sbr.rel (%p341) target = $region40
      $region39: #{basic_block_forward.13} parent=27 // pred_region
        _
      $region40: #{basic_block_forward.13} parent=27 // pred_fallthru
        _
    $region28: #{basic_block_forward.13} parent=5 // pred_fallthru
      _
    %p344 = scmp.le.s32.totalorder 2, %s11
    // Predicated region
    $region41: #{basic_block_forward.13} parent=5 // pred_check
      %p345 = pneg %p344
    $region42: #{basic_block_forward.13} parent=5 // pred_check_branch
      %347 = sbr.rel (%p345) target = $region44
    $region43: #{basic_block_forward.13} parent=5 // pred_region
      %s348 = ssub.s32 %s11, 2
      // Predicated region
      $region45: #{basic_block_forward.13} parent=43 // pred_check
        %p349 = pneg %p87
      $region46: #{basic_block_forward.13} parent=43 // pred_check_branch
        %351 = sbr.rel (%p349) target = $region48
      $region47: #{basic_block_forward.13} parent=43 // pred_region
        %p352 = scmp.lt.s32.totalorder %s17, 1
        %s353 = scalar_select %p352, %s17, 1
        %s354 = smul.addr %s353, 8
        %s355 = smul.addr %s354, 8
        %s356 = scalar_lea.vmem %s2, %s355
      $region48: #{basic_block_forward.13} parent=43 // pred_fallthru
        _
      // Predicated region
      $region49: #{basic_block_forward.13} parent=43 // pred_check
        %p357 = pneg %p113
      $region50: #{basic_block_forward.13} parent=43 // pred_check_branch
        %359 = sbr.rel (%p357) target = $region52
      $region51: #{basic_block_forward.13} parent=43 // pred_region
        %p360 = scmp.lt.s32.totalorder %s17, 1
        %s361 = scalar_select %p360, %s17, 1
        %s362 = scalar_lea.vmem %s3, %s361
      $region52: #{basic_block_forward.13} parent=43 // pred_fallthru
        _
      // Predicated region
      $region53: #{basic_block_forward.13} parent=43 // pred_check
        %p363 = pneg %p139
      $region54: #{basic_block_forward.13} parent=43 // pred_check_branch
        %365 = sbr.rel (%p363) target = $region56
      $region55: #{basic_block_forward.13} parent=43 // pred_region
        %p366 = scmp.lt.s32.totalorder %s17, 1
        %s367 = scalar_select %p366, %s17, 1
        %s368 = scalar_lea.vmem %s4, %s367
      $region56: #{basic_block_forward.13} parent=43 // pred_fallthru
        _
    $region44: #{basic_block_forward.13} parent=5 // pred_fallthru
      _
  $region6: #{basic_block_forward.13} parent=0 // loop_footer
    %s15 = sadd.s32 1, %s11
  $region7: #{basic_block_forward.13} parent=0 // loop_footer_branch
    %10 = sbr.rel target = $region3
  $region8: #{basic_block_forward.13} parent=0 // loop_exit
    _

// kernel: basic_block_forward.10
$region0: #{basic_block_forward.10}
  #allocation0 [shape = 'u32[]', space=smem, size = 0x4, offset = 0x4, fixed_abs, tag = 'smem constant byte address 0x4 - core index']
  #allocation1 [shape = 'u32[72,128]{1,0:T(1,128)}', space=vmem, size = 0x9000, scoped, tag = 'internal scratch']
  %s0 = inlined_call_operand.vmem [shape: f32[128,128], index: 0, kind: input, shape index: {}]
  %s1 = inlined_call_operand.vmem [shape: f32[1,128], index: 1, kind: input, shape index: {}]
  %s2 = inlined_call_operand.vmem [shape: f32[1,128], index: 2, kind: input, shape index: {}]
  %s3 = inlined_call_operand.vmem [shape: f32[128,128], index: 3, kind: output, shape index: {}]
  %s4 = sld [smem:[#allocation0]]
  $region22: #{basic_block_forward.10} parent=0
    _
  %s6 = ssub.s32 1, %s4
  %s7 = scalar_select 0, %s6, %s4
  // Predicated region
  $region2: #{basic_block_forward.10} parent=0 // pred_check
    _
  $region3: #{basic_block_forward.10} parent=0 // pred_check_branch
    %9 = sbr.rel (0) target = $region5
  $region4: #{basic_block_forward.10} parent=0 // pred_region
    _
  $region5: #{basic_block_forward.10} parent=0 // pred_fallthru
    _
  // Predicated region
  $region6: #{basic_block_forward.10} parent=0 // pred_check
    _
  $region7: #{basic_block_forward.10} parent=0 // pred_check_branch
    %11 = sbr.rel (0) target = $region9
  $region8: #{basic_block_forward.10} parent=0 // pred_region
    _
  $region9: #{basic_block_forward.10} parent=0 // pred_fallthru
    _
  // Predicated region
  $region10: #{basic_block_forward.10} parent=0 // pred_check
    _
  $region11: #{basic_block_forward.10} parent=0 // pred_check_branch
    %13 = sbr.rel (0) target = $region13
  $region12: #{basic_block_forward.10} parent=0 // pred_region
    _
  $region13: #{basic_block_forward.10} parent=0 // pred_fallthru
    _
  %v14 = vld [vmem:[%s0] sm:$0xff]
  %v15 = vld [vmem:[%s0 + $0x8] sm:$0xff]
  %v16 = vld [vmem:[%s0 + $0x10] sm:$0xff]
  %v17 = vld [vmem:[%s0 + $0x18] sm:$0xff]
  %v18 = vld [vmem:[%s0 + $0x20] sm:$0xff]
  %v19 = vld [vmem:[%s0 + $0x28] sm:$0xff]
  %v20 = vld [vmem:[%s0 + $0x30] sm:$0xff]
  %v21 = vld [vmem:[%s0 + $0x38] sm:$0xff]
  %v22 = vld [vmem:[%s0 + $0x40] sm:$0xff]
  %v23 = vld [vmem:[%s0 + $0x48] sm:$0xff]
  %v24 = vld [vmem:[%s0 + $0x50] sm:$0xff]
  %v25 = vld [vmem:[%s0 + $0x58] sm:$0xff]
  %v26 = vld [vmem:[%s0 + $0x60] sm:$0xff]
  %v27 = vld [vmem:[%s0 + $0x68] sm:$0xff]
  %v28 = vld [vmem:[%s0 + $0x70] sm:$0xff]
  %v29 = vld [vmem:[%s0 + $0x78] sm:$0xff]
  %v30 = vld [vmem:[%s1] sm:$0x1]
  %v32 = vperm.slane %v30, 0
  %v34 = vmul.f32 %v14, %v32
  %v35 = vmul.f32 %v15, %v32
  %v36 = vmul.f32 %v16, %v32
  %v37 = vmul.f32 %v17, %v32
  %v38 = vmul.f32 %v18, %v32
  %v39 = vmul.f32 %v19, %v32
  %v40 = vmul.f32 %v20, %v32
  %v41 = vmul.f32 %v21, %v32
  %v42 = vmul.f32 %v22, %v32
  %v43 = vmul.f32 %v23, %v32
  %v44 = vmul.f32 %v24, %v32
  %v45 = vmul.f32 %v25, %v32
  %v46 = vmul.f32 %v26, %v32
  %v47 = vmul.f32 %v27, %v32
  %v48 = vmul.f32 %v28, %v32
  %v49 = vmul.f32 %v29, %v32
  %v50 = vld [vmem:[%s2] sm:$0x1]
  %v52 = vperm.slane %v50, 0
  %v54 = vadd.f32 %v34, %v52
  %v55 = vadd.f32 %v35, %v52
  %v56 = vadd.f32 %v36, %v52
  %v57 = vadd.f32 %v37, %v52
  %v58 = vadd.f32 %v38, %v52
  %v59 = vadd.f32 %v39, %v52
  %v60 = vadd.f32 %v40, %v52
  %v61 = vadd.f32 %v41, %v52
  %v62 = vadd.f32 %v42, %v52
  %v63 = vadd.f32 %v43, %v52
  %v64 = vadd.f32 %v44, %v52
  %v65 = vadd.f32 %v45, %v52
  %v66 = vadd.f32 %v46, %v52
  %v67 = vadd.f32 %v47, %v52
  %v68 = vadd.f32 %v48, %v52
  %v69 = vadd.f32 %v49, %v52
  %v70 = vmax.f32 %v54, 0.0
  %v71 = vmax.f32 %v55, 0.0
  %v72 = vmax.f32 %v56, 0.0
  %v73 = vmax.f32 %v57, 0.0
  %v74 = vmax.f32 %v58, 0.0
  %v75 = vmax.f32 %v59, 0.0
  %v76 = vmax.f32 %v60, 0.0
  %v77 = vmax.f32 %v61, 0.0
  %v78 = vmax.f32 %v62, 0.0
  %v79 = vmax.f32 %v63, 0.0
  %v80 = vmax.f32 %v64, 0.0
  %v81 = vmax.f32 %v65, 0.0
  %v82 = vmax.f32 %v66, 0.0
  %v83 = vmax.f32 %v67, 0.0
  %v84 = vmax.f32 %v68, 0.0
  %v85 = vmax.f32 %v69, 0.0
  %86 = vst [vmem:[%s3] sm:$0xff] %v70
  %87 = vst [vmem:[%s3 + $0x8] sm:$0xff] %v71
  %88 = vst [vmem:[%s3 + $0x10] sm:$0xff] %v72
  %89 = vst [vmem:[%s3 + $0x18] sm:$0xff] %v73
  %90 = vst [vmem:[%s3 + $0x20] sm:$0xff] %v74
  %91 = vst [vmem:[%s3 + $0x28] sm:$0xff] %v75
  %92 = vst [vmem:[%s3 + $0x30] sm:$0xff] %v76
  %93 = vst [vmem:[%s3 + $0x38] sm:$0xff] %v77
  %94 = vst [vmem:[%s3 + $0x40] sm:$0xff] %v78
  %95 = vst [vmem:[%s3 + $0x48] sm:$0xff] %v79
  %96 = vst [vmem:[%s3 + $0x50] sm:$0xff] %v80
  %97 = vst [vmem:[%s3 + $0x58] sm:$0xff] %v81
  %98 = vst [vmem:[%s3 + $0x60] sm:$0xff] %v82
  %99 = vst [vmem:[%s3 + $0x68] sm:$0xff] %v83
  %100 = vst [vmem:[%s3 + $0x70] sm:$0xff] %v84
  %101 = vst [vmem:[%s3 + $0x78] sm:$0xff] %v85
  // Predicated region
  $region14: #{basic_block_forward.10} parent=0 // pred_check
    _
  $region15: #{basic_block_forward.10} parent=0 // pred_check_branch
    %103 = sbr.rel (0) target = $region17
  $region16: #{basic_block_forward.10} parent=0 // pred_region
    _
  $region17: #{basic_block_forward.10} parent=0 // pred_fallthru
    _
  // Predicated region
  $region18: #{basic_block_forward.10} parent=0 // pred_check
    _
  $region19: #{basic_block_forward.10} parent=0 // pred_check_branch
    %105 = sbr.rel (0) target = $region21
  $region20: #{basic_block_forward.10} parent=0 // pred_region
    _
  $region21: #{basic_block_forward.10} parent=0 // pred_fallthru
    _

// kernel: basic_block_forward.15
$region0: #{basic_block_forward.15}
  #allocation0 [shape = 'u32[]', space=smem, size = 0x4, offset = 0x4, fixed_abs, tag = 'smem constant byte address 0x4 - core index']
  #allocation1 [shape = 'u32[72,128]{1,0:T(1,128)}', space=vmem, size = 0x9000, scoped, tag = 'internal scratch']
  %s0 = inlined_call_operand.vmem [shape: f32[128,128], index: 0, kind: input, shape index: {}]
  %s1 = inlined_call_operand.vmem [shape: f32[128,128], index: 1, kind: input, shape index: {}]
  %s2 = inlined_call_operand.vmem [shape: f32[1,128], index: 2, kind: input, shape index: {}]
  %s3 = inlined_call_operand.vmem [shape: f32[1,128], index: 3, kind: input, shape index: {}]
  %s4 = inlined_call_operand.vmem [shape: f32[1,128], index: 4, kind: input, shape index: {}]
  %s5 = inlined_call_operand.vmem [shape: f32[1,128], index: 5, kind: input, shape index: {}]
  %s6 = inlined_call_operand.vmem [shape: f32[128,128], index: 6, kind: output, shape index: {}]
  %s7 = sld [smem:[#allocation0]]
  $region34: #{basic_block_forward.15} parent=0
    _
  %s9 = ssub.s32 1, %s7
  %s10 = scalar_select 0, %s9, %s7
  // Predicated region
  $region2: #{basic_block_forward.15} parent=0 // pred_check
    _
  $region3: #{basic_block_forward.15} parent=0 // pred_check_branch
    %12 = sbr.rel (0) target = $region5
  $region4: #{basic_block_forward.15} parent=0 // pred_region
    _
  $region5: #{basic_block_forward.15} parent=0 // pred_fallthru
    _
  // Predicated region
  $region6: #{basic_block_forward.15} parent=0 // pred_check
    _
  $region7: #{basic_block_forward.15} parent=0 // pred_check_branch
    %14 = sbr.rel (0) target = $region9
  $region8: #{basic_block_forward.15} parent=0 // pred_region
    _
  $region9: #{basic_block_forward.15} parent=0 // pred_fallthru
    _
  // Predicated region
  $region10: #{basic_block_forward.15} parent=0 // pred_check
    _
  $region11: #{basic_block_forward.15} parent=0 // pred_check_branch
    %16 = sbr.rel (0) target = $region13
  $region12: #{basic_block_forward.15} parent=0 // pred_region
    _
  $region13: #{basic_block_forward.15} parent=0 // pred_fallthru
    _
  // Predicated region
  $region14: #{basic_block_forward.15} parent=0 // pred_check
    _
  $region15: #{basic_block_forward.15} parent=0 // pred_check_branch
    %18 = sbr.rel (0) target = $region17
  $region16: #{basic_block_forward.15} parent=0 // pred_region
    _
  $region17: #{basic_block_forward.15} parent=0 // pred_fallthru
    _
  // Predicated region
  $region18: #{basic_block_forward.15} parent=0 // pred_check
    _
  $region19: #{basic_block_forward.15} parent=0 // pred_check_branch
    %20 = sbr.rel (0) target = $region21
  $region20: #{basic_block_forward.15} parent=0 // pred_region
    _
  $region21: #{basic_block_forward.15} parent=0 // pred_fallthru
    _
  // Predicated region
  $region22: #{basic_block_forward.15} parent=0 // pred_check
    _
  $region23: #{basic_block_forward.15} parent=0 // pred_check_branch
    %22 = sbr.rel (0) target = $region25
  $region24: #{basic_block_forward.15} parent=0 // pred_region
    _
  $region25: #{basic_block_forward.15} parent=0 // pred_fallthru
    _
  %v23 = vld [vmem:[%s1] sm:$0xff]
  %v24 = vld [vmem:[%s1 + $0x8] sm:$0xff]
  %v25 = vld [vmem:[%s1 + $0x10] sm:$0xff]
  %v26 = vld [vmem:[%s1 + $0x18] sm:$0xff]
  %v27 = vld [vmem:[%s1 + $0x20] sm:$0xff]
  %v28 = vld [vmem:[%s1 + $0x28] sm:$0xff]
  %v29 = vld [vmem:[%s1 + $0x30] sm:$0xff]
  %v30 = vld [vmem:[%s1 + $0x38] sm:$0xff]
  %v31 = vld [vmem:[%s1 + $0x40] sm:$0xff]
  %v32 = vld [vmem:[%s1 + $0x48] sm:$0xff]
  %v33 = vld [vmem:[%s1 + $0x50] sm:$0xff]
  %v34 = vld [vmem:[%s1 + $0x58] sm:$0xff]
  %v35 = vld [vmem:[%s1 + $0x60] sm:$0xff]
  %v36 = vld [vmem:[%s1 + $0x68] sm:$0xff]
  %v37 = vld [vmem:[%s1 + $0x70] sm:$0xff]
  %v38 = vld [vmem:[%s1 + $0x78] sm:$0xff]
  %v39 = vld [vmem:[%s4] sm:$0x1]
  %v41 = vperm.slane %v39, 0
  %v43 = vmul.f32 %v23, %v41
  %v44 = vmul.f32 %v24, %v41
  %v45 = vmul.f32 %v25, %v41
  %v46 = vmul.f32 %v26, %v41
  %v47 = vmul.f32 %v27, %v41
  %v48 = vmul.f32 %v28, %v41
  %v49 = vmul.f32 %v29, %v41
  %v50 = vmul.f32 %v30, %v41
  %v51 = vmul.f32 %v31, %v41
  %v52 = vmul.f32 %v32, %v41
  %v53 = vmul.f32 %v33, %v41
  %v54 = vmul.f32 %v34, %v41
  %v55 = vmul.f32 %v35, %v41
  %v56 = vmul.f32 %v36, %v41
  %v57 = vmul.f32 %v37, %v41
  %v58 = vmul.f32 %v38, %v41
  %v59 = vld [vmem:[%s5] sm:$0x1]
  %v61 = vperm.slane %v59, 0
  %v63 = vadd.f32 %v43, %v61
  %v64 = vadd.f32 %v44, %v61
  %v65 = vadd.f32 %v45, %v61
  %v66 = vadd.f32 %v46, %v61
  %v67 = vadd.f32 %v47, %v61
  %v68 = vadd.f32 %v48, %v61
  %v69 = vadd.f32 %v49, %v61
  %v70 = vadd.f32 %v50, %v61
  %v71 = vadd.f32 %v51, %v61
  %v72 = vadd.f32 %v52, %v61
  %v73 = vadd.f32 %v53, %v61
  %v74 = vadd.f32 %v54, %v61
  %v75 = vadd.f32 %v55, %v61
  %v76 = vadd.f32 %v56, %v61
  %v77 = vadd.f32 %v57, %v61
  %v78 = vadd.f32 %v58, %v61
  %v79 = vld [vmem:[%s0] sm:$0xff]
  %v80 = vld [vmem:[%s0 + $0x8] sm:$0xff]
  %v81 = vld [vmem:[%s0 + $0x10] sm:$0xff]
  %v82 = vld [vmem:[%s0 + $0x18] sm:$0xff]
  %v83 = vld [vmem:[%s0 + $0x20] sm:$0xff]
  %v84 = vld [vmem:[%s0 + $0x28] sm:$0xff]
  %v85 = vld [vmem:[%s0 + $0x30] sm:$0xff]
  %v86 = vld [vmem:[%s0 + $0x38] sm:$0xff]
  %v87 = vld [vmem:[%s0 + $0x40] sm:$0xff]
  %v88 = vld [vmem:[%s0 + $0x48] sm:$0xff]
  %v89 = vld [vmem:[%s0 + $0x50] sm:$0xff]
  %v90 = vld [vmem:[%s0 + $0x58] sm:$0xff]
  %v91 = vld [vmem:[%s0 + $0x60] sm:$0xff]
  %v92 = vld [vmem:[%s0 + $0x68] sm:$0xff]
  %v93 = vld [vmem:[%s0 + $0x70] sm:$0xff]
  %v94 = vld [vmem:[%s0 + $0x78] sm:$0xff]
  %v95 = vld [vmem:[%s2] sm:$0x1]
  %v97 = vperm.slane %v95, 0
  %v99 = vmul.f32 %v79, %v97
  %v100 = vmul.f32 %v80, %v97
  %v101 = vmul.f32 %v81, %v97
  %v102 = vmul.f32 %v82, %v97
  %v103 = vmul.f32 %v83, %v97
  %v104 = vmul.f32 %v84, %v97
  %v105 = vmul.f32 %v85, %v97
  %v106 = vmul.f32 %v86, %v97
  %v107 = vmul.f32 %v87, %v97
  %v108 = vmul.f32 %v88, %v97
  %v109 = vmul.f32 %v89, %v97
  %v110 = vmul.f32 %v90, %v97
  %v111 = vmul.f32 %v91, %v97
  %v112 = vmul.f32 %v92, %v97
  %v113 = vmul.f32 %v93, %v97
  %v114 = vmul.f32 %v94, %v97
  %v115 = vld [vmem:[%s3] sm:$0x1]
  %v117 = vperm.slane %v115, 0
  %v119 = vadd.f32 %v99, %v117
  %v120 = vadd.f32 %v100, %v117
  %v121 = vadd.f32 %v101, %v117
  %v122 = vadd.f32 %v102, %v117
  %v123 = vadd.f32 %v103, %v117
  %v124 = vadd.f32 %v104, %v117
  %v125 = vadd.f32 %v105, %v117
  %v126 = vadd.f32 %v106, %v117
  %v127 = vadd.f32 %v107, %v117
  %v128 = vadd.f32 %v108, %v117
  %v129 = vadd.f32 %v109, %v117
  %v130 = vadd.f32 %v110, %v117
  %v131 = vadd.f32 %v111, %v117
  %v132 = vadd.f32 %v112, %v117
  %v133 = vadd.f32 %v113, %v117
  %v134 = vadd.f32 %v114, %v117
  %v135 = vadd.f32 %v119, %v63
  %v136 = vadd.f32 %v120, %v64
  %v137 = vadd.f32 %v121, %v65
  %v138 = vadd.f32 %v122, %v66
  %v139 = vadd.f32 %v123, %v67
  %v140 = vadd.f32 %v124, %v68
  %v141 = vadd.f32 %v125, %v69
  %v142 = vadd.f32 %v126, %v70
  %v143 = vadd.f32 %v127, %v71
  %v144 = vadd.f32 %v128, %v72
  %v145 = vadd.f32 %v129, %v73
  %v146 = vadd.f32 %v130, %v74
  %v147 = vadd.f32 %v131, %v75
  %v148 = vadd.f32 %v132, %v76
  %v149 = vadd.f32 %v133, %v77
  %v150 = vadd.f32 %v134, %v78
  %v151 = vmax.f32 %v135, 0.0
  %v152 = vmax.f32 %v136, 0.0
  %v153 = vmax.f32 %v137, 0.0
  %v154 = vmax.f32 %v138, 0.0
  %v155 = vmax.f32 %v139, 0.0
  %v156 = vmax.f32 %v140, 0.0
  %v157 = vmax.f32 %v141, 0.0
  %v158 = vmax.f32 %v142, 0.0
  %v159 = vmax.f32 %v143, 0.0
  %v160 = vmax.f32 %v144, 0.0
  %v161 = vmax.f32 %v145, 0.0
  %v162 = vmax.f32 %v146, 0.0
  %v163 = vmax.f32 %v147, 0.0
  %v164 = vmax.f32 %v148, 0.0
  %v165 = vmax.f32 %v149, 0.0
  %v166 = vmax.f32 %v150, 0.0
  %167 = vst [vmem:[%s6] sm:$0xff] %v151
  %168 = vst [vmem:[%s6 + $0x8] sm:$0xff] %v152
  %169 = vst [vmem:[%s6 + $0x10] sm:$0xff] %v153
  %170 = vst [vmem:[%s6 + $0x18] sm:$0xff] %v154
  %171 = vst [vmem:[%s6 + $0x20] sm:$0xff] %v155
  %172 = vst [vmem:[%s6 + $0x28] sm:$0xff] %v156
  %173 = vst [vmem:[%s6 + $0x30] sm:$0xff] %v157
  %174 = vst [vmem:[%s6 + $0x38] sm:$0xff] %v158
  %175 = vst [vmem:[%s6 + $0x40] sm:$0xff] %v159
  %176 = vst [vmem:[%s6 + $0x48] sm:$0xff] %v160
  %177 = vst [vmem:[%s6 + $0x50] sm:$0xff] %v161
  %178 = vst [vmem:[%s6 + $0x58] sm:$0xff] %v162
  %179 = vst [vmem:[%s6 + $0x60] sm:$0xff] %v163
  %180 = vst [vmem:[%s6 + $0x68] sm:$0xff] %v164
  %181 = vst [vmem:[%s6 + $0x70] sm:$0xff] %v165
  %182 = vst [vmem:[%s6 + $0x78] sm:$0xff] %v166
  // Predicated region
  $region26: #{basic_block_forward.15} parent=0 // pred_check
    _
  $region27: #{basic_block_forward.15} parent=0 // pred_check_branch
    %184 = sbr.rel (0) target = $region29
  $region28: #{basic_block_forward.15} parent=0 // pred_region
    _
  $region29: #{basic_block_forward.15} parent=0 // pred_fallthru
    _
  // Predicated region
  $region30: #{basic_block_forward.15} parent=0 // pred_check
    _
  $region31: #{basic_block_forward.15} parent=0 // pred_check_branch
    %186 = sbr.rel (0) target = $region33
  $region32: #{basic_block_forward.15} parent=0 // pred_region
    _
  $region33: #{basic_block_forward.15} parent=0 // pred_fallthru
    _

// kernel: basic_block_forward.8
$region0: #{basic_block_forward.8}
  #allocation0 [shape = 'u32[]', space=smem, size = 0x4, offset = 0x4, fixed_abs, tag = 'smem constant byte address 0x4 - core index']
  #allocation1 [shape = 'u32[72,128]{1,0:T(1,128)}', space=vmem, size = 0x9000, scoped, tag = 'internal scratch']
  %s0 = inlined_call_operand.vmem [shape: f32[8,9,9,128], index: 0, kind: input, shape index: {}]
  %s1 = inlined_call_operand.vmem [shape: f32[9,128,128], index: 1, kind: input, shape index: {}]
  %s2 = inlined_call_operand.vmem [shape: f32[2,64,128], index: 2, kind: output, shape index: {0}]
  %s3 = inlined_call_operand.vmem [shape: f32[2,1,128], index: 3, kind: output, shape index: {1}]
  %s4 = inlined_call_operand.vmem [shape: f32[2,1,128], index: 4, kind: output, shape index: {2}]
  %5 = xla_tuple %s2, %s3, %s4
  %s6 = sld [smem:[#allocation0]]
  $region57: #{basic_block_forward.8} parent=0
    _
  %s8 = ssub.s32 1, %s6
  %s9 = scalar_select 0, %s8, %s6
  loop: start=0, step=1, limit=4
  $region2: #{basic_block_forward.8} parent=0 // loop_pre_header
    _
  $region3: #{basic_block_forward.8} parent=0 // loop_header
    %s11 = sphi 0, %s15
    %p12 = scmp.ge.s32.totalorder %s11, 4
    %s21 = sphi 0, %s23
    %s24 = sphi 0, %s21
    %s25 = sphi 0, %s24
    %s41 = sphi 0, %s25
    %s45 = sphi 0, %s45
    %s47 = sphi 0, %s45
    %s48 = sphi 0, %s47
    %s62 = sphi 0, %s48
    %s68 = sphi 0, %s70
    %s71 = sphi 0, %s68
    %s72 = sphi 0, %s71
    %s88 = sphi 0, %s72
    %s94 = sphi 0, %s96
    %s97 = sphi 0, %s94
    %s98 = sphi 0, %s97
    %s114 = sphi 0, %s98
    %s120 = sphi 0, %s122
    %s123 = sphi 0, %s120
    %s124 = sphi 0, %s123
    %s140 = sphi 0, %s124
  $region4: #{basic_block_forward.8} parent=0 // loop_header_branch
    %14 = sbr.rel (%p12) target = $region8
  $region5: #{basic_block_forward.8} parent=0 // loop_body
    %s16 = ssub.s32 %s11, 1
    %s17 = ssub.s32 %s11, 2
    %s18 = sadd.s32 %s11, 1
    %s19 = ssub.s32 %s11, %s18
    %p20 = scmp.eq.s32.totalorder %s19, 0
    %s22 = sadd.s32 %s21, 1
    %s23 = scalar_select %p20, %s21, %s22
    %p26 = pneg %p20
    %p27 = scmp.eq.s32.totalorder %s11, 1
    %p28 = por %p26, %p27
    %p29 = scmp.ne.s32.totalorder %s21, %s24
    %p30 = scmp.eq.s32.totalorder %s11, 0
    %p31 = por %p29, %p30
    %p32 = scmp.ne.s32.totalorder %s21, %s24
    %p33 = scmp.eq.s32.totalorder %s16, 1
    %p34 = por %p32, %p33
    %p35 = scmp.ne.s32.totalorder %s24, %s25
    %p36 = scmp.eq.s32.totalorder %s16, 0
    %p37 = por %p35, %p36
    %p38 = scmp.ne.s32.totalorder %s24, %s25
    %p39 = scmp.eq.s32.totalorder %s17, 1
    %p40 = por %p38, %p39
    %p42 = scmp.ne.s32.totalorder %s25, %s41
    %p43 = scmp.eq.s32.totalorder %s17, 0
    %p44 = por %p42, %p43
    %s46 = sadd.s32 %s45, 1
    %p49 = scmp.eq.s32.totalorder %s11, 1
    %p50 = scmp.ne.s32.totalorder %s45, %s47
    %p51 = scmp.eq.s32.totalorder %s11, 0
    %p52 = por %p50, %p51
    %p53 = scmp.ne.s32.totalorder %s45, %s47
    %p54 = scmp.eq.s32.totalorder %s16, 1
    %p55 = por %p53, %p54
    %p56 = scmp.ne.s32.totalorder %s47, %s48
    %p57 = scmp.eq.s32.totalorder %s16, 0
    %p58 = por %p56, %p57
    %p59 = scmp.ne.s32.totalorder %s47, %s48
    %p60 = scmp.eq.s32.totalorder %s17, 1
    %p61 = por %p59, %p60
    %p63 = scmp.ne.s32.totalorder %s48, %s62
    %p64 = scmp.eq.s32.totalorder %s17, 0
    %p65 = por %p63, %p64
    %s66 = ssub.s32 %s11, %s18
    %p67 = scmp.eq.s32.totalorder %s66, 0
    %s69 = sadd.s32 %s68, 1
    %s70 = scalar_select %p67, %s68, %s69
    %p73 = pneg %p67
    %p74 = scmp.eq.s32.totalorder %s11, 1
    %p75 = por %p73, %p74
    %p76 = scmp.ne.s32.totalorder %s68, %s71
    %p77 = scmp.eq.s32.totalorder %s11, 0
    %p78 = por %p76, %p77
    %p79 = scmp.ne.s32.totalorder %s68, %s71
    %p80 = scmp.eq.s32.totalorder %s16, 1
    %p81 = por %p79, %p80
    %p82 = scmp.ne.s32.totalorder %s71, %s72
    %p83 = scmp.eq.s32.totalorder %s16, 0
    %p84 = por %p82, %p83
    %p85 = scmp.ne.s32.totalorder %s71, %s72
    %p86 = scmp.eq.s32.totalorder %s17, 1
    %p87 = por %p85, %p86
    %p89 = scmp.ne.s32.totalorder %s72, %s88
    %p90 = scmp.eq.s32.totalorder %s17, 0
    %p91 = por %p89, %p90
    %s92 = ssub.s32 %s11, %s18
    %p93 = scmp.eq.s32.totalorder %s92, 0
    %s95 = sadd.s32 %s94, 1
    %s96 = scalar_select %p93, %s94, %s95
    %p99 = pneg %p93
    %p100 = scmp.eq.s32.totalorder %s11, 1
    %p101 = por %p99, %p100
    %p102 = scmp.ne.s32.totalorder %s94, %s97
    %p103 = scmp.eq.s32.totalorder %s11, 0
    %p104 = por %p102, %p103
    %p105 = scmp.ne.s32.totalorder %s94, %s97
    %p106 = scmp.eq.s32.totalorder %s16, 1
    %p107 = por %p105, %p106
    %p108 = scmp.ne.s32.totalorder %s97, %s98
    %p109 = scmp.eq.s32.totalorder %s16, 0
    %p110 = por %p108, %p109
    %p111 = scmp.ne.s32.totalorder %s97, %s98
    %p112 = scmp.eq.s32.totalorder %s17, 1
    %p113 = por %p111, %p112
    %p115 = scmp.ne.s32.totalorder %s98, %s114
    %p116 = scmp.eq.s32.totalorder %s17, 0
    %p117 = por %p115, %p116
    %s118 = ssub.s32 %s11, %s18
    %p119 = scmp.eq.s32.totalorder %s118, 0
    %s121 = sadd.s32 %s120, 1
    %s122 = scalar_select %p119, %s120, %s121
    %p125 = pneg %p119
    %p126 = scmp.eq.s32.totalorder %s11, 1
    %p127 = por %p125, %p126
    %p128 = scmp.ne.s32.totalorder %s120, %s123
    %p129 = scmp.eq.s32.totalorder %s11, 0
    %p130 = por %p128, %p129
    %p131 = scmp.ne.s32.totalorder %s120, %s123
    %p132 = scmp.eq.s32.totalorder %s16, 1
    %p133 = por %p131, %p132
    %p134 = scmp.ne.s32.totalorder %s123, %s124
    %p135 = scmp.eq.s32.totalorder %s16, 0
    %p136 = por %p134, %p135
    %p137 = scmp.ne.s32.totalorder %s123, %s124
    %p138 = scmp.eq.s32.totalorder %s17, 1
    %p139 = por %p137, %p138
    %p141 = scmp.ne.s32.totalorder %s124, %s140
    %p142 = scmp.eq.s32.totalorder %s17, 0
    %p143 = por %p141, %p142
    %p144 = scmp.le.s32.totalorder 1, %s11
    %p145 = scmp.lt.s32.totalorder %s11, 3
    %p146 = pnand %p144, %p145
    %p147 = pneg %p146
    // Predicated region
    $region9: #{basic_block_forward.8} parent=5 // pred_check
      _
    $region10: #{basic_block_forward.8} parent=5 // pred_check_branch
      %149 = sbr.rel (%p146) target = $region12
    $region11: #{basic_block_forward.8} parent=5 // pred_region
      %s150 = ssub.s32 %s11, 1
      // Predicated region
      $region13: #{basic_block_forward.8} parent=11 // pred_check
        %p151 = pneg %p58
      $region14: #{basic_block_forward.8} parent=11 // pred_check_branch
        %153 = sbr.rel (%p151) target = $region16
      $region15: #{basic_block_forward.8} parent=11 // pred_region
        _
      $region16: #{basic_block_forward.8} parent=11 // pred_fallthru
        _
    $region12: #{basic_block_forward.8} parent=5 // pred_fallthru
      _
    %p154 = scmp.lt.s32.totalorder %s11, 2
    // Predicated region
    $region17: #{basic_block_forward.8} parent=5 // pred_check
      %p155 = pneg %p154
    $region18: #{basic_block_forward.8} parent=5 // pred_check_branch
      %157 = sbr.rel (%p155) target = $region20
    $region19: #{basic_block_forward.8} parent=5 // pred_region
      // Predicated region
      $region21: #{basic_block_forward.8} parent=19 // pred_check
        %p158 = pneg %p31
      $region22: #{basic_block_forward.8} parent=19 // pred_check_branch
        %160 = sbr.rel (%p158) target = $region24
      $region23: #{basic_block_forward.8} parent=19 // pred_region
        %s161 = smul.u32 4, %s11
        %p162 = scmp.lt.s32.totalorder %s161, 7
        %s163 = scalar_select %p162, %s161, 7
        %s164 = smul.addr %s163, 18
        %s165 = smul.addr %s164, 8
        %s166 = scalar_lea.vmem %s0, %s165
        %s167 = smul.u32 4, %s11
      $region24: #{basic_block_forward.8} parent=19 // pred_fallthru
        _
    $region20: #{basic_block_forward.8} parent=5 // pred_fallthru
      _
    %p168 = scmp.le.s32.totalorder 1, %s11
    %p169 = scmp.lt.s32.totalorder %s11, 3
    %p170 = pnand %p168, %p169
    %p171 = pneg %p170
    // Predicated region
    $region25: #{basic_block_forward.8} parent=5 // pred_check
      _
    $region26: #{basic_block_forward.8} parent=5 // pred_check_branch
      %173 = sbr.rel (%p170) target = $region28
    $region27: #{basic_block_forward.8} parent=5 // pred_region
      %s174 = ssub.s32 %s11, 1
      %s175 = smul.u32 4, %s16
      %p176 = scmp.lt.s32.totalorder %s175, 7
      %s177 = scalar_select %p176, %s175, 7
      %s178 = smul.addr %s177, 18
      %s179 = smul.addr %s178, 8
      %s180 = scalar_lea.vmem %s0, %s179
      %p181 = pneg %p37
      %p182 = pneg %p34
      %p183 = pneg %p58
      %p184 = pneg %p55
      %p185 = pneg %p84
      %p186 = pneg %p81
      %p187 = scmp.lt.s32.totalorder %s16, 1
      %s188 = scalar_select %p187, %s16, 1
      %s189 = smul.addr %s188, 8
      %s190 = smul.addr %s189, 8
      %s191 = scalar_lea.vmem %s2, %s190
      %p192 = pneg %p110
      %p193 = pneg %p107
      %p194 = scmp.lt.s32.totalorder %s16, 1
      %s195 = scalar_select %p194, %s16, 1
      %s196 = scalar_lea.vmem %s3, %s195
      %p197 = pneg %p136
      %p198 = pneg %p133
      %p199 = scmp.lt.s32.totalorder %s16, 1
      %s200 = scalar_select %p199, %s16, 1
      %s201 = scalar_lea.vmem %s4, %s200
      %s202 = smul.u32 4, %s16
      %p203 = scmp.lt.s32.totalorder %s202, 7
      %s204 = scalar_select %p203, %s202, 7
      %s205 = smul.addr %s204, 18
      %s206 = smul.addr %s205, 8
      %s207 = scalar_lea.vmem %s0, %s206
      %s208 = smul.u32 4, %s16
      %p209 = scmp.lt.s32.totalorder %s16, 1
      %s210 = scalar_select %p209, %s16, 1
      %s211 = smul.addr %s210, 8
      %s212 = smul.addr %s211, 8
      %s213 = scalar_lea.vmem %s2, %s212
      %p214 = scmp.lt.s32.totalorder %s16, 1
      %s215 = scalar_select %p214, %s16, 1
      %s216 = scalar_lea.vmem %s3, %s215
      %p217 = scmp.lt.s32.totalorder %s16, 1
      %s218 = scalar_select %p217, %s16, 1
      %s219 = scalar_lea.vmem %s4, %s218
      %v220 = vld [vmem:[%s207] sm:$0xff]
      %v221 = vld [vmem:[%s207 + $0x10] sm:$0xff]
      %v222 = vld [vmem:[%s207 + $0x20] sm:$0xff]
      %v223 = vld [vmem:[%s207 + $0x30] sm:$0xff]
      %v224 = vld [vmem:[%s207 + $0x40] sm:$0xff]
      %v225 = vld [vmem:[%s207 + $0x50] sm:$0xff]
      %v226 = vld [vmem:[%s207 + $0x60] sm:$0xff]
      %v227 = vld [vmem:[%s207 + $0x70] sm:$0xff]
      %v228 = vld [vmem:[%s1] sm:$0xff]
      %v229 = vld [vmem:[%s1 + $0x8] sm:$0xff]
      %v230 = vld [vmem:[%s1 + $0x10] sm:$0xff]
      %v231 = vld [vmem:[%s1 + $0x18] sm:$0xff]
      %v232 = vld [vmem:[%s1 + $0x20] sm:$0xff]
      %v233 = vld [vmem:[%s1 + $0x28] sm:$0xff]
      %v234 = vld [vmem:[%s1 + $0x30] sm:$0xff]
      %v235 = vld [vmem:[%s1 + $0x38] sm:$0xff]
      %v236 = vld [vmem:[%s1 + $0x40] sm:$0xff]
      %v237 = vld [vmem:[%s1 + $0x48] sm:$0xff]
      %v238 = vld [vmem:[%s1 + $0x50] sm:$0xff]
      %v239 = vld [vmem:[%s1 + $0x58] sm:$0xff]
      %v240 = vld [vmem:[%s1 + $0x60] sm:$0xff]
      %v241 = vld [vmem:[%s1 + $0x68] sm:$0xff]
      %v242 = vld [vmem:[%s1 + $0x70] sm:$0xff]
      %v243 = vld [vmem:[%s1 + $0x78] sm:$0xff]
      %s244 = scalar_lea.vmem %s207, 144
      %v245 = vld [vmem:[%s244] sm:$0xff]
      %v246 = vld [vmem:[%s244 + $0x10] sm:$0xff]
      %v247 = vld [vmem:[%s244 + $0x20] sm:$0xff]
      %v248 = vld [vmem:[%s244 + $0x30] sm:$0xff]
      %v249 = vld [vmem:[%s244 + $0x40] sm:$0xff]
      %v250 = vld [vmem:[%s244 + $0x50] sm:$0xff]
      %v251 = vld [vmem:[%s244 + $0x60] sm:$0xff]
      %v252 = vld [vmem:[%s244 + $0x70] sm:$0xff]
      %s253 = scalar_lea.vmem %s1, 128
      %v254 = vld [vmem:[%s253] sm:$0xff]
      %v255 = vld [vmem:[%s253 + $0x8] sm:$0xff]
      %v256 = vld [vmem:[%s253 + $0x10] sm:$0xff]
      %v257 = vld [vmem:[%s253 + $0x18] sm:$0xff]
      %v258 = vld [vmem:[%s253 + $0x20] sm:$0xff]
      %v259 = vld [vmem:[%s253 + $0x28] sm:$0xff]
      %v260 = vld [vmem:[%s253 + $0x30] sm:$0xff]
      %v261 = vld [vmem:[%s253 + $0x38] sm:$0xff]
      %v262 = vld [vmem:[%s253 + $0x40] sm:$0xff]
      %v263 = vld [vmem:[%s253 + $0x48] sm:$0xff]
      %v264 = vld [vmem:[%s253 + $0x50] sm:$0xff]
      %v265 = vld [vmem:[%s253 + $0x58] sm:$0xff]
      %v266 = vld [vmem:[%s253 + $0x60] sm:$0xff]
      %v267 = vld [vmem:[%s253 + $0x68] sm:$0xff]
      %v268 = vld [vmem:[%s253 + $0x70] sm:$0xff]
      %v269 = vld [vmem:[%s253 + $0x78] sm:$0xff]
      %270 = vmatpush.msra.mxu0 %v269
      %271 = vmatpush.msra.mxu0 %v268
      %272 = vmatpush.msra.mxu0 %v267
      %273 = vmatpush.msra.mxu0 %v266
      %274 = vmatpush.msra.mxu0 %v265
      %275 = vmatpush.msra.mxu0 %v264
      %276 = vmatpush.msra.mxu0 %v263
      %277 = vmatpush.msra.mxu0 %v262
      %278 = vmatpush.msra.mxu0 %v261
      %279 = vmatpush.msra.mxu0 %v260
      %280 = vmatpush.msra.mxu0 %v259
      %281 = vmatpush.msra.mxu0 %v258
      %282 = vmatpush.msra.mxu0 %v257
      %283 = vmatpush.msra.mxu0 %v256
      %284 = vmatpush.msra.mxu0 %v255
      %285 = vmatpush.msra.mxu0 %v254
      %286 = vmatmul.f32.gmra.mxu0 %v245
      %v287 = vpop.f32.mrf.mxu0
      %v288 = vadd.f32 0.0, %v287
      %289 = vmatmul.f32.gmra.mxu0 %v246
      %v290 = vpop.f32.mrf.mxu0
      %v291 = vadd.f32 0.0, %v290
      %292 = vmatmul.f32.gmra.mxu0 %v247
      %v293 = vpop.f32.mrf.mxu0
      %v294 = vadd.f32 0.0, %v293
      %295 = vmatmul.f32.gmra.mxu0 %v248
      %v296 = vpop.f32.mrf.mxu0
      %v297 = vadd.f32 0.0, %v296
      %298 = vmatmul.f32.gmra.mxu0 %v249
      %v299 = vpop.f32.mrf.mxu0
      %v300 = vadd.f32 0.0, %v299
      %301 = vmatmul.f32.gmra.mxu0 %v250
      %v302 = vpop.f32.mrf.mxu0
      %v303 = vadd.f32 0.0, %v302
      %304 = vmatmul.f32.gmra.mxu0 %v251
      %v305 = vpop.f32.mrf.mxu0
      %v306 = vadd.f32 0.0, %v305
      %307 = vmatmul.f32.gmra.mxu0 %v252
      %v308 = vpop.f32.mrf.mxu0
      %v309 = vadd.f32 0.0, %v308
      %310 = vdwg.mxu0
      %311 = vmatpush.msra.mxu0 %v243
      %312 = vmatpush.msra.mxu0 %v242
      %313 = vmatpush.msra.mxu0 %v241
      %314 = vmatpush.msra.mxu0 %v240
      %315 = vmatpush.msra.mxu0 %v239
      %316 = vmatpush.msra.mxu0 %v238
      %317 = vmatpush.msra.mxu0 %v237
      %318 = vmatpush.msra.mxu0 %v236
      %319 = vmatpush.msra.mxu0 %v235
      %320 = vmatpush.msra.mxu0 %v234
      %321 = vmatpush.msra.mxu0 %v233
      %322 = vmatpush.msra.mxu0 %v232
      %323 = vmatpush.msra.mxu0 %v231
      %324 = vmatpush.msra.mxu0 %v230
      %325 = vmatpush.msra.mxu0 %v229
      %326 = vmatpush.msra.mxu0 %v228
      %327 = vmatmul.f32.gmra.mxu0 %v220
      %v328 = vpop.f32.mrf.mxu0
      %v329 = vadd.f32 %v288, %v328
      %330 = vmatmul.f32.gmra.mxu0 %v221
      %v331 = vpop.f32.mrf.mxu0
      %v332 = vadd.f32 %v291, %v331
      %333 = vmatmul.f32.gmra.mxu0 %v222
      %v334 = vpop.f32.mrf.mxu0
      %v335 = vadd.f32 %v294, %v334
      %336 = vmatmul.f32.gmra.mxu0 %v223
      %v337 = vpop.f32.mrf.mxu0
      %v338 = vadd.f32 %v297, %v337
      %339 = vmatmul.f32.gmra.mxu0 %v224
      %v340 = vpop.f32.mrf.mxu0
      %v341 = vadd.f32 %v300, %v340
      %342 = vmatmul.f32.gmra.mxu0 %v225
      %v343 = vpop.f32.mrf.mxu0
      %v344 = vadd.f32 %v303, %v343
      %345 = vmatmul.f32.gmra.mxu0 %v226
      %v346 = vpop.f32.mrf.mxu0
      %v347 = vadd.f32 %v306, %v346
      %348 = vmatmul.f32.gmra.mxu0 %v227
      %v349 = vpop.f32.mrf.mxu0
      %v350 = vadd.f32 %v309, %v349
      %351 = vdwg.mxu0
      %v352 = vld [vmem:[%s207 + $0x1] sm:$0xff]
      %v353 = vld [vmem:[%s207 + $0x11] sm:$0xff]
      %v354 = vld [vmem:[%s207 + $0x21] sm:$0xff]
      %v355 = vld [vmem:[%s207 + $0x31] sm:$0xff]
      %v356 = vld [vmem:[%s207 + $0x41] sm:$0xff]
      %v357 = vld [vmem:[%s207 + $0x51] sm:$0xff]
      %v358 = vld [vmem:[%s207 + $0x61] sm:$0xff]
      %v359 = vld [vmem:[%s207 + $0x71] sm:$0xff]
      %s360 = scalar_lea.vmem %s1, 256
      %v361 = vld [vmem:[%s360] sm:$0xff]
      %v362 = vld [vmem:[%s360 + $0x8] sm:$0xff]
      %v363 = vld [vmem:[%s360 + $0x10] sm:$0xff]
      %v364 = vld [vmem:[%s360 + $0x18] sm:$0xff]
      %v365 = vld [vmem:[%s360 + $0x20] sm:$0xff]
      %v366 = vld [vmem:[%s360 + $0x28] sm:$0xff]
      %v367 = vld [vmem:[%s360 + $0x30] sm:$0xff]
      %v368 = vld [vmem:[%s360 + $0x38] sm:$0xff]
      %v369 = vld [vmem:[%s360 + $0x40] sm:$0xff]
      %v370 = vld [vmem:[%s360 + $0x48] sm:$0xff]
      %v371 = vld [vmem:[%s360 + $0x50] sm:$0xff]
      %v372 = vld [vmem:[%s360 + $0x58] sm:$0xff]
      %v373 = vld [vmem:[%s360 + $0x60] sm:$0xff]
      %v374 = vld [vmem:[%s360 + $0x68] sm:$0xff]
      %v375 = vld [vmem:[%s360 + $0x70] sm:$0xff]
      %v376 = vld [vmem:[%s360 + $0x78] sm:$0xff]
      %377 = vmatpush.msra.mxu0 %v376
      %378 = vmatpush.msra.mxu0 %v375
      %379 = vmatpush.msra.mxu0 %v374
      %380 = vmatpush.msra.mxu0 %v373
      %381 = vmatpush.msra.mxu0 %v372
      %382 = vmatpush.msra.mxu0 %v371
      %383 = vmatpush.msra.mxu0 %v370
      %384 = vmatpush.msra.mxu0 %v369
      %385 = vmatpush.msra.mxu0 %v368
      %386 = vmatpush.msra.mxu0 %v367
      %387 = vmatpush.msra.mxu0 %v366
      %388 = vmatpush.msra.mxu0 %v365
      %389 = vmatpush.msra.mxu0 %v364
      %390 = vmatpush.msra.mxu0 %v363
      %391 = vmatpush.msra.mxu0 %v362
      %392 = vmatpush.msra.mxu0 %v361
      %393 = vmatmul.f32.gmra.mxu0 %v352
      %v394 = vpop.f32.mrf.mxu0
      %v395 = vadd.f32 0.0, %v394
      %396 = vmatmul.f32.gmra.mxu0 %v353
      %v397 = vpop.f32.mrf.mxu0
      %v398 = vadd.f32 0.0, %v397
      %399 = vmatmul.f32.gmra.mxu0 %v354
      %v400 = vpop.f32.mrf.mxu0
      %v401 = vadd.f32 0.0, %v400
      %402 = vmatmul.f32.gmra.mxu0 %v355
      %v403 = vpop.f32.mrf.mxu0
      %v404 = vadd.f32 0.0, %v403
      %405 = vmatmul.f32.gmra.mxu0 %v356
      %v406 = vpop.f32.mrf.mxu0
      %v407 = vadd.f32 0.0, %v406
      %408 = vmatmul.f32.gmra.mxu0 %v357
      %v409 = vpop.f32.mrf.mxu0
      %v410 = vadd.f32 0.0, %v409
      %411 = vmatmul.f32.gmra.mxu0 %v358
      %v412 = vpop.f32.mrf.mxu0
      %v413 = vadd.f32 0.0, %v412
      %414 = vmatmul.f32.gmra.mxu0 %v359
      %v415 = vpop.f32.mrf.mxu0
      %v416 = vadd.f32 0.0, %v415
      %417 = vdwg.mxu0
      %v418 = vadd.f32 %v329, %v395
      %v419 = vadd.f32 %v332, %v398
      %v420 = vadd.f32 %v335, %v401
      %v421 = vadd.f32 %v338, %v404
      %v422 = vadd.f32 %v341, %v407
      %v423 = vadd.f32 %v344, %v410
      %v424 = vadd.f32 %v347, %v413
      %v425 = vadd.f32 %v350, %v416
      %s426 = scalar_lea.vmem %s207, 288
      %v427 = vld [vmem:[%s426] sm:$0xff]
      %v428 = vld [vmem:[%s426 + $0x10] sm:$0xff]
      %v429 = vld [vmem:[%s426 + $0x20] sm:$0xff]
      %v430 = vld [vmem:[%s426 + $0x30] sm:$0xff]
      %v431 = vld [vmem:[%s426 + $0x40] sm:$0xff]
      %v432 = vld [vmem:[%s426 + $0x50] sm:$0xff]
      %v433 = vld [vmem:[%s426 + $0x60] sm:$0xff]
      %v434 = vld [vmem:[%s426 + $0x70] sm:$0xff]
      %s435 = scalar_lea.vmem %s1, 384
      %v436 = vld [vmem:[%s435] sm:$0xff]
      %v437 = vld [vmem:[%s435 + $0x8] sm:$0xff]
      %v438 = vld [vmem:[%s435 + $0x10] sm:$0xff]
      %v439 = vld [vmem:[%s435 + $0x18] sm:$0xff]
      %v440 = vld [vmem:[%s435 + $0x20] sm:$0xff]
      %v441 = vld [vmem:[%s435 + $0x28] sm:$0xff]
      %v442 = vld [vmem:[%s435 + $0x30] sm:$0xff]
      %v443 = vld [vmem:[%s435 + $0x38] sm:$0xff]
      %v444 = vld [vmem:[%s435 + $0x40] sm:$0xff]
      %v445 = vld [vmem:[%s435 + $0x48] sm:$0xff]
      %v446 = vld [vmem:[%s435 + $0x50] sm:$0xff]
      %v447 = vld [vmem:[%s435 + $0x58] sm:$0xff]
      %v448 = vld [vmem:[%s435 + $0x60] sm:$0xff]
      %v449 = vld [vmem:[%s435 + $0x68] sm:$0xff]
      %v450 = vld [vmem:[%s435 + $0x70] sm:$0xff]
      %v451 = vld [vmem:[%s435 + $0x78] sm:$0xff]
      %452 = vmatpush.msra.mxu0 %v451
      %453 = vmatpush.msra.mxu0 %v450
      %454 = vmatpush.msra.mxu0 %v449
      %455 = vmatpush.msra.mxu0 %v448
      %456 = vmatpush.msra.mxu0 %v447
      %457 = vmatpush.msra.mxu0 %v446
      %458 = vmatpush.msra.mxu0 %v445
      %459 = vmatpush.msra.mxu0 %v444
      %460 = vmatpush.msra.mxu0 %v443
      %461 = vmatpush.msra.mxu0 %v442
      %462 = vmatpush.msra.mxu0 %v441
      %463 = vmatpush.msra.mxu0 %v440
      %464 = vmatpush.msra.mxu0 %v439
      %465 = vmatpush.msra.mxu0 %v438
      %466 = vmatpush.msra.mxu0 %v437
      %467 = vmatpush.msra.mxu0 %v436
      %468 = vmatmul.f32.gmra.mxu0 %v427
      %v469 = vpop.f32.mrf.mxu0
      %v470 = vadd.f32 0.0, %v469
      %471 = vmatmul.f32.gmra.mxu0 %v428
      %v472 = vpop.f32.mrf.mxu0
      %v473 = vadd.f32 0.0, %v472
      %474 = vmatmul.f32.gmra.mxu0 %v429
      %v475 = vpop.f32.mrf.mxu0
      %v476 = vadd.f32 0.0, %v475
      %477 = vmatmul.f32.gmra.mxu0 %v430
      %v478 = vpop.f32.mrf.mxu0
      %v479 = vadd.f32 0.0, %v478
      %480 = vmatmul.f32.gmra.mxu0 %v431
      %v481 = vpop.f32.mrf.mxu0
      %v482 = vadd.f32 0.0, %v481
      %483 = vmatmul.f32.gmra.mxu0 %v432
      %v484 = vpop.f32.mrf.mxu0
      %v485 = vadd.f32 0.0, %v484
      %486 = vmatmul.f32.gmra.mxu0 %v433
      %v487 = vpop.f32.mrf.mxu0
      %v488 = vadd.f32 0.0, %v487
      %489 = vmatmul.f32.gmra.mxu0 %v434
      %v490 = vpop.f32.mrf.mxu0
      %v491 = vadd.f32 0.0, %v490
      %492 = vdwg.mxu0
      %v493 = vadd.f32 %v418, %v470
      %v494 = vadd.f32 %v419, %v473
      %v495 = vadd.f32 %v420, %v476
      %v496 = vadd.f32 %v421, %v479
      %v497 = vadd.f32 %v422, %v482
      %v498 = vadd.f32 %v423, %v485
      %v499 = vadd.f32 %v424, %v488
      %v500 = vadd.f32 %v425, %v491
      %s501 = scalar_lea.vmem %s207, 432
      %v502 = vld [vmem:[%s501] sm:$0xff]
      %v503 = vld [vmem:[%s501 + $0x10] sm:$0xff]
      %v504 = vld [vmem:[%s501 + $0x20] sm:$0xff]
      %v505 = vld [vmem:[%s501 + $0x30] sm:$0xff]
      %v506 = vld [vmem:[%s501 + $0x40] sm:$0xff]
      %v507 = vld [vmem:[%s501 + $0x50] sm:$0xff]
      %v508 = vld [vmem:[%s501 + $0x60] sm:$0xff]
      %v509 = vld [vmem:[%s501 + $0x70] sm:$0xff]
      %s510 = scalar_lea.vmem %s1, 512
      %v511 = vld [vmem:[%s510] sm:$0xff]
      %v512 = vld [vmem:[%s510 + $0x8] sm:$0xff]
      %v513 = vld [vmem:[%s510 + $0x10] sm:$0xff]
      %v514 = vld [vmem:[%s510 + $0x18] sm:$0xff]
      %v515 = vld [vmem:[%s510 + $0x20] sm:$0xff]
      %v516 = vld [vmem:[%s510 + $0x28] sm:$0xff]
      %v517 = vld [vmem:[%s510 + $0x30] sm:$0xff]
      %v518 = vld [vmem:[%s510 + $0x38] sm:$0xff]
      %v519 = vld [vmem:[%s510 + $0x40] sm:$0xff]
      %v520 = vld [vmem:[%s510 + $0x48] sm:$0xff]
      %v521 = vld [vmem:[%s510 + $0x50] sm:$0xff]
      %v522 = vld [vmem:[%s510 + $0x58] sm:$0xff]
      %v523 = vld [vmem:[%s510 + $0x60] sm:$0xff]
      %v524 = vld [vmem:[%s510 + $0x68] sm:$0xff]
      %v525 = vld [vmem:[%s510 + $0x70] sm:$0xff]
      %v526 = vld [vmem:[%s510 + $0x78] sm:$0xff]
      %527 = vmatpush.msra.mxu0 %v526
      %528 = vmatpush.msra.mxu0 %v525
      %529 = vmatpush.msra.mxu0 %v524
      %530 = vmatpush.msra.mxu0 %v523
      %531 = vmatpush.msra.mxu0 %v522
      %532 = vmatpush.msra.mxu0 %v521
      %533 = vmatpush.msra.mxu0 %v520
      %534 = vmatpush.msra.mxu0 %v519
      %535 = vmatpush.msra.mxu0 %v518
      %536 = vmatpush.msra.mxu0 %v517
      %537 = vmatpush.msra.mxu0 %v516
      %538 = vmatpush.msra.mxu0 %v515
      %539 = vmatpush.msra.mxu0 %v514
      %540 = vmatpush.msra.mxu0 %v513
      %541 = vmatpush.msra.mxu0 %v512
      %542 = vmatpush.msra.mxu0 %v511
      %543 = vmatmul.f32.gmra.mxu0 %v502
      %v544 = vpop.f32.mrf.mxu0
      %v545 = vadd.f32 0.0, %v544
      %546 = vmatmul.f32.gmra.mxu0 %v503
      %v547 = vpop.f32.mrf.mxu0
      %v548 = vadd.f32 0.0, %v547
      %549 = vmatmul.f32.gmra.mxu0 %v504
      %v550 = vpop.f32.mrf.mxu0
      %v551 = vadd.f32 0.0, %v550
      %552 = vmatmul.f32.gmra.mxu0 %v505
      %v553 = vpop.f32.mrf.mxu0
      %v554 = vadd.f32 0.0, %v553
      %555 = vmatmul.f32.gmra.mxu0 %v506
      %v556 = vpop.f32.mrf.mxu0
      %v557 = vadd.f32 0.0, %v556
      %558 = vmatmul.f32.gmra.mxu0 %v507
      %v559 = vpop.f32.mrf.mxu0
      %v560 = vadd.f32 0.0, %v559
      %561 = vmatmul.f32.gmra.mxu0 %v508
      %v562 = vpop.f32.mrf.mxu0
      %v563 = vadd.f32 0.0, %v562
      %564 = vmatmul.f32.gmra.mxu0 %v509
      %v565 = vpop.f32.mrf.mxu0
      %v566 = vadd.f32 0.0, %v565
      %567 = vdwg.mxu0
      %v568 = vadd.f32 %v493, %v545
      %v569 = vadd.f32 %v494, %v548
      %v570 = vadd.f32 %v495, %v551
      %v571 = vadd.f32 %v496, %v554
      %v572 = vadd.f32 %v497, %v557
      %v573 = vadd.f32 %v498, %v560
      %v574 = vadd.f32 %v499, %v563
      %v575 = vadd.f32 %v500, %v566
      %v576 = vld [vmem:[%s426 + $0x1] sm:$0xff]
      %v577 = vld [vmem:[%s426 + $0x11] sm:$0xff]
      %v578 = vld [vmem:[%s426 + $0x21] sm:$0xff]
      %v579 = vld [vmem:[%s426 + $0x31] sm:$0xff]
      %v580 = vld [vmem:[%s426 + $0x41] sm:$0xff]
      %v581 = vld [vmem:[%s426 + $0x51] sm:$0xff]
      %v582 = vld [vmem:[%s426 + $0x61] sm:$0xff]
      %v583 = vld [vmem:[%s426 + $0x71] sm:$0xff]
      %s584 = scalar_lea.vmem %s1, 640
      %v585 = vld [vmem:[%s584] sm:$0xff]
      %v586 = vld [vmem:[%s584 + $0x8] sm:$0xff]
      %v587 = vld [vmem:[%s584 + $0x10] sm:$0xff]
      %v588 = vld [vmem:[%s584 + $0x18] sm:$0xff]
      %v589 = vld [vmem:[%s584 + $0x20] sm:$0xff]
      %v590 = vld [vmem:[%s584 + $0x28] sm:$0xff]
      %v591 = vld [vmem:[%s584 + $0x30] sm:$0xff]
      %v592 = vld [vmem:[%s584 + $0x38] sm:$0xff]
      %v593 = vld [vmem:[%s584 + $0x40] sm:$0xff]
      %v594 = vld [vmem:[%s584 + $0x48] sm:$0xff]
      %v595 = vld [vmem:[%s584 + $0x50] sm:$0xff]
      %v596 = vld [vmem:[%s584 + $0x58] sm:$0xff]
      %v597 = vld [vmem:[%s584 + $0x60] sm:$0xff]
      %v598 = vld [vmem:[%s584 + $0x68] sm:$0xff]
      %v599 = vld [vmem:[%s584 + $0x70] sm:$0xff]
      %v600 = vld [vmem:[%s584 + $0x78] sm:$0xff]
      %601 = vmatpush.msra.mxu0 %v600
      %602 = vmatpush.msra.mxu0 %v599
      %603 = vmatpush.msra.mxu0 %v598
      %604 = vmatpush.msra.mxu0 %v597
      %605 = vmatpush.msra.mxu0 %v596
      %606 = vmatpush.msra.mxu0 %v595
      %607 = vmatpush.msra.mxu0 %v594
      %608 = vmatpush.msra.mxu0 %v593
      %609 = vmatpush.msra.mxu0 %v592
      %610 = vmatpush.msra.mxu0 %v591
      %611 = vmatpush.msra.mxu0 %v590
      %612 = vmatpush.msra.mxu0 %v589
      %613 = vmatpush.msra.mxu0 %v588
      %614 = vmatpush.msra.mxu0 %v587
      %615 = vmatpush.msra.mxu0 %v586
      %616 = vmatpush.msra.mxu0 %v585
      %617 = vmatmul.f32.gmra.mxu0 %v576
      %v618 = vpop.f32.mrf.mxu0
      %v619 = vadd.f32 0.0, %v618
      %620 = vmatmul.f32.gmra.mxu0 %v577
      %v621 = vpop.f32.mrf.mxu0
      %v622 = vadd.f32 0.0, %v621
      %623 = vmatmul.f32.gmra.mxu0 %v578
      %v624 = vpop.f32.mrf.mxu0
      %v625 = vadd.f32 0.0, %v624
      %626 = vmatmul.f32.gmra.mxu0 %v579
      %v627 = vpop.f32.mrf.mxu0
      %v628 = vadd.f32 0.0, %v627
      %629 = vmatmul.f32.gmra.mxu0 %v580
      %v630 = vpop.f32.mrf.mxu0
      %v631 = vadd.f32 0.0, %v630
      %632 = vmatmul.f32.gmra.mxu0 %v581
      %v633 = vpop.f32.mrf.mxu0
      %v634 = vadd.f32 0.0, %v633
      %635 = vmatmul.f32.gmra.mxu0 %v582
      %v636 = vpop.f32.mrf.mxu0
      %v637 = vadd.f32 0.0, %v636
      %638 = vmatmul.f32.gmra.mxu0 %v583
      %v639 = vpop.f32.mrf.mxu0
      %v640 = vadd.f32 0.0, %v639
      %641 = vdwg.mxu0
      %v642 = vadd.f32 %v568, %v619
      %v643 = vadd.f32 %v569, %v622
      %v644 = vadd.f32 %v570, %v625
      %v645 = vadd.f32 %v571, %v628
      %v646 = vadd.f32 %v572, %v631
      %v647 = vadd.f32 %v573, %v634
      %v648 = vadd.f32 %v574, %v637
      %v649 = vadd.f32 %v575, %v640
      %s650 = scalar_lea.vmem %s207, 16
      %v651 = vld [vmem:[%s650] sm:$0xff]
      %v652 = vld [vmem:[%s650 + $0x10] sm:$0xff]
      %v653 = vld [vmem:[%s650 + $0x20] sm:$0xff]
      %v654 = vld [vmem:[%s650 + $0x30] sm:$0xff]
      %v655 = vld [vmem:[%s650 + $0x40] sm:$0xff]
      %v656 = vld [vmem:[%s650 + $0x50] sm:$0xff]
      %v657 = vld [vmem:[%s650 + $0x60] sm:$0xff]
      %v658 = vld [vmem:[%s650 + $0x70] sm:$0xff]
      %s659 = scalar_lea.vmem %s1, 768
      %v660 = vld [vmem:[%s659] sm:$0xff]
      %v661 = vld [vmem:[%s659 + $0x8] sm:$0xff]
      %v662 = vld [vmem:[%s659 + $0x10] sm:$0xff]
      %v663 = vld [vmem:[%s659 + $0x18] sm:$0xff]
      %v664 = vld [vmem:[%s659 + $0x20] sm:$0xff]
      %v665 = vld [vmem:[%s659 + $0x28] sm:$0xff]
      %v666 = vld [vmem:[%s659 + $0x30] sm:$0xff]
      %v667 = vld [vmem:[%s659 + $0x38] sm:$0xff]
      %v668 = vld [vmem:[%s659 + $0x40] sm:$0xff]
      %v669 = vld [vmem:[%s659 + $0x48] sm:$0xff]
      %v670 = vld [vmem:[%s659 + $0x50] sm:$0xff]
      %v671 = vld [vmem:[%s659 + $0x58] sm:$0xff]
      %v672 = vld [vmem:[%s659 + $0x60] sm:$0xff]
      %v673 = vld [vmem:[%s659 + $0x68] sm:$0xff]
      %v674 = vld [vmem:[%s659 + $0x70] sm:$0xff]
      %v675 = vld [vmem:[%s659 + $0x78] sm:$0xff]
      %676 = vmatpush.msra.mxu0 %v675
      %677 = vmatpush.msra.mxu0 %v674
      %678 = vmatpush.msra.mxu0 %v673
      %679 = vmatpush.msra.mxu0 %v672
      %680 = vmatpush.msra.mxu0 %v671
      %681 = vmatpush.msra.mxu0 %v670
      %682 = vmatpush.msra.mxu0 %v669
      %683 = vmatpush.msra.mxu0 %v668
      %684 = vmatpush.msra.mxu0 %v667
      %685 = vmatpush.msra.mxu0 %v666
      %686 = vmatpush.msra.mxu0 %v665
      %687 = vmatpush.msra.mxu0 %v664
      %688 = vmatpush.msra.mxu0 %v663
      %689 = vmatpush.msra.mxu0 %v662
      %690 = vmatpush.msra.mxu0 %v661
      %691 = vmatpush.msra.mxu0 %v660
      %692 = vmatmul.f32.gmra.mxu0 %v651
      %v693 = vpop.f32.mrf.mxu0
      %v694 = vadd.f32 0.0, %v693
      %695 = vmatmul.f32.gmra.mxu0 %v652
      %v696 = vpop.f32.mrf.mxu0
      %v697 = vadd.f32 0.0, %v696
      %698 = vmatmul.f32.gmra.mxu0 %v653
      %v699 = vpop.f32.mrf.mxu0
      %v700 = vadd.f32 0.0, %v699
      %701 = vmatmul.f32.gmra.mxu0 %v654
      %v702 = vpop.f32.mrf.mxu0
      %v703 = vadd.f32 0.0, %v702
      %704 = vmatmul.f32.gmra.mxu0 %v655
      %v705 = vpop.f32.mrf.mxu0
      %v706 = vadd.f32 0.0, %v705
      %707 = vmatmul.f32.gmra.mxu0 %v656
      %v708 = vpop.f32.mrf.mxu0
      %v709 = vadd.f32 0.0, %v708
      %710 = vmatmul.f32.gmra.mxu0 %v657
      %v711 = vpop.f32.mrf.mxu0
      %v712 = vadd.f32 0.0, %v711
      %713 = vmatmul.f32.gmra.mxu0 %v658
      %v714 = vpop.f32.mrf.mxu0
      %v715 = vadd.f32 0.0, %v714
      %716 = vdwg.mxu0
      %v717 = vadd.f32 %v642, %v694
      %v718 = vadd.f32 %v643, %v697
      %v719 = vadd.f32 %v644, %v700
      %v720 = vadd.f32 %v645, %v703
      %v721 = vadd.f32 %v646, %v706
      %v722 = vadd.f32 %v647, %v709
      %v723 = vadd.f32 %v648, %v712
      %v724 = vadd.f32 %v649, %v715
      %s725 = scalar_lea.vmem %s207, 160
      %v726 = vld [vmem:[%s725] sm:$0xff]
      %v727 = vld [vmem:[%s725 + $0x10] sm:$0xff]
      %v728 = vld [vmem:[%s725 + $0x20] sm:$0xff]
      %v729 = vld [vmem:[%s725 + $0x30] sm:$0xff]
      %v730 = vld [vmem:[%s725 + $0x40] sm:$0xff]
      %v731 = vld [vmem:[%s725 + $0x50] sm:$0xff]
      %v732 = vld [vmem:[%s725 + $0x60] sm:$0xff]
      %v733 = vld [vmem:[%s725 + $0x70] sm:$0xff]
      %s734 = scalar_lea.vmem %s1, 896
      %v735 = vld [vmem:[%s734] sm:$0xff]
      %v736 = vld [vmem:[%s734 + $0x8] sm:$0xff]
      %v737 = vld [vmem:[%s734 + $0x10] sm:$0xff]
      %v738 = vld [vmem:[%s734 + $0x18] sm:$0xff]
      %v739 = vld [vmem:[%s734 + $0x20] sm:$0xff]
      %v740 = vld [vmem:[%s734 + $0x28] sm:$0xff]
      %v741 = vld [vmem:[%s734 + $0x30] sm:$0xff]
      %v742 = vld [vmem:[%s734 + $0x38] sm:$0xff]
      %v743 = vld [vmem:[%s734 + $0x40] sm:$0xff]
      %v744 = vld [vmem:[%s734 + $0x48] sm:$0xff]
      %v745 = vld [vmem:[%s734 + $0x50] sm:$0xff]
      %v746 = vld [vmem:[%s734 + $0x58] sm:$0xff]
      %v747 = vld [vmem:[%s734 + $0x60] sm:$0xff]
      %v748 = vld [vmem:[%s734 + $0x68] sm:$0xff]
      %v749 = vld [vmem:[%s734 + $0x70] sm:$0xff]
      %v750 = vld [vmem:[%s734 + $0x78] sm:$0xff]
      %751 = vmatpush.msra.mxu0 %v750
      %752 = vmatpush.msra.mxu0 %v749
      %753 = vmatpush.msra.mxu0 %v748
      %754 = vmatpush.msra.mxu0 %v747
      %755 = vmatpush.msra.mxu0 %v746
      %756 = vmatpush.msra.mxu0 %v745
      %757 = vmatpush.msra.mxu0 %v744
      %758 = vmatpush.msra.mxu0 %v743
      %759 = vmatpush.msra.mxu0 %v742
      %760 = vmatpush.msra.mxu0 %v741
      %761 = vmatpush.msra.mxu0 %v740
      %762 = vmatpush.msra.mxu0 %v739
      %763 = vmatpush.msra.mxu0 %v738
      %764 = vmatpush.msra.mxu0 %v737
      %765 = vmatpush.msra.mxu0 %v736
      %766 = vmatpush.msra.mxu0 %v735
      %767 = vmatmul.f32.gmra.mxu0 %v726
      %v768 = vpop.f32.mrf.mxu0
      %v769 = vadd.f32 0.0, %v768
      %770 = vmatmul.f32.gmra.mxu0 %v727
      %v771 = vpop.f32.mrf.mxu0
      %v772 = vadd.f32 0.0, %v771
      %773 = vmatmul.f32.gmra.mxu0 %v728
      %v774 = vpop.f32.mrf.mxu0
      %v775 = vadd.f32 0.0, %v774
      %776 = vmatmul.f32.gmra.mxu0 %v729
      %v777 = vpop.f32.mrf.mxu0
      %v778 = vadd.f32 0.0, %v777
      %779 = vmatmul.f32.gmra.mxu0 %v730
      %v780 = vpop.f32.mrf.mxu0
      %v781 = vadd.f32 0.0, %v780
      %782 = vmatmul.f32.gmra.mxu0 %v731
      %v783 = vpop.f32.mrf.mxu0
      %v784 = vadd.f32 0.0, %v783
      %785 = vmatmul.f32.gmra.mxu0 %v732
      %v786 = vpop.f32.mrf.mxu0
      %v787 = vadd.f32 0.0, %v786
      %788 = vmatmul.f32.gmra.mxu0 %v733
      %v789 = vpop.f32.mrf.mxu0
      %v790 = vadd.f32 0.0, %v789
      %791 = vdwg.mxu0
      %v792 = vadd.f32 %v717, %v769
      %v793 = vadd.f32 %v718, %v772
      %v794 = vadd.f32 %v719, %v775
      %v795 = vadd.f32 %v720, %v778
      %v796 = vadd.f32 %v721, %v781
      %v797 = vadd.f32 %v722, %v784
      %v798 = vadd.f32 %v723, %v787
      %v799 = vadd.f32 %v724, %v790
      %v800 = vld [vmem:[%s650 + $0x1] sm:$0xff]
      %v801 = vld [vmem:[%s650 + $0x11] sm:$0xff]
      %v802 = vld [vmem:[%s650 + $0x21] sm:$0xff]
      %v803 = vld [vmem:[%s650 + $0x31] sm:$0xff]
      %v804 = vld [vmem:[%s650 + $0x41] sm:$0xff]
      %v805 = vld [vmem:[%s650 + $0x51] sm:$0xff]
      %v806 = vld [vmem:[%s650 + $0x61] sm:$0xff]
      %v807 = vld [vmem:[%s650 + $0x71] sm:$0xff]
      %s808 = scalar_lea.vmem %s1, 1024
      %v809 = vld [vmem:[%s808] sm:$0xff]
      %v810 = vld [vmem:[%s808 + $0x8] sm:$0xff]
      %v811 = vld [vmem:[%s808 + $0x10] sm:$0xff]
      %v812 = vld [vmem:[%s808 + $0x18] sm:$0xff]
      %v813 = vld [vmem:[%s808 + $0x20] sm:$0xff]
      %v814 = vld [vmem:[%s808 + $0x28] sm:$0xff]
      %v815 = vld [vmem:[%s808 + $0x30] sm:$0xff]
      %v816 = vld [vmem:[%s808 + $0x38] sm:$0xff]
      %v817 = vld [vmem:[%s808 + $0x40] sm:$0xff]
      %v818 = vld [vmem:[%s808 + $0x48] sm:$0xff]
      %v819 = vld [vmem:[%s808 + $0x50] sm:$0xff]
      %v820 = vld [vmem:[%s808 + $0x58] sm:$0xff]
      %v821 = vld [vmem:[%s808 + $0x60] sm:$0xff]
      %v822 = vld [vmem:[%s808 + $0x68] sm:$0xff]
      %v823 = vld [vmem:[%s808 + $0x70] sm:$0xff]
      %v824 = vld [vmem:[%s808 + $0x78] sm:$0xff]
      %825 = vmatpush.msra.mxu0 %v824
      %826 = vmatpush.msra.mxu0 %v823
      %827 = vmatpush.msra.mxu0 %v822
      %828 = vmatpush.msra.mxu0 %v821
      %829 = vmatpush.msra.mxu0 %v820
      %830 = vmatpush.msra.mxu0 %v819
      %831 = vmatpush.msra.mxu0 %v818
      %832 = vmatpush.msra.mxu0 %v817
      %833 = vmatpush.msra.mxu0 %v816
      %834 = vmatpush.msra.mxu0 %v815
      %835 = vmatpush.msra.mxu0 %v814
      %836 = vmatpush.msra.mxu0 %v813
      %837 = vmatpush.msra.mxu0 %v812
      %838 = vmatpush.msra.mxu0 %v811
      %839 = vmatpush.msra.mxu0 %v810
      %840 = vmatpush.msra.mxu0 %v809
      %841 = vmatmul.f32.gmra.mxu0 %v800
      %v842 = vpop.f32.mrf.mxu0
      %v843 = vadd.f32 0.0, %v842
      %844 = vmatmul.f32.gmra.mxu0 %v801
      %v845 = vpop.f32.mrf.mxu0
      %v846 = vadd.f32 0.0, %v845
      %847 = vmatmul.f32.gmra.mxu0 %v802
      %v848 = vpop.f32.mrf.mxu0
      %v849 = vadd.f32 0.0, %v848
      %850 = vmatmul.f32.gmra.mxu0 %v803
      %v851 = vpop.f32.mrf.mxu0
      %v852 = vadd.f32 0.0, %v851
      %853 = vmatmul.f32.gmra.mxu0 %v804
      %v854 = vpop.f32.mrf.mxu0
      %v855 = vadd.f32 0.0, %v854
      %856 = vmatmul.f32.gmra.mxu0 %v805
      %v857 = vpop.f32.mrf.mxu0
      %v858 = vadd.f32 0.0, %v857
      %859 = vmatmul.f32.gmra.mxu0 %v806
      %v860 = vpop.f32.mrf.mxu0
      %v861 = vadd.f32 0.0, %v860
      %862 = vmatmul.f32.gmra.mxu0 %v807
      %v863 = vpop.f32.mrf.mxu0
      %v864 = vadd.f32 0.0, %v863
      %865 = vdwg.mxu0
      %v866 = vadd.f32 %v792, %v843
      %v867 = vadd.f32 %v793, %v846
      %v868 = vadd.f32 %v794, %v849
      %v869 = vadd.f32 %v795, %v852
      %v870 = vadd.f32 %v796, %v855
      %v871 = vadd.f32 %v797, %v858
      %v872 = vadd.f32 %v798, %v861
      %v873 = vadd.f32 %v799, %v864
      %874 = vst [vmem:[%s213] sm:$0xff] %v866
      %875 = vst [vmem:[%s213 + $0x8] sm:$0xff] %v867
      %876 = vst [vmem:[%s213 + $0x10] sm:$0xff] %v868
      %877 = vst [vmem:[%s213 + $0x18] sm:$0xff] %v869
      %878 = vst [vmem:[%s213 + $0x20] sm:$0xff] %v870
      %879 = vst [vmem:[%s213 + $0x28] sm:$0xff] %v871
      %880 = vst [vmem:[%s213 + $0x30] sm:$0xff] %v872
      %881 = vst [vmem:[%s213 + $0x38] sm:$0xff] %v873
      %v882 = vadd.f32 %v866, %v867
      %v883 = vadd.f32 %v882, %v868
      %v884 = vadd.f32 %v883, %v869
      %v885 = vadd.f32 %v884, %v870
      %v886 = vadd.f32 %v885, %v871
      %v887 = vadd.f32 %v886, %v872
      %v888 = vadd.f32 %v887, %v873
      %v889 = vrot.slane %v888, 4
      %v890 = vadd.f32 %v888, %v889
      %v891 = vrot.slane %v890, 2
      %v892 = vadd.f32 %v890, %v891
      %v893 = vrot.slane %v892, 1
      %v894 = vadd.f32 %v892, %v893
      %895 = vst [vmem:[%s216] sm:$0x1] %v894
      %v896 = vmul.f32 %v866, %v866
      %v897 = vmul.f32 %v867, %v867
      %v898 = vmul.f32 %v868, %v868
      %v899 = vmul.f32 %v869, %v869
      %v900 = vmul.f32 %v870, %v870
      %v901 = vmul.f32 %v871, %v871
      %v902 = vmul.f32 %v872, %v872
      %v903 = vmul.f32 %v873, %v873
      %v904 = vadd.f32 %v896, %v897
      %v905 = vadd.f32 %v904, %v898
      %v906 = vadd.f32 %v905, %v899
      %v907 = vadd.f32 %v906, %v900
      %v908 = vadd.f32 %v907, %v901
      %v909 = vadd.f32 %v908, %v902
      %v910 = vadd.f32 %v909, %v903
      %v911 = vrot.slane %v910, 4
      %v912 = vadd.f32 %v910, %v911
      %v913 = vrot.slane %v912, 2
      %v914 = vadd.f32 %v912, %v913
      %v915 = vrot.slane %v914, 1
      %v916 = vadd.f32 %v914, %v915
      %917 = vst [vmem:[%s219] sm:$0x1] %v916
      %p918 = scmp.lt.s32.totalorder %s16, 1
      %s919 = scalar_select %p918, %s16, 1
      %s920 = smul.addr %s919, 8
      %s921 = smul.addr %s920, 8
      %s922 = scalar_lea.vmem %s2, %s921
      %p923 = scmp.lt.s32.totalorder %s16, 1
      %s924 = scalar_select %p923, %s16, 1
      %s925 = scalar_lea.vmem %s3, %s924
      %p926 = scmp.lt.s32.totalorder %s16, 1
      %s927 = scalar_select %p926, %s16, 1
      %s928 = scalar_lea.vmem %s4, %s927
      // Predicated region
      $region29: #{basic_block_forward.8} parent=27 // pred_check
        %p929 = pneg %p81
      $region30: #{basic_block_forward.8} parent=27 // pred_check_branch
        %931 = sbr.rel (%p929) target = $region32
      $region31: #{basic_block_forward.8} parent=27 // pred_region
        _
      $region32: #{basic_block_forward.8} parent=27 // pred_fallthru
        _
      // Predicated region
      $region33: #{basic_block_forward.8} parent=27 // pred_check
        %p932 = pneg %p107
      $region34: #{basic_block_forward.8} parent=27 // pred_check_branch
        %934 = sbr.rel (%p932) target = $region36
      $region35: #{basic_block_forward.8} parent=27 // pred_region
        _
      $region36: #{basic_block_forward.8} parent=27 // pred_fallthru
        _
      // Predicated region
      $region37: #{basic_block_forward.8} parent=27 // pred_check
        %p935 = pneg %p133
      $region38: #{basic_block_forward.8} parent=27 // pred_check_branch
        %937 = sbr.rel (%p935) target = $region40
      $region39: #{basic_block_forward.8} parent=27 // pred_region
        _
      $region40: #{basic_block_forward.8} parent=27 // pred_fallthru
        _
    $region28: #{basic_block_forward.8} parent=5 // pred_fallthru
      _
    %p938 = scmp.le.s32.totalorder 2, %s11
    // Predicated region
    $region41: #{basic_block_forward.8} parent=5 // pred_check
      %p939 = pneg %p938
    $region42: #{basic_block_forward.8} parent=5 // pred_check_branch
      %941 = sbr.rel (%p939) target = $region44
    $region43: #{basic_block_forward.8} parent=5 // pred_region
      %s942 = ssub.s32 %s11, 2
      // Predicated region
      $region45: #{basic_block_forward.8} parent=43 // pred_check
        %p943 = pneg %p87
      $region46: #{basic_block_forward.8} parent=43 // pred_check_branch
        %945 = sbr.rel (%p943) target = $region48
      $region47: #{basic_block_forward.8} parent=43 // pred_region
        %p946 = scmp.lt.s32.totalorder %s17, 1
        %s947 = scalar_select %p946, %s17, 1
        %s948 = smul.addr %s947, 8
        %s949 = smul.addr %s948, 8
        %s950 = scalar_lea.vmem %s2, %s949
      $region48: #{basic_block_forward.8} parent=43 // pred_fallthru
        _
      // Predicated region
      $region49: #{basic_block_forward.8} parent=43 // pred_check
        %p951 = pneg %p113
      $region50: #{basic_block_forward.8} parent=43 // pred_check_branch
        %953 = sbr.rel (%p951) target = $region52
      $region51: #{basic_block_forward.8} parent=43 // pred_region
        %p954 = scmp.lt.s32.totalorder %s17, 1
        %s955 = scalar_select %p954, %s17, 1
        %s956 = scalar_lea.vmem %s3, %s955
      $region52: #{basic_block_forward.8} parent=43 // pred_fallthru
        _
      // Predicated region
      $region53: #{basic_block_forward.8} parent=43 // pred_check
        %p957 = pneg %p139
      $region54: #{basic_block_forward.8} parent=43 // pred_check_branch
        %959 = sbr.rel (%p957) target = $region56
      $region55: #{basic_block_forward.8} parent=43 // pred_region
        %p960 = scmp.lt.s32.totalorder %s17, 1
        %s961 = scalar_select %p960, %s17, 1
        %s962 = scalar_lea.vmem %s4, %s961
      $region56: #{basic_block_forward.8} parent=43 // pred_fallthru
        _
    $region44: #{basic_block_forward.8} parent=5 // pred_fallthru
      _
  $region6: #{basic_block_forward.8} parent=0 // loop_footer
    %s15 = sadd.s32 1, %s11
  $region7: #{basic_block_forward.8} parent=0 // loop_footer_branch
    %10 = sbr.rel target = $region3
  $region8: #{basic_block_forward.8} parent=0 // loop_exit
    _

// kernel: basic_block_forward.11
$region0: #{basic_block_forward.11}
  #allocation0 [shape = 'u32[]', space=smem, size = 0x4, offset = 0x4, fixed_abs, tag = 'smem constant byte address 0x4 - core index']
  #allocation1 [shape = 'u32[72,128]{1,0:T(1,128)}', space=vmem, size = 0x9000, scoped, tag = 'internal scratch']
  %s0 = inlined_call_operand.vmem [shape: f32[2,10,10,128], index: 0, kind: input, shape index: {}]
  %s1 = inlined_call_operand.vmem [shape: f32[9,128,128], index: 1, kind: input, shape index: {}]
  %s2 = inlined_call_operand.vmem [shape: f32[2,64,128], index: 2, kind: output, shape index: {0}]
  %s3 = inlined_call_operand.vmem [shape: f32[2,1,128], index: 3, kind: output, shape index: {1}]
  %s4 = inlined_call_operand.vmem [shape: f32[2,1,128], index: 4, kind: output, shape index: {2}]
  %5 = xla_tuple %s2, %s3, %s4
  %s6 = sld [smem:[#allocation0]]
  $region57: #{basic_block_forward.11} parent=0
    _
  %s8 = ssub.s32 1, %s6
  %s9 = scalar_select 0, %s8, %s6
  loop: start=0, step=1, limit=4
  $region2: #{basic_block_forward.11} parent=0 // loop_pre_header
    _
  $region3: #{basic_block_forward.11} parent=0 // loop_header
    %s11 = sphi 0, %s15
    %p12 = scmp.ge.s32.totalorder %s11, 4
    %s21 = sphi 0, %s23
    %s24 = sphi 0, %s21
    %s25 = sphi 0, %s24
    %s41 = sphi 0, %s25
    %s45 = sphi 0, %s45
    %s47 = sphi 0, %s45
    %s48 = sphi 0, %s47
    %s62 = sphi 0, %s48
    %s68 = sphi 0, %s70
    %s71 = sphi 0, %s68
    %s72 = sphi 0, %s71
    %s88 = sphi 0, %s72
    %s94 = sphi 0, %s96
    %s97 = sphi 0, %s94
    %s98 = sphi 0, %s97
    %s114 = sphi 0, %s98
    %s120 = sphi 0, %s122
    %s123 = sphi 0, %s120
    %s124 = sphi 0, %s123
    %s140 = sphi 0, %s124
  $region4: #{basic_block_forward.11} parent=0 // loop_header_branch
    %14 = sbr.rel (%p12) target = $region8
  $region5: #{basic_block_forward.11} parent=0 // loop_body
    %s16 = ssub.s32 %s11, 1
    %s17 = ssub.s32 %s11, 2
    %s18 = sadd.s32 %s11, 1
    %s19 = ssub.s32 %s11, %s18
    %p20 = scmp.eq.s32.totalorder %s19, 0
    %s22 = sadd.s32 %s21, 1
    %s23 = scalar_select %p20, %s21, %s22
    %p26 = pneg %p20
    %p27 = scmp.eq.s32.totalorder %s11, 1
    %p28 = por %p26, %p27
    %p29 = scmp.ne.s32.totalorder %s21, %s24
    %p30 = scmp.eq.s32.totalorder %s11, 0
    %p31 = por %p29, %p30
    %p32 = scmp.ne.s32.totalorder %s21, %s24
    %p33 = scmp.eq.s32.totalorder %s16, 1
    %p34 = por %p32, %p33
    %p35 = scmp.ne.s32.totalorder %s24, %s25
    %p36 = scmp.eq.s32.totalorder %s16, 0
    %p37 = por %p35, %p36
    %p38 = scmp.ne.s32.totalorder %s24, %s25
    %p39 = scmp.eq.s32.totalorder %s17, 1
    %p40 = por %p38, %p39
    %p42 = scmp.ne.s32.totalorder %s25, %s41
    %p43 = scmp.eq.s32.totalorder %s17, 0
    %p44 = por %p42, %p43
    %s46 = sadd.s32 %s45, 1
    %p49 = scmp.eq.s32.totalorder %s11, 1
    %p50 = scmp.ne.s32.totalorder %s45, %s47
    %p51 = scmp.eq.s32.totalorder %s11, 0
    %p52 = por %p50, %p51
    %p53 = scmp.ne.s32.totalorder %s45, %s47
    %p54 = scmp.eq.s32.totalorder %s16, 1
    %p55 = por %p53, %p54
    %p56 = scmp.ne.s32.totalorder %s47, %s48
    %p57 = scmp.eq.s32.totalorder %s16, 0
    %p58 = por %p56, %p57
    %p59 = scmp.ne.s32.totalorder %s47, %s48
    %p60 = scmp.eq.s32.totalorder %s17, 1
    %p61 = por %p59, %p60
    %p63 = scmp.ne.s32.totalorder %s48, %s62
    %p64 = scmp.eq.s32.totalorder %s17, 0
    %p65 = por %p63, %p64
    %s66 = ssub.s32 %s11, %s18
    %p67 = scmp.eq.s32.totalorder %s66, 0
    %s69 = sadd.s32 %s68, 1
    %s70 = scalar_select %p67, %s68, %s69
    %p73 = pneg %p67
    %p74 = scmp.eq.s32.totalorder %s11, 1
    %p75 = por %p73, %p74
    %p76 = scmp.ne.s32.totalorder %s68, %s71
    %p77 = scmp.eq.s32.totalorder %s11, 0
    %p78 = por %p76, %p77
    %p79 = scmp.ne.s32.totalorder %s68, %s71
    %p80 = scmp.eq.s32.totalorder %s16, 1
    %p81 = por %p79, %p80
    %p82 = scmp.ne.s32.totalorder %s71, %s72
    %p83 = scmp.eq.s32.totalorder %s16, 0
    %p84 = por %p82, %p83
    %p85 = scmp.ne.s32.totalorder %s71, %s72
    %p86 = scmp.eq.s32.totalorder %s17, 1
    %p87 = por %p85, %p86
    %p89 = scmp.ne.s32.totalorder %s72, %s88
    %p90 = scmp.eq.s32.totalorder %s17, 0
    %p91 = por %p89, %p90
    %s92 = ssub.s32 %s11, %s18
    %p93 = scmp.eq.s32.totalorder %s92, 0
    %s95 = sadd.s32 %s94, 1
    %s96 = scalar_select %p93, %s94, %s95
    %p99 = pneg %p93
    %p100 = scmp.eq.s32.totalorder %s11, 1
    %p101 = por %p99, %p100
    %p102 = scmp.ne.s32.totalorder %s94, %s97
    %p103 = scmp.eq.s32.totalorder %s11, 0
    %p104 = por %p102, %p103
    %p105 = scmp.ne.s32.totalorder %s94, %s97
    %p106 = scmp.eq.s32.totalorder %s16, 1
    %p107 = por %p105, %p106
    %p108 = scmp.ne.s32.totalorder %s97, %s98
    %p109 = scmp.eq.s32.totalorder %s16, 0
    %p110 = por %p108, %p109
    %p111 = scmp.ne.s32.totalorder %s97, %s98
    %p112 = scmp.eq.s32.totalorder %s17, 1
    %p113 = por %p111, %p112
    %p115 = scmp.ne.s32.totalorder %s98, %s114
    %p116 = scmp.eq.s32.totalorder %s17, 0
    %p117 = por %p115, %p116
    %s118 = ssub.s32 %s11, %s18
    %p119 = scmp.eq.s32.totalorder %s118, 0
    %s121 = sadd.s32 %s120, 1
    %s122 = scalar_select %p119, %s120, %s121
    %p125 = pneg %p119
    %p126 = scmp.eq.s32.totalorder %s11, 1
    %p127 = por %p125, %p126
    %p128 = scmp.ne.s32.totalorder %s120, %s123
    %p129 = scmp.eq.s32.totalorder %s11, 0
    %p130 = por %p128, %p129
    %p131 = scmp.ne.s32.totalorder %s120, %s123
    %p132 = scmp.eq.s32.totalorder %s16, 1
    %p133 = por %p131, %p132
    %p134 = scmp.ne.s32.totalorder %s123, %s124
    %p135 = scmp.eq.s32.totalorder %s16, 0
    %p136 = por %p134, %p135
    %p137 = scmp.ne.s32.totalorder %s123, %s124
    %p138 = scmp.eq.s32.totalorder %s17, 1
    %p139 = por %p137, %p138
    %p141 = scmp.ne.s32.totalorder %s124, %s140
    %p142 = scmp.eq.s32.totalorder %s17, 0
    %p143 = por %p141, %p142
    %p144 = scmp.le.s32.totalorder 1, %s11
    %p145 = scmp.lt.s32.totalorder %s11, 3
    %p146 = pnand %p144, %p145
    %p147 = pneg %p146
    // Predicated region
    $region9: #{basic_block_forward.11} parent=5 // pred_check
      _
    $region10: #{basic_block_forward.11} parent=5 // pred_check_branch
      %149 = sbr.rel (%p146) target = $region12
    $region11: #{basic_block_forward.11} parent=5 // pred_region
      %s150 = ssub.s32 %s11, 1
      // Predicated region
      $region13: #{basic_block_forward.11} parent=11 // pred_check
        %p151 = pneg %p58
      $region14: #{basic_block_forward.11} parent=11 // pred_check_branch
        %153 = sbr.rel (%p151) target = $region16
      $region15: #{basic_block_forward.11} parent=11 // pred_region
        _
      $region16: #{basic_block_forward.11} parent=11 // pred_fallthru
        _
    $region12: #{basic_block_forward.11} parent=5 // pred_fallthru
      _
    %p154 = scmp.lt.s32.totalorder %s11, 2
    // Predicated region
    $region17: #{basic_block_forward.11} parent=5 // pred_check
      %p155 = pneg %p154
    $region18: #{basic_block_forward.11} parent=5 // pred_check_branch
      %157 = sbr.rel (%p155) target = $region20
    $region19: #{basic_block_forward.11} parent=5 // pred_region
      // Predicated region
      $region21: #{basic_block_forward.11} parent=19 // pred_check
        %p158 = pneg %p31
      $region22: #{basic_block_forward.11} parent=19 // pred_check_branch
        %160 = sbr.rel (%p158) target = $region24
      $region23: #{basic_block_forward.11} parent=19 // pred_region
        %p161 = scmp.lt.s32.totalorder %s11, 1
        %s162 = scalar_select %p161, %s11, 1
        %s163 = smul.addr %s162, 20
        %s164 = smul.addr %s163, 8
        %s165 = scalar_lea.vmem %s0, %s164
      $region24: #{basic_block_forward.11} parent=19 // pred_fallthru
        _
    $region20: #{basic_block_forward.11} parent=5 // pred_fallthru
      _
    %p166 = scmp.le.s32.totalorder 1, %s11
    %p167 = scmp.lt.s32.totalorder %s11, 3
    %p168 = pnand %p166, %p167
    %p169 = pneg %p168
    // Predicated region
    $region25: #{basic_block_forward.11} parent=5 // pred_check
      _
    $region26: #{basic_block_forward.11} parent=5 // pred_check_branch
      %171 = sbr.rel (%p168) target = $region28
    $region27: #{basic_block_forward.11} parent=5 // pred_region
      %s172 = ssub.s32 %s11, 1
      %p173 = scmp.lt.s32.totalorder %s16, 1
      %s174 = scalar_select %p173, %s16, 1
      %s175 = smul.addr %s174, 20
      %s176 = smul.addr %s175, 8
      %s177 = scalar_lea.vmem %s0, %s176
      %p178 = pneg %p37
      %p179 = pneg %p34
      %p180 = pneg %p58
      %p181 = pneg %p55
      %p182 = pneg %p84
      %p183 = pneg %p81
      %p184 = scmp.lt.s32.totalorder %s16, 1
      %s185 = scalar_select %p184, %s16, 1
      %s186 = smul.addr %s185, 8
      %s187 = smul.addr %s186, 8
      %s188 = scalar_lea.vmem %s2, %s187
      %p189 = pneg %p110
      %p190 = pneg %p107
      %p191 = scmp.lt.s32.totalorder %s16, 1
      %s192 = scalar_select %p191, %s16, 1
      %s193 = scalar_lea.vmem %s3, %s192
      %p194 = pneg %p136
      %p195 = pneg %p133
      %p196 = scmp.lt.s32.totalorder %s16, 1
      %s197 = scalar_select %p196, %s16, 1
      %s198 = scalar_lea.vmem %s4, %s197
      %p199 = scmp.lt.s32.totalorder %s16, 1
      %s200 = scalar_select %p199, %s16, 1
      %s201 = smul.addr %s200, 20
      %s202 = smul.addr %s201, 8
      %s203 = scalar_lea.vmem %s0, %s202
      %p204 = scmp.lt.s32.totalorder %s16, 1
      %s205 = scalar_select %p204, %s16, 1
      %s206 = smul.addr %s205, 8
      %s207 = smul.addr %s206, 8
      %s208 = scalar_lea.vmem %s2, %s207
      %p209 = scmp.lt.s32.totalorder %s16, 1
      %s210 = scalar_select %p209, %s16, 1
      %s211 = scalar_lea.vmem %s3, %s210
      %p212 = scmp.lt.s32.totalorder %s16, 1
      %s213 = scalar_select %p212, %s16, 1
      %s214 = scalar_lea.vmem %s4, %s213
      %v215 = vld [vmem:[%s203] sm:$0xff]
      %v216 = vld [vmem:[%s203 + $0x10] sm:$0xff]
      %v217 = vld [vmem:[%s203 + $0x20] sm:$0xff]
      %v218 = vld [vmem:[%s203 + $0x30] sm:$0xff]
      %v219 = vld [vmem:[%s203 + $0x40] sm:$0xff]
      %v220 = vld [vmem:[%s203 + $0x50] sm:$0xff]
      %v221 = vld [vmem:[%s203 + $0x60] sm:$0xff]
      %v222 = vld [vmem:[%s203 + $0x70] sm:$0xff]
      %v223 = vld [vmem:[%s1] sm:$0xff]
      %v224 = vld [vmem:[%s1 + $0x8] sm:$0xff]
      %v225 = vld [vmem:[%s1 + $0x10] sm:$0xff]
      %v226 = vld [vmem:[%s1 + $0x18] sm:$0xff]
      %v227 = vld [vmem:[%s1 + $0x20] sm:$0xff]
      %v228 = vld [vmem:[%s1 + $0x28] sm:$0xff]
      %v229 = vld [vmem:[%s1 + $0x30] sm:$0xff]
      %v230 = vld [vmem:[%s1 + $0x38] sm:$0xff]
      %v231 = vld [vmem:[%s1 + $0x40] sm:$0xff]
      %v232 = vld [vmem:[%s1 + $0x48] sm:$0xff]
      %v233 = vld [vmem:[%s1 + $0x50] sm:$0xff]
      %v234 = vld [vmem:[%s1 + $0x58] sm:$0xff]
      %v235 = vld [vmem:[%s1 + $0x60] sm:$0xff]
      %v236 = vld [vmem:[%s1 + $0x68] sm:$0xff]
      %v237 = vld [vmem:[%s1 + $0x70] sm:$0xff]
      %v238 = vld [vmem:[%s1 + $0x78] sm:$0xff]
      %v239 = vld [vmem:[%s203 + $0x1] sm:$0xff]
      %v240 = vld [vmem:[%s203 + $0x11] sm:$0xff]
      %v241 = vld [vmem:[%s203 + $0x21] sm:$0xff]
      %v242 = vld [vmem:[%s203 + $0x31] sm:$0xff]
      %v243 = vld [vmem:[%s203 + $0x41] sm:$0xff]
      %v244 = vld [vmem:[%s203 + $0x51] sm:$0xff]
      %v245 = vld [vmem:[%s203 + $0x61] sm:$0xff]
      %v246 = vld [vmem:[%s203 + $0x71] sm:$0xff]
      %s247 = scalar_lea.vmem %s1, 128
      %v248 = vld [vmem:[%s247] sm:$0xff]
      %v249 = vld [vmem:[%s247 + $0x8] sm:$0xff]
      %v250 = vld [vmem:[%s247 + $0x10] sm:$0xff]
      %v251 = vld [vmem:[%s247 + $0x18] sm:$0xff]
      %v252 = vld [vmem:[%s247 + $0x20] sm:$0xff]
      %v253 = vld [vmem:[%s247 + $0x28] sm:$0xff]
      %v254 = vld [vmem:[%s247 + $0x30] sm:$0xff]
      %v255 = vld [vmem:[%s247 + $0x38] sm:$0xff]
      %v256 = vld [vmem:[%s247 + $0x40] sm:$0xff]
      %v257 = vld [vmem:[%s247 + $0x48] sm:$0xff]
      %v258 = vld [vmem:[%s247 + $0x50] sm:$0xff]
      %v259 = vld [vmem:[%s247 + $0x58] sm:$0xff]
      %v260 = vld [vmem:[%s247 + $0x60] sm:$0xff]
      %v261 = vld [vmem:[%s247 + $0x68] sm:$0xff]
      %v262 = vld [vmem:[%s247 + $0x70] sm:$0xff]
      %v263 = vld [vmem:[%s247 + $0x78] sm:$0xff]
      %264 = vmatpush.msra.mxu0 %v263
      %265 = vmatpush.msra.mxu0 %v262
      %266 = vmatpush.msra.mxu0 %v261
      %267 = vmatpush.msra.mxu0 %v260
      %268 = vmatpush.msra.mxu0 %v259
      %269 = vmatpush.msra.mxu0 %v258
      %270 = vmatpush.msra.mxu0 %v257
      %271 = vmatpush.msra.mxu0 %v256
      %272 = vmatpush.msra.mxu0 %v255
      %273 = vmatpush.msra.mxu0 %v254
      %274 = vmatpush.msra.mxu0 %v253
      %275 = vmatpush.msra.mxu0 %v252
      %276 = vmatpush.msra.mxu0 %v251
      %277 = vmatpush.msra.mxu0 %v250
      %278 = vmatpush.msra.mxu0 %v249
      %279 = vmatpush.msra.mxu0 %v248
      %280 = vmatmul.f32.gmra.mxu0 %v239
      %v281 = vpop.f32.mrf.mxu0
      %v282 = vadd.f32 0.0, %v281
      %283 = vmatmul.f32.gmra.mxu0 %v240
      %v284 = vpop.f32.mrf.mxu0
      %v285 = vadd.f32 0.0, %v284
      %286 = vmatmul.f32.gmra.mxu0 %v241
      %v287 = vpop.f32.mrf.mxu0
      %v288 = vadd.f32 0.0, %v287
      %289 = vmatmul.f32.gmra.mxu0 %v242
      %v290 = vpop.f32.mrf.mxu0
      %v291 = vadd.f32 0.0, %v290
      %292 = vmatmul.f32.gmra.mxu0 %v243
      %v293 = vpop.f32.mrf.mxu0
      %v294 = vadd.f32 0.0, %v293
      %295 = vmatmul.f32.gmra.mxu0 %v244
      %v296 = vpop.f32.mrf.mxu0
      %v297 = vadd.f32 0.0, %v296
      %298 = vmatmul.f32.gmra.mxu0 %v245
      %v299 = vpop.f32.mrf.mxu0
      %v300 = vadd.f32 0.0, %v299
      %301 = vmatmul.f32.gmra.mxu0 %v246
      %v302 = vpop.f32.mrf.mxu0
      %v303 = vadd.f32 0.0, %v302
      %304 = vdwg.mxu0
      %305 = vmatpush.msra.mxu0 %v238
      %306 = vmatpush.msra.mxu0 %v237
      %307 = vmatpush.msra.mxu0 %v236
      %308 = vmatpush.msra.mxu0 %v235
      %309 = vmatpush.msra.mxu0 %v234
      %310 = vmatpush.msra.mxu0 %v233
      %311 = vmatpush.msra.mxu0 %v232
      %312 = vmatpush.msra.mxu0 %v231
      %313 = vmatpush.msra.mxu0 %v230
      %314 = vmatpush.msra.mxu0 %v229
      %315 = vmatpush.msra.mxu0 %v228
      %316 = vmatpush.msra.mxu0 %v227
      %317 = vmatpush.msra.mxu0 %v226
      %318 = vmatpush.msra.mxu0 %v225
      %319 = vmatpush.msra.mxu0 %v224
      %320 = vmatpush.msra.mxu0 %v223
      %321 = vmatmul.f32.gmra.mxu0 %v215
      %v322 = vpop.f32.mrf.mxu0
      %v323 = vadd.f32 %v282, %v322
      %324 = vmatmul.f32.gmra.mxu0 %v216
      %v325 = vpop.f32.mrf.mxu0
      %v326 = vadd.f32 %v285, %v325
      %327 = vmatmul.f32.gmra.mxu0 %v217
      %v328 = vpop.f32.mrf.mxu0
      %v329 = vadd.f32 %v288, %v328
      %330 = vmatmul.f32.gmra.mxu0 %v218
      %v331 = vpop.f32.mrf.mxu0
      %v332 = vadd.f32 %v291, %v331
      %333 = vmatmul.f32.gmra.mxu0 %v219
      %v334 = vpop.f32.mrf.mxu0
      %v335 = vadd.f32 %v294, %v334
      %336 = vmatmul.f32.gmra.mxu0 %v220
      %v337 = vpop.f32.mrf.mxu0
      %v338 = vadd.f32 %v297, %v337
      %339 = vmatmul.f32.gmra.mxu0 %v221
      %v340 = vpop.f32.mrf.mxu0
      %v341 = vadd.f32 %v300, %v340
      %342 = vmatmul.f32.gmra.mxu0 %v222
      %v343 = vpop.f32.mrf.mxu0
      %v344 = vadd.f32 %v303, %v343
      %345 = vdwg.mxu0
      %v346 = vld [vmem:[%s203 + $0x2] sm:$0xff]
      %v347 = vld [vmem:[%s203 + $0x12] sm:$0xff]
      %v348 = vld [vmem:[%s203 + $0x22] sm:$0xff]
      %v349 = vld [vmem:[%s203 + $0x32] sm:$0xff]
      %v350 = vld [vmem:[%s203 + $0x42] sm:$0xff]
      %v351 = vld [vmem:[%s203 + $0x52] sm:$0xff]
      %v352 = vld [vmem:[%s203 + $0x62] sm:$0xff]
      %v353 = vld [vmem:[%s203 + $0x72] sm:$0xff]
      %s354 = scalar_lea.vmem %s1, 256
      %v355 = vld [vmem:[%s354] sm:$0xff]
      %v356 = vld [vmem:[%s354 + $0x8] sm:$0xff]
      %v357 = vld [vmem:[%s354 + $0x10] sm:$0xff]
      %v358 = vld [vmem:[%s354 + $0x18] sm:$0xff]
      %v359 = vld [vmem:[%s354 + $0x20] sm:$0xff]
      %v360 = vld [vmem:[%s354 + $0x28] sm:$0xff]
      %v361 = vld [vmem:[%s354 + $0x30] sm:$0xff]
      %v362 = vld [vmem:[%s354 + $0x38] sm:$0xff]
      %v363 = vld [vmem:[%s354 + $0x40] sm:$0xff]
      %v364 = vld [vmem:[%s354 + $0x48] sm:$0xff]
      %v365 = vld [vmem:[%s354 + $0x50] sm:$0xff]
      %v366 = vld [vmem:[%s354 + $0x58] sm:$0xff]
      %v367 = vld [vmem:[%s354 + $0x60] sm:$0xff]
      %v368 = vld [vmem:[%s354 + $0x68] sm:$0xff]
      %v369 = vld [vmem:[%s354 + $0x70] sm:$0xff]
      %v370 = vld [vmem:[%s354 + $0x78] sm:$0xff]
      %371 = vmatpush.msra.mxu0 %v370
      %372 = vmatpush.msra.mxu0 %v369
      %373 = vmatpush.msra.mxu0 %v368
      %374 = vmatpush.msra.mxu0 %v367
      %375 = vmatpush.msra.mxu0 %v366
      %376 = vmatpush.msra.mxu0 %v365
      %377 = vmatpush.msra.mxu0 %v364
      %378 = vmatpush.msra.mxu0 %v363
      %379 = vmatpush.msra.mxu0 %v362
      %380 = vmatpush.msra.mxu0 %v361
      %381 = vmatpush.msra.mxu0 %v360
      %382 = vmatpush.msra.mxu0 %v359
      %383 = vmatpush.msra.mxu0 %v358
      %384 = vmatpush.msra.mxu0 %v357
      %385 = vmatpush.msra.mxu0 %v356
      %386 = vmatpush.msra.mxu0 %v355
      %387 = vmatmul.f32.gmra.mxu0 %v346
      %v388 = vpop.f32.mrf.mxu0
      %v389 = vadd.f32 0.0, %v388
      %390 = vmatmul.f32.gmra.mxu0 %v347
      %v391 = vpop.f32.mrf.mxu0
      %v392 = vadd.f32 0.0, %v391
      %393 = vmatmul.f32.gmra.mxu0 %v348
      %v394 = vpop.f32.mrf.mxu0
      %v395 = vadd.f32 0.0, %v394
      %396 = vmatmul.f32.gmra.mxu0 %v349
      %v397 = vpop.f32.mrf.mxu0
      %v398 = vadd.f32 0.0, %v397
      %399 = vmatmul.f32.gmra.mxu0 %v350
      %v400 = vpop.f32.mrf.mxu0
      %v401 = vadd.f32 0.0, %v400
      %402 = vmatmul.f32.gmra.mxu0 %v351
      %v403 = vpop.f32.mrf.mxu0
      %v404 = vadd.f32 0.0, %v403
      %405 = vmatmul.f32.gmra.mxu0 %v352
      %v406 = vpop.f32.mrf.mxu0
      %v407 = vadd.f32 0.0, %v406
      %408 = vmatmul.f32.gmra.mxu0 %v353
      %v409 = vpop.f32.mrf.mxu0
      %v410 = vadd.f32 0.0, %v409
      %411 = vdwg.mxu0
      %v412 = vadd.f32 %v323, %v389
      %v413 = vadd.f32 %v326, %v392
      %v414 = vadd.f32 %v329, %v395
      %v415 = vadd.f32 %v332, %v398
      %v416 = vadd.f32 %v335, %v401
      %v417 = vadd.f32 %v338, %v404
      %v418 = vadd.f32 %v341, %v407
      %v419 = vadd.f32 %v344, %v410
      %s420 = scalar_lea.vmem %s203, 16
      %v421 = vld [vmem:[%s420] sm:$0xff]
      %v422 = vld [vmem:[%s420 + $0x10] sm:$0xff]
      %v423 = vld [vmem:[%s420 + $0x20] sm:$0xff]
      %v424 = vld [vmem:[%s420 + $0x30] sm:$0xff]
      %v425 = vld [vmem:[%s420 + $0x40] sm:$0xff]
      %v426 = vld [vmem:[%s420 + $0x50] sm:$0xff]
      %v427 = vld [vmem:[%s420 + $0x60] sm:$0xff]
      %v428 = vld [vmem:[%s420 + $0x70] sm:$0xff]
      %s429 = scalar_lea.vmem %s1, 384
      %v430 = vld [vmem:[%s429] sm:$0xff]
      %v431 = vld [vmem:[%s429 + $0x8] sm:$0xff]
      %v432 = vld [vmem:[%s429 + $0x10] sm:$0xff]
      %v433 = vld [vmem:[%s429 + $0x18] sm:$0xff]
      %v434 = vld [vmem:[%s429 + $0x20] sm:$0xff]
      %v435 = vld [vmem:[%s429 + $0x28] sm:$0xff]
      %v436 = vld [vmem:[%s429 + $0x30] sm:$0xff]
      %v437 = vld [vmem:[%s429 + $0x38] sm:$0xff]
      %v438 = vld [vmem:[%s429 + $0x40] sm:$0xff]
      %v439 = vld [vmem:[%s429 + $0x48] sm:$0xff]
      %v440 = vld [vmem:[%s429 + $0x50] sm:$0xff]
      %v441 = vld [vmem:[%s429 + $0x58] sm:$0xff]
      %v442 = vld [vmem:[%s429 + $0x60] sm:$0xff]
      %v443 = vld [vmem:[%s429 + $0x68] sm:$0xff]
      %v444 = vld [vmem:[%s429 + $0x70] sm:$0xff]
      %v445 = vld [vmem:[%s429 + $0x78] sm:$0xff]
      %446 = vmatpush.msra.mxu0 %v445
      %447 = vmatpush.msra.mxu0 %v444
      %448 = vmatpush.msra.mxu0 %v443
      %449 = vmatpush.msra.mxu0 %v442
      %450 = vmatpush.msra.mxu0 %v441
      %451 = vmatpush.msra.mxu0 %v440
      %452 = vmatpush.msra.mxu0 %v439
      %453 = vmatpush.msra.mxu0 %v438
      %454 = vmatpush.msra.mxu0 %v437
      %455 = vmatpush.msra.mxu0 %v436
      %456 = vmatpush.msra.mxu0 %v435
      %457 = vmatpush.msra.mxu0 %v434
      %458 = vmatpush.msra.mxu0 %v433
      %459 = vmatpush.msra.mxu0 %v432
      %460 = vmatpush.msra.mxu0 %v431
      %461 = vmatpush.msra.mxu0 %v430
      %462 = vmatmul.f32.gmra.mxu0 %v421
      %v463 = vpop.f32.mrf.mxu0
      %v464 = vadd.f32 0.0, %v463
      %465 = vmatmul.f32.gmra.mxu0 %v422
      %v466 = vpop.f32.mrf.mxu0
      %v467 = vadd.f32 0.0, %v466
      %468 = vmatmul.f32.gmra.mxu0 %v423
      %v469 = vpop.f32.mrf.mxu0
      %v470 = vadd.f32 0.0, %v469
      %471 = vmatmul.f32.gmra.mxu0 %v424
      %v472 = vpop.f32.mrf.mxu0
      %v473 = vadd.f32 0.0, %v472
      %474 = vmatmul.f32.gmra.mxu0 %v425
      %v475 = vpop.f32.mrf.mxu0
      %v476 = vadd.f32 0.0, %v475
      %477 = vmatmul.f32.gmra.mxu0 %v426
      %v478 = vpop.f32.mrf.mxu0
      %v479 = vadd.f32 0.0, %v478
      %480 = vmatmul.f32.gmra.mxu0 %v427
      %v481 = vpop.f32.mrf.mxu0
      %v482 = vadd.f32 0.0, %v481
      %483 = vmatmul.f32.gmra.mxu0 %v428
      %v484 = vpop.f32.mrf.mxu0
      %v485 = vadd.f32 0.0, %v484
      %486 = vdwg.mxu0
      %v487 = vadd.f32 %v412, %v464
      %v488 = vadd.f32 %v413, %v467
      %v489 = vadd.f32 %v414, %v470
      %v490 = vadd.f32 %v415, %v473
      %v491 = vadd.f32 %v416, %v476
      %v492 = vadd.f32 %v417, %v479
      %v493 = vadd.f32 %v418, %v482
      %v494 = vadd.f32 %v419, %v485
      %v495 = vld [vmem:[%s420 + $0x1] sm:$0xff]
      %v496 = vld [vmem:[%s420 + $0x11] sm:$0xff]
      %v497 = vld [vmem:[%s420 + $0x21] sm:$0xff]
      %v498 = vld [vmem:[%s420 + $0x31] sm:$0xff]
      %v499 = vld [vmem:[%s420 + $0x41] sm:$0xff]
      %v500 = vld [vmem:[%s420 + $0x51] sm:$0xff]
      %v501 = vld [vmem:[%s420 + $0x61] sm:$0xff]
      %v502 = vld [vmem:[%s420 + $0x71] sm:$0xff]
      %s503 = scalar_lea.vmem %s1, 512
      %v504 = vld [vmem:[%s503] sm:$0xff]
      %v505 = vld [vmem:[%s503 + $0x8] sm:$0xff]
      %v506 = vld [vmem:[%s503 + $0x10] sm:$0xff]
      %v507 = vld [vmem:[%s503 + $0x18] sm:$0xff]
      %v508 = vld [vmem:[%s503 + $0x20] sm:$0xff]
      %v509 = vld [vmem:[%s503 + $0x28] sm:$0xff]
      %v510 = vld [vmem:[%s503 + $0x30] sm:$0xff]
      %v511 = vld [vmem:[%s503 + $0x38] sm:$0xff]
      %v512 = vld [vmem:[%s503 + $0x40] sm:$0xff]
      %v513 = vld [vmem:[%s503 + $0x48] sm:$0xff]
      %v514 = vld [vmem:[%s503 + $0x50] sm:$0xff]
      %v515 = vld [vmem:[%s503 + $0x58] sm:$0xff]
      %v516 = vld [vmem:[%s503 + $0x60] sm:$0xff]
      %v517 = vld [vmem:[%s503 + $0x68] sm:$0xff]
      %v518 = vld [vmem:[%s503 + $0x70] sm:$0xff]
      %v519 = vld [vmem:[%s503 + $0x78] sm:$0xff]
      %520 = vmatpush.msra.mxu0 %v519
      %521 = vmatpush.msra.mxu0 %v518
      %522 = vmatpush.msra.mxu0 %v517
      %523 = vmatpush.msra.mxu0 %v516
      %524 = vmatpush.msra.mxu0 %v515
      %525 = vmatpush.msra.mxu0 %v514
      %526 = vmatpush.msra.mxu0 %v513
      %527 = vmatpush.msra.mxu0 %v512
      %528 = vmatpush.msra.mxu0 %v511
      %529 = vmatpush.msra.mxu0 %v510
      %530 = vmatpush.msra.mxu0 %v509
      %531 = vmatpush.msra.mxu0 %v508
      %532 = vmatpush.msra.mxu0 %v507
      %533 = vmatpush.msra.mxu0 %v506
      %534 = vmatpush.msra.mxu0 %v505
      %535 = vmatpush.msra.mxu0 %v504
      %536 = vmatmul.f32.gmra.mxu0 %v495
      %v537 = vpop.f32.mrf.mxu0
      %v538 = vadd.f32 0.0, %v537
      %539 = vmatmul.f32.gmra.mxu0 %v496
      %v540 = vpop.f32.mrf.mxu0
      %v541 = vadd.f32 0.0, %v540
      %542 = vmatmul.f32.gmra.mxu0 %v497
      %v543 = vpop.f32.mrf.mxu0
      %v544 = vadd.f32 0.0, %v543
      %545 = vmatmul.f32.gmra.mxu0 %v498
      %v546 = vpop.f32.mrf.mxu0
      %v547 = vadd.f32 0.0, %v546
      %548 = vmatmul.f32.gmra.mxu0 %v499
      %v549 = vpop.f32.mrf.mxu0
      %v550 = vadd.f32 0.0, %v549
      %551 = vmatmul.f32.gmra.mxu0 %v500
      %v552 = vpop.f32.mrf.mxu0
      %v553 = vadd.f32 0.0, %v552
      %554 = vmatmul.f32.gmra.mxu0 %v501
      %v555 = vpop.f32.mrf.mxu0
      %v556 = vadd.f32 0.0, %v555
      %557 = vmatmul.f32.gmra.mxu0 %v502
      %v558 = vpop.f32.mrf.mxu0
      %v559 = vadd.f32 0.0, %v558
      %560 = vdwg.mxu0
      %v561 = vadd.f32 %v487, %v538
      %v562 = vadd.f32 %v488, %v541
      %v563 = vadd.f32 %v489, %v544
      %v564 = vadd.f32 %v490, %v547
      %v565 = vadd.f32 %v491, %v550
      %v566 = vadd.f32 %v492, %v553
      %v567 = vadd.f32 %v493, %v556
      %v568 = vadd.f32 %v494, %v559
      %v569 = vld [vmem:[%s420 + $0x2] sm:$0xff]
      %v570 = vld [vmem:[%s420 + $0x12] sm:$0xff]
      %v571 = vld [vmem:[%s420 + $0x22] sm:$0xff]
      %v572 = vld [vmem:[%s420 + $0x32] sm:$0xff]
      %v573 = vld [vmem:[%s420 + $0x42] sm:$0xff]
      %v574 = vld [vmem:[%s420 + $0x52] sm:$0xff]
      %v575 = vld [vmem:[%s420 + $0x62] sm:$0xff]
      %v576 = vld [vmem:[%s420 + $0x72] sm:$0xff]
      %s577 = scalar_lea.vmem %s1, 640
      %v578 = vld [vmem:[%s577] sm:$0xff]
      %v579 = vld [vmem:[%s577 + $0x8] sm:$0xff]
      %v580 = vld [vmem:[%s577 + $0x10] sm:$0xff]
      %v581 = vld [vmem:[%s577 + $0x18] sm:$0xff]
      %v582 = vld [vmem:[%s577 + $0x20] sm:$0xff]
      %v583 = vld [vmem:[%s577 + $0x28] sm:$0xff]
      %v584 = vld [vmem:[%s577 + $0x30] sm:$0xff]
      %v585 = vld [vmem:[%s577 + $0x38] sm:$0xff]
      %v586 = vld [vmem:[%s577 + $0x40] sm:$0xff]
      %v587 = vld [vmem:[%s577 + $0x48] sm:$0xff]
      %v588 = vld [vmem:[%s577 + $0x50] sm:$0xff]
      %v589 = vld [vmem:[%s577 + $0x58] sm:$0xff]
      %v590 = vld [vmem:[%s577 + $0x60] sm:$0xff]
      %v591 = vld [vmem:[%s577 + $0x68] sm:$0xff]
      %v592 = vld [vmem:[%s577 + $0x70] sm:$0xff]
      %v593 = vld [vmem:[%s577 + $0x78] sm:$0xff]
      %594 = vmatpush.msra.mxu0 %v593
      %595 = vmatpush.msra.mxu0 %v592
      %596 = vmatpush.msra.mxu0 %v591
      %597 = vmatpush.msra.mxu0 %v590
      %598 = vmatpush.msra.mxu0 %v589
      %599 = vmatpush.msra.mxu0 %v588
      %600 = vmatpush.msra.mxu0 %v587
      %601 = vmatpush.msra.mxu0 %v586
      %602 = vmatpush.msra.mxu0 %v585
      %603 = vmatpush.msra.mxu0 %v584
      %604 = vmatpush.msra.mxu0 %v583
      %605 = vmatpush.msra.mxu0 %v582
      %606 = vmatpush.msra.mxu0 %v581
      %607 = vmatpush.msra.mxu0 %v580
      %608 = vmatpush.msra.mxu0 %v579
      %609 = vmatpush.msra.mxu0 %v578
      %610 = vmatmul.f32.gmra.mxu0 %v569
      %v611 = vpop.f32.mrf.mxu0
      %v612 = vadd.f32 0.0, %v611
      %613 = vmatmul.f32.gmra.mxu0 %v570
      %v614 = vpop.f32.mrf.mxu0
      %v615 = vadd.f32 0.0, %v614
      %616 = vmatmul.f32.gmra.mxu0 %v571
      %v617 = vpop.f32.mrf.mxu0
      %v618 = vadd.f32 0.0, %v617
      %619 = vmatmul.f32.gmra.mxu0 %v572
      %v620 = vpop.f32.mrf.mxu0
      %v621 = vadd.f32 0.0, %v620
      %622 = vmatmul.f32.gmra.mxu0 %v573
      %v623 = vpop.f32.mrf.mxu0
      %v624 = vadd.f32 0.0, %v623
      %625 = vmatmul.f32.gmra.mxu0 %v574
      %v626 = vpop.f32.mrf.mxu0
      %v627 = vadd.f32 0.0, %v626
      %628 = vmatmul.f32.gmra.mxu0 %v575
      %v629 = vpop.f32.mrf.mxu0
      %v630 = vadd.f32 0.0, %v629
      %631 = vmatmul.f32.gmra.mxu0 %v576
      %v632 = vpop.f32.mrf.mxu0
      %v633 = vadd.f32 0.0, %v632
      %634 = vdwg.mxu0
      %v635 = vadd.f32 %v561, %v612
      %v636 = vadd.f32 %v562, %v615
      %v637 = vadd.f32 %v563, %v618
      %v638 = vadd.f32 %v564, %v621
      %v639 = vadd.f32 %v565, %v624
      %v640 = vadd.f32 %v566, %v627
      %v641 = vadd.f32 %v567, %v630
      %v642 = vadd.f32 %v568, %v633
      %s643 = scalar_lea.vmem %s203, 32
      %v644 = vld [vmem:[%s643] sm:$0xff]
      %v645 = vld [vmem:[%s643 + $0x10] sm:$0xff]
      %v646 = vld [vmem:[%s643 + $0x20] sm:$0xff]
      %v647 = vld [vmem:[%s643 + $0x30] sm:$0xff]
      %v648 = vld [vmem:[%s643 + $0x40] sm:$0xff]
      %v649 = vld [vmem:[%s643 + $0x50] sm:$0xff]
      %v650 = vld [vmem:[%s643 + $0x60] sm:$0xff]
      %v651 = vld [vmem:[%s643 + $0x70] sm:$0xff]
      %s652 = scalar_lea.vmem %s1, 768
      %v653 = vld [vmem:[%s652] sm:$0xff]
      %v654 = vld [vmem:[%s652 + $0x8] sm:$0xff]
      %v655 = vld [vmem:[%s652 + $0x10] sm:$0xff]
      %v656 = vld [vmem:[%s652 + $0x18] sm:$0xff]
      %v657 = vld [vmem:[%s652 + $0x20] sm:$0xff]
      %v658 = vld [vmem:[%s652 + $0x28] sm:$0xff]
      %v659 = vld [vmem:[%s652 + $0x30] sm:$0xff]
      %v660 = vld [vmem:[%s652 + $0x38] sm:$0xff]
      %v661 = vld [vmem:[%s652 + $0x40] sm:$0xff]
      %v662 = vld [vmem:[%s652 + $0x48] sm:$0xff]
      %v663 = vld [vmem:[%s652 + $0x50] sm:$0xff]
      %v664 = vld [vmem:[%s652 + $0x58] sm:$0xff]
      %v665 = vld [vmem:[%s652 + $0x60] sm:$0xff]
      %v666 = vld [vmem:[%s652 + $0x68] sm:$0xff]
      %v667 = vld [vmem:[%s652 + $0x70] sm:$0xff]
      %v668 = vld [vmem:[%s652 + $0x78] sm:$0xff]
      %669 = vmatpush.msra.mxu0 %v668
      %670 = vmatpush.msra.mxu0 %v667
      %671 = vmatpush.msra.mxu0 %v666
      %672 = vmatpush.msra.mxu0 %v665
      %673 = vmatpush.msra.mxu0 %v664
      %674 = vmatpush.msra.mxu0 %v663
      %675 = vmatpush.msra.mxu0 %v662
      %676 = vmatpush.msra.mxu0 %v661
      %677 = vmatpush.msra.mxu0 %v660
      %678 = vmatpush.msra.mxu0 %v659
      %679 = vmatpush.msra.mxu0 %v658
      %680 = vmatpush.msra.mxu0 %v657
      %681 = vmatpush.msra.mxu0 %v656
      %682 = vmatpush.msra.mxu0 %v655
      %683 = vmatpush.msra.mxu0 %v654
      %684 = vmatpush.msra.mxu0 %v653
      %685 = vmatmul.f32.gmra.mxu0 %v644
      %v686 = vpop.f32.mrf.mxu0
      %v687 = vadd.f32 0.0, %v686
      %688 = vmatmul.f32.gmra.mxu0 %v645
      %v689 = vpop.f32.mrf.mxu0
      %v690 = vadd.f32 0.0, %v689
      %691 = vmatmul.f32.gmra.mxu0 %v646
      %v692 = vpop.f32.mrf.mxu0
      %v693 = vadd.f32 0.0, %v692
      %694 = vmatmul.f32.gmra.mxu0 %v647
      %v695 = vpop.f32.mrf.mxu0
      %v696 = vadd.f32 0.0, %v695
      %697 = vmatmul.f32.gmra.mxu0 %v648
      %v698 = vpop.f32.mrf.mxu0
      %v699 = vadd.f32 0.0, %v698
      %700 = vmatmul.f32.gmra.mxu0 %v649
      %v701 = vpop.f32.mrf.mxu0
      %v702 = vadd.f32 0.0, %v701
      %703 = vmatmul.f32.gmra.mxu0 %v650
      %v704 = vpop.f32.mrf.mxu0
      %v705 = vadd.f32 0.0, %v704
      %706 = vmatmul.f32.gmra.mxu0 %v651
      %v707 = vpop.f32.mrf.mxu0
      %v708 = vadd.f32 0.0, %v707
      %709 = vdwg.mxu0
      %v710 = vadd.f32 %v635, %v687
      %v711 = vadd.f32 %v636, %v690
      %v712 = vadd.f32 %v637, %v693
      %v713 = vadd.f32 %v638, %v696
      %v714 = vadd.f32 %v639, %v699
      %v715 = vadd.f32 %v640, %v702
      %v716 = vadd.f32 %v641, %v705
      %v717 = vadd.f32 %v642, %v708
      %v718 = vld [vmem:[%s643 + $0x1] sm:$0xff]
      %v719 = vld [vmem:[%s643 + $0x11] sm:$0xff]
      %v720 = vld [vmem:[%s643 + $0x21] sm:$0xff]
      %v721 = vld [vmem:[%s643 + $0x31] sm:$0xff]
      %v722 = vld [vmem:[%s643 + $0x41] sm:$0xff]
      %v723 = vld [vmem:[%s643 + $0x51] sm:$0xff]
      %v724 = vld [vmem:[%s643 + $0x61] sm:$0xff]
      %v725 = vld [vmem:[%s643 + $0x71] sm:$0xff]
      %s726 = scalar_lea.vmem %s1, 896
      %v727 = vld [vmem:[%s726] sm:$0xff]
      %v728 = vld [vmem:[%s726 + $0x8] sm:$0xff]
      %v729 = vld [vmem:[%s726 + $0x10] sm:$0xff]
      %v730 = vld [vmem:[%s726 + $0x18] sm:$0xff]
      %v731 = vld [vmem:[%s726 + $0x20] sm:$0xff]
      %v732 = vld [vmem:[%s726 + $0x28] sm:$0xff]
      %v733 = vld [vmem:[%s726 + $0x30] sm:$0xff]
      %v734 = vld [vmem:[%s726 + $0x38] sm:$0xff]
      %v735 = vld [vmem:[%s726 + $0x40] sm:$0xff]
      %v736 = vld [vmem:[%s726 + $0x48] sm:$0xff]
      %v737 = vld [vmem:[%s726 + $0x50] sm:$0xff]
      %v738 = vld [vmem:[%s726 + $0x58] sm:$0xff]
      %v739 = vld [vmem:[%s726 + $0x60] sm:$0xff]
      %v740 = vld [vmem:[%s726 + $0x68] sm:$0xff]
      %v741 = vld [vmem:[%s726 + $0x70] sm:$0xff]
      %v742 = vld [vmem:[%s726 + $0x78] sm:$0xff]
      %743 = vmatpush.msra.mxu0 %v742
      %744 = vmatpush.msra.mxu0 %v741
      %745 = vmatpush.msra.mxu0 %v740
      %746 = vmatpush.msra.mxu0 %v739
      %747 = vmatpush.msra.mxu0 %v738
      %748 = vmatpush.msra.mxu0 %v737
      %749 = vmatpush.msra.mxu0 %v736
      %750 = vmatpush.msra.mxu0 %v735
      %751 = vmatpush.msra.mxu0 %v734
      %752 = vmatpush.msra.mxu0 %v733
      %753 = vmatpush.msra.mxu0 %v732
      %754 = vmatpush.msra.mxu0 %v731
      %755 = vmatpush.msra.mxu0 %v730
      %756 = vmatpush.msra.mxu0 %v729
      %757 = vmatpush.msra.mxu0 %v728
      %758 = vmatpush.msra.mxu0 %v727
      %759 = vmatmul.f32.gmra.mxu0 %v718
      %v760 = vpop.f32.mrf.mxu0
      %v761 = vadd.f32 0.0, %v760
      %762 = vmatmul.f32.gmra.mxu0 %v719
      %v763 = vpop.f32.mrf.mxu0
      %v764 = vadd.f32 0.0, %v763
      %765 = vmatmul.f32.gmra.mxu0 %v720
      %v766 = vpop.f32.mrf.mxu0
      %v767 = vadd.f32 0.0, %v766
      %768 = vmatmul.f32.gmra.mxu0 %v721
      %v769 = vpop.f32.mrf.mxu0
      %v770 = vadd.f32 0.0, %v769
      %771 = vmatmul.f32.gmra.mxu0 %v722
      %v772 = vpop.f32.mrf.mxu0
      %v773 = vadd.f32 0.0, %v772
      %774 = vmatmul.f32.gmra.mxu0 %v723
      %v775 = vpop.f32.mrf.mxu0
      %v776 = vadd.f32 0.0, %v775
      %777 = vmatmul.f32.gmra.mxu0 %v724
      %v778 = vpop.f32.mrf.mxu0
      %v779 = vadd.f32 0.0, %v778
      %780 = vmatmul.f32.gmra.mxu0 %v725
      %v781 = vpop.f32.mrf.mxu0
      %v782 = vadd.f32 0.0, %v781
      %783 = vdwg.mxu0
      %v784 = vadd.f32 %v710, %v761
      %v785 = vadd.f32 %v711, %v764
      %v786 = vadd.f32 %v712, %v767
      %v787 = vadd.f32 %v713, %v770
      %v788 = vadd.f32 %v714, %v773
      %v789 = vadd.f32 %v715, %v776
      %v790 = vadd.f32 %v716, %v779
      %v791 = vadd.f32 %v717, %v782
      %v792 = vld [vmem:[%s643 + $0x2] sm:$0xff]
      %v793 = vld [vmem:[%s643 + $0x12] sm:$0xff]
      %v794 = vld [vmem:[%s643 + $0x22] sm:$0xff]
      %v795 = vld [vmem:[%s643 + $0x32] sm:$0xff]
      %v796 = vld [vmem:[%s643 + $0x42] sm:$0xff]
      %v797 = vld [vmem:[%s643 + $0x52] sm:$0xff]
      %v798 = vld [vmem:[%s643 + $0x62] sm:$0xff]
      %v799 = vld [vmem:[%s643 + $0x72] sm:$0xff]
      %s800 = scalar_lea.vmem %s1, 1024
      %v801 = vld [vmem:[%s800] sm:$0xff]
      %v802 = vld [vmem:[%s800 + $0x8] sm:$0xff]
      %v803 = vld [vmem:[%s800 + $0x10] sm:$0xff]
      %v804 = vld [vmem:[%s800 + $0x18] sm:$0xff]
      %v805 = vld [vmem:[%s800 + $0x20] sm:$0xff]
      %v806 = vld [vmem:[%s800 + $0x28] sm:$0xff]
      %v807 = vld [vmem:[%s800 + $0x30] sm:$0xff]
      %v808 = vld [vmem:[%s800 + $0x38] sm:$0xff]
      %v809 = vld [vmem:[%s800 + $0x40] sm:$0xff]
      %v810 = vld [vmem:[%s800 + $0x48] sm:$0xff]
      %v811 = vld [vmem:[%s800 + $0x50] sm:$0xff]
      %v812 = vld [vmem:[%s800 + $0x58] sm:$0xff]
      %v813 = vld [vmem:[%s800 + $0x60] sm:$0xff]
      %v814 = vld [vmem:[%s800 + $0x68] sm:$0xff]
      %v815 = vld [vmem:[%s800 + $0x70] sm:$0xff]
      %v816 = vld [vmem:[%s800 + $0x78] sm:$0xff]
      %817 = vmatpush.msra.mxu0 %v816
      %818 = vmatpush.msra.mxu0 %v815
      %819 = vmatpush.msra.mxu0 %v814
      %820 = vmatpush.msra.mxu0 %v813
      %821 = vmatpush.msra.mxu0 %v812
      %822 = vmatpush.msra.mxu0 %v811
      %823 = vmatpush.msra.mxu0 %v810
      %824 = vmatpush.msra.mxu0 %v809
      %825 = vmatpush.msra.mxu0 %v808
      %826 = vmatpush.msra.mxu0 %v807
      %827 = vmatpush.msra.mxu0 %v806
      %828 = vmatpush.msra.mxu0 %v805
      %829 = vmatpush.msra.mxu0 %v804
      %830 = vmatpush.msra.mxu0 %v803
      %831 = vmatpush.msra.mxu0 %v802
      %832 = vmatpush.msra.mxu0 %v801
      %833 = vmatmul.f32.gmra.mxu0 %v792
      %v834 = vpop.f32.mrf.mxu0
      %v835 = vadd.f32 0.0, %v834
      %836 = vmatmul.f32.gmra.mxu0 %v793
      %v837 = vpop.f32.mrf.mxu0
      %v838 = vadd.f32 0.0, %v837
      %839 = vmatmul.f32.gmra.mxu0 %v794
      %v840 = vpop.f32.mrf.mxu0
      %v841 = vadd.f32 0.0, %v840
      %842 = vmatmul.f32.gmra.mxu0 %v795
      %v843 = vpop.f32.mrf.mxu0
      %v844 = vadd.f32 0.0, %v843
      %845 = vmatmul.f32.gmra.mxu0 %v796
      %v846 = vpop.f32.mrf.mxu0
      %v847 = vadd.f32 0.0, %v846
      %848 = vmatmul.f32.gmra.mxu0 %v797
      %v849 = vpop.f32.mrf.mxu0
      %v850 = vadd.f32 0.0, %v849
      %851 = vmatmul.f32.gmra.mxu0 %v798
      %v852 = vpop.f32.mrf.mxu0
      %v853 = vadd.f32 0.0, %v852
      %854 = vmatmul.f32.gmra.mxu0 %v799
      %v855 = vpop.f32.mrf.mxu0
      %v856 = vadd.f32 0.0, %v855
      %857 = vdwg.mxu0
      %v858 = vadd.f32 %v784, %v835
      %v859 = vadd.f32 %v785, %v838
      %v860 = vadd.f32 %v786, %v841
      %v861 = vadd.f32 %v787, %v844
      %v862 = vadd.f32 %v788, %v847
      %v863 = vadd.f32 %v789, %v850
      %v864 = vadd.f32 %v790, %v853
      %v865 = vadd.f32 %v791, %v856
      %866 = vst [vmem:[%s208] sm:$0xff] %v858
      %867 = vst [vmem:[%s208 + $0x8] sm:$0xff] %v859
      %868 = vst [vmem:[%s208 + $0x10] sm:$0xff] %v860
      %869 = vst [vmem:[%s208 + $0x18] sm:$0xff] %v861
      %870 = vst [vmem:[%s208 + $0x20] sm:$0xff] %v862
      %871 = vst [vmem:[%s208 + $0x28] sm:$0xff] %v863
      %872 = vst [vmem:[%s208 + $0x30] sm:$0xff] %v864
      %873 = vst [vmem:[%s208 + $0x38] sm:$0xff] %v865
      %v874 = vadd.f32 %v858, %v859
      %v875 = vadd.f32 %v874, %v860
      %v876 = vadd.f32 %v875, %v861
      %v877 = vadd.f32 %v876, %v862
      %v878 = vadd.f32 %v877, %v863
      %v879 = vadd.f32 %v878, %v864
      %v880 = vadd.f32 %v879, %v865
      %v881 = vrot.slane %v880, 4
      %v882 = vadd.f32 %v880, %v881
      %v883 = vrot.slane %v882, 2
      %v884 = vadd.f32 %v882, %v883
      %v885 = vrot.slane %v884, 1
      %v886 = vadd.f32 %v884, %v885
      %887 = vst [vmem:[%s211] sm:$0x1] %v886
      %v888 = vmul.f32 %v858, %v858
      %v889 = vmul.f32 %v859, %v859
      %v890 = vmul.f32 %v860, %v860
      %v891 = vmul.f32 %v861, %v861
      %v892 = vmul.f32 %v862, %v862
      %v893 = vmul.f32 %v863, %v863
      %v894 = vmul.f32 %v864, %v864
      %v895 = vmul.f32 %v865, %v865
      %v896 = vadd.f32 %v888, %v889
      %v897 = vadd.f32 %v896, %v890
      %v898 = vadd.f32 %v897, %v891
      %v899 = vadd.f32 %v898, %v892
      %v900 = vadd.f32 %v899, %v893
      %v901 = vadd.f32 %v900, %v894
      %v902 = vadd.f32 %v901, %v895
      %v903 = vrot.slane %v902, 4
      %v904 = vadd.f32 %v902, %v903
      %v905 = vrot.slane %v904, 2
      %v906 = vadd.f32 %v904, %v905
      %v907 = vrot.slane %v906, 1
      %v908 = vadd.f32 %v906, %v907
      %909 = vst [vmem:[%s214] sm:$0x1] %v908
      %p910 = scmp.lt.s32.totalorder %s16, 1
      %s911 = scalar_select %p910, %s16, 1
      %s912 = smul.addr %s911, 8
      %s913 = smul.addr %s912, 8
      %s914 = scalar_lea.vmem %s2, %s913
      %p915 = scmp.lt.s32.totalorder %s16, 1
      %s916 = scalar_select %p915, %s16, 1
      %s917 = scalar_lea.vmem %s3, %s916
      %p918 = scmp.lt.s32.totalorder %s16, 1
      %s919 = scalar_select %p918, %s16, 1
      %s920 = scalar_lea.vmem %s4, %s919
      // Predicated region
      $region29: #{basic_block_forward.11} parent=27 // pred_check
        %p921 = pneg %p81
      $region30: #{basic_block_forward.11} parent=27 // pred_check_branch
        %923 = sbr.rel (%p921) target = $region32
      $region31: #{basic_block_forward.11} parent=27 // pred_region
        _
      $region32: #{basic_block_forward.11} parent=27 // pred_fallthru
        _
      // Predicated region
      $region33: #{basic_block_forward.11} parent=27 // pred_check
        %p924 = pneg %p107
      $region34: #{basic_block_forward.11} parent=27 // pred_check_branch
        %926 = sbr.rel (%p924) target = $region36
      $region35: #{basic_block_forward.11} parent=27 // pred_region
        _
      $region36: #{basic_block_forward.11} parent=27 // pred_fallthru
        _
      // Predicated region
      $region37: #{basic_block_forward.11} parent=27 // pred_check
        %p927 = pneg %p133
      $region38: #{basic_block_forward.11} parent=27 // pred_check_branch
        %929 = sbr.rel (%p927) target = $region40
      $region39: #{basic_block_forward.11} parent=27 // pred_region
        _
      $region40: #{basic_block_forward.11} parent=27 // pred_fallthru
        _
    $region28: #{basic_block_forward.11} parent=5 // pred_fallthru
      _
    %p930 = scmp.le.s32.totalorder 2, %s11
    // Predicated region
    $region41: #{basic_block_forward.11} parent=5 // pred_check
      %p931 = pneg %p930
    $region42: #{basic_block_forward.11} parent=5 // pred_check_branch
      %933 = sbr.rel (%p931) target = $region44
    $region43: #{basic_block_forward.11} parent=5 // pred_region
      %s934 = ssub.s32 %s11, 2
      // Predicated region
      $region45: #{basic_block_forward.11} parent=43 // pred_check
        %p935 = pneg %p87
      $region46: #{basic_block_forward.11} parent=43 // pred_check_branch
        %937 = sbr.rel (%p935) target = $region48
      $region47: #{basic_block_forward.11} parent=43 // pred_region
        %p938 = scmp.lt.s32.totalorder %s17, 1
        %s939 = scalar_select %p938, %s17, 1
        %s940 = smul.addr %s939, 8
        %s941 = smul.addr %s940, 8
        %s942 = scalar_lea.vmem %s2, %s941
      $region48: #{basic_block_forward.11} parent=43 // pred_fallthru
        _
      // Predicated region
      $region49: #{basic_block_forward.11} parent=43 // pred_check
        %p943 = pneg %p113
      $region50: #{basic_block_forward.11} parent=43 // pred_check_branch
        %945 = sbr.rel (%p943) target = $region52
      $region51: #{basic_block_forward.11} parent=43 // pred_region
        %p946 = scmp.lt.s32.totalorder %s17, 1
        %s947 = scalar_select %p946, %s17, 1
        %s948 = scalar_lea.vmem %s3, %s947
      $region52: #{basic_block_forward.11} parent=43 // pred_fallthru
        _
      // Predicated region
      $region53: #{basic_block_forward.11} parent=43 // pred_check
        %p949 = pneg %p139
      $region54: #{basic_block_forward.11} parent=43 // pred_check_branch
        %951 = sbr.rel (%p949) target = $region56
      $region55: #{basic_block_forward.11} parent=43 // pred_region
        %p952 = scmp.lt.s32.totalorder %s17, 1
        %s953 = scalar_select %p952, %s17, 1
        %s954 = scalar_lea.vmem %s4, %s953
      $region56: #{basic_block_forward.11} parent=43 // pred_fallthru
        _
    $region44: #{basic_block_forward.11} parent=5 // pred_fallthru
      _
  $region6: #{basic_block_forward.11} parent=0 // loop_footer
    %s15 = sadd.s32 1, %s11
  $region7: #{basic_block_forward.11} parent=0 // loop_footer_branch
    %10 = sbr.rel target = $region3
  $region8: #{basic_block_forward.11} parent=0 // loop_exit
    _

</llo_original>
